<compile_context>
chip_gen: v7x
topology: tpu7x:2x2x1
jax: 0.10.0
libtpu: 0.0.40
codegen_flags: <defaults>
</compile_context>

<pallas_src>
import jax
import jax.numpy as jnp
from jax.experimental import pallas as pl
from jax.experimental.pallas import tpu as pltpu


# ---------------------------------------------------------------------------
# Kernels
# ---------------------------------------------------------------------------
def _resblock_ds_kernel(x_ref, w1d_ref, b1d_ref, w2_ref, b2_ref, o_ref):
    """Residual block with a 1x1-conv+BN downsample branch.

    w1d = concat([W_conv1*BN1, W_down*BNd], axis=1) -> conv1 and the downsample
    conv share ONE wide MXU matmul over the same x tile.
    """
    outc = o_ref.shape[-1]
    x = x_ref[...].astype(w1d_ref.dtype)               # narrow in VMEM, no extra HBM pass
    t = (jnp.dot(x, w1d_ref[...], preferred_element_type=jnp.float32)
         + b1d_ref[...])                                # (tn, 2*outc) f32
    y1 = jnp.maximum(t[:, :outc], 0.0)                  # ReLU(conv1+BN1); lane-aligned split
    skip = t[:, outc:]                                  # downsample(x)
    y2 = (jnp.dot(y1.astype(w2_ref.dtype), w2_ref[...],
                  preferred_element_type=jnp.float32)
          + b2_ref[...])                                # conv2+BN2
    o_ref[...] = jnp.maximum(y2 + skip, 0.0).astype(o_ref.dtype)


def _resblock_id_kernel(x_ref, w1_ref, b1_ref, w2_ref, b2_ref, o_ref):
    """Residual block with identity skip (inc == outc, stride == 1).

    The residual add uses x in its *input* precision (upcast to f32 for the
    add); only the matmul operands are narrowed to the weight dtype (bf16).
    """
    xf = x_ref[...].astype(jnp.float32)                 # skip in input precision
    y1 = jnp.maximum(
        jnp.dot(xf.astype(w1_ref.dtype), w1_ref[...],
                preferred_element_type=jnp.float32) + b1_ref[...], 0.0)
    y2 = (jnp.dot(y1.astype(w2_ref.dtype), w2_ref[...],
                  preferred_element_type=jnp.float32) + b2_ref[...])
    o_ref[...] = jnp.maximum(y2 + xf, 0.0).astype(o_ref.dtype)


# ---------------------------------------------------------------------------
# Wrapper
# ---------------------------------------------------------------------------
def residual_block(x_F, params, *, tn=2048, matmul_dtype=jnp.bfloat16,
                   out_dtype=jnp.bfloat16):
    """Apply the residual block to point features x_F: (N, inc) -> (N, outc).

    params: dict with BN-folded weights
      w1 (inc, outc), b1 (1, outc)   -- conv1 + BN1
      w2 (outc, outc), b2 (1, outc)  -- conv2 + BN2
      wd (inc, outc) or None, bd     -- 1x1 downsample conv + BN (None => identity)
    """
    N, inc = x_F.shape
    w1, b1 = params["w1"], params["b1"]
    w2, b2 = params["w2"], params["b2"]
    wd, bd = params.get("wd"), params.get("bd")
    outc = w1.shape[1]
    out_dtype = jnp.dtype(out_dtype)

    # Lane-dense output stores and the in-kernel column split both require a
    # 128-multiple channel count.
    # TODO(synk): pad folded weights / use split matmuls for other outc.
    assert outc % 128 == 0, "outc must be a multiple of 128 (TPU lane width)"

    # Point tile: never (much) larger than N, keep it sublane-aligned.
    tn_eff = min(tn, -(-N // 8) * 8)
    n_blk = pl.cdiv(N, tn_eff)          # ragged final tile handled by Pallas
                                        # (out-of-bounds rows are never stored)

    mm = matmul_dtype
    b1 = b1.astype(jnp.float32)
    b2 = b2.astype(jnp.float32)

    row_x = pl.BlockSpec((tn_eff, inc), lambda i: (i, 0))
    row_o = pl.BlockSpec((tn_eff, outc), lambda i: (i, 0))
    w2_spec = pl.BlockSpec((outc, outc), lambda i: (0, 0))
    b_spec = pl.BlockSpec((1, outc), lambda i: (0, 0))

    if wd is not None:
        # Fuse conv1 and downsample into a single wide weight / bias.
        w1d = jnp.concatenate([w1, wd], axis=1).astype(mm)       # (inc, 2*outc)
        b1d = jnp.concatenate([b1, bd.astype(jnp.float32)], axis=1)
        kernel = _resblock_ds_kernel
        in_specs = [row_x,
                    pl.BlockSpec((inc, 2 * outc), lambda i: (0, 0)),
                    pl.BlockSpec((1, 2 * outc), lambda i: (0, 0)),
                    w2_spec, b_spec]
        args = (x_F, w1d, b1d, w2.astype(mm), b2)
        w_bytes = w1d.size * 2 + w2.size * 2 + (b1d.size + b2.size) * 4
    else:
        assert inc == outc, "identity skip requires inc == outc"
        kernel = _resblock_id_kernel
        in_specs = [row_x,
                    pl.BlockSpec((inc, outc), lambda i: (0, 0)),
                    b_spec, w2_spec, b_spec]
        args = (x_F, w1.astype(mm), b1, w2.astype(mm), b2)
        w_bytes = (w1.size + w2.size) * 2 + (b1.size + b2.size) * 4

    # VMEM budget: double-buffered x/out tiles + resident weights + headroom.
    # Floor at 16 MiB (v5e default scoped), cap well under v7x's 64 MiB VMEM.
    x_tile_bytes = tn_eff * inc * x_F.dtype.itemsize
    o_tile_bytes = tn_eff * outc * out_dtype.itemsize
    vmem_limit = int(min(
        48 * 1024 * 1024,
        max(16 * 1024 * 1024,
            2 * (x_tile_bytes + o_tile_bytes) + 2 * w_bytes + (4 << 20))))

    out = pl.pallas_call(
        kernel,
        out_shape=jax.ShapeDtypeStruct((N, outc), out_dtype),
        grid_spec=pltpu.PrefetchScalarGridSpec(
            num_scalar_prefetch=0,
            grid=(n_blk,),
            in_specs=in_specs,
            out_specs=row_o,
        ),
        compiler_params=pltpu.CompilerParams(
            dimension_semantics=("parallel",),
            vmem_limit_bytes=vmem_limit),
    )(*args)
    return out


# ---------------------------------------------------------------------------
# Parameter construction (synthetic, deterministic) and pure-JAX references
# ---------------------------------------------------------------------------
def fold_conv_bn(w, gamma, beta, mean, var, eps=1e-5):
    s = gamma / jnp.sqrt(var + eps)                # (outc,)
    w_f = w * s[None, :]                           # (inc, outc)
    b_f = beta - mean * s                          # (outc,)
    return w_f, b_f.reshape(1, -1)


def make_conv_bn(key, inc, outc, scale=0.05):
    kw, kg, kb, km, kv = jax.random.split(key, 5)
    w = jax.random.normal(kw, (inc, outc), jnp.float32) * scale   # center-tap weight
    gamma = 1.0 + 0.1 * jax.random.normal(kg, (outc,), jnp.float32)
    beta = 0.1 * jax.random.normal(kb, (outc,), jnp.float32)
    mean = 0.1 * jax.random.normal(km, (outc,), jnp.float32)
    var = 0.9 + 0.1 * jnp.abs(jax.random.normal(kv, (outc,), jnp.float32))
    return fold_conv_bn(w, gamma, beta, mean, var)


def _ref_ds(x, w1, b1, w2, b2, wd, bd, mm):
    hp = jax.lax.Precision.HIGHEST
    r = lambda a: a.astype(mm).astype(jnp.float32)
    xr = r(x)
    y1 = jnp.maximum(jnp.dot(xr, r(w1), precision=hp) + b1, 0.0)
    skip = jnp.dot(xr, r(wd), precision=hp) + bd
    y2 = jnp.dot(r(y1), r(w2), precision=hp) + b2
    return jnp.maximum(y2 + skip, 0.0)


def _ref_id(x, w1, b1, w2, b2, mm):
    hp = jax.lax.Precision.HIGHEST
    r = lambda a: a.astype(mm).astype(jnp.float32)
    xf = x.astype(jnp.float32)
    y1 = jnp.maximum(jnp.dot(r(x), r(w1), precision=hp) + b1, 0.0)
    y2 = jnp.dot(r(y1), r(w2), precision=hp) + b2
    return jnp.maximum(y2 + xf, 0.0)


# ---------------------------------------------------------------------------
if __name__ == "__main__":
    key = jax.random.PRNGKey(0)
    kx1, k1, k2, kd, kx2, k3, k4 = jax.random.split(key, 7)

    # ---- Case 1: inc != outc -> 1x1-conv + BN downsample branch, fused matmul,
    #      bf16 output, N not a tile multiple (exercises ragged final tile).
    N1, INC, OUTC = 4000, 64, 128
    x1 = jax.random.normal(kx1, (N1, INC), jnp.float32)
    w1, b1 = make_conv_bn(k1, INC, OUTC)
    w2, b2 = make_conv_bn(k2, OUTC, OUTC)
    wd, bd = make_conv_bn(kd, INC, OUTC)
    params1 = dict(w1=w1, b1=b1, w2=w2, b2=b2, wd=wd, bd=bd)

    out1 = residual_block(x1, params1, tn=2048, out_dtype=jnp.bfloat16)
    jax.block_until_ready(out1)
    ref1 = _ref_ds(x1, w1, b1, w2, b2, wd, bd, jnp.bfloat16)
    assert out1.shape == (N1, OUTC)
    assert out1.dtype == jnp.bfloat16
    assert jnp.allclose(out1.astype(jnp.float32), ref1, atol=2e-2, rtol=2e-2), \
        "downsample-path mismatch"

    # ---- Case 2: inc == outc, stride == 1 -> identity skip, exact f32 output.
    N2, C = 2048, 128
    x2 = jax.random.normal(kx2, (N2, C), jnp.float32)
    w1b, b1b = make_conv_bn(k3, C, C)
    w2b, b2b = make_conv_bn(k4, C, C)
    params2 = dict(w1=w1b, b1=b1b, w2=w2b, b2=b2b, wd=None, bd=None)

    out2 = residual_block(x2, params2, tn=2048, out_dtype=jnp.float32)
    jax.block_until_ready(out2)
    ref2 = _ref_id(x2, w1b, b1b, w2b, b2b, jnp.bfloat16)
    assert out2.shape == (N2, C)
    assert jnp.allclose(out2, ref2, atol=1e-3, rtol=1e-3), "identity-path mismatch"

    print("KERNEL_OK")
</pallas_src>

<mosaic_0001>
module attributes {stable_mosaic.version = 11 : i64} {
  func.func @_resblock_ds_kernel(%arg0: i32, %arg1: memref<2048x64xf32, #tpu.memory_space<vmem>>, %arg2: memref<64x256xbf16, #tpu.memory_space<vmem>>, %arg3: memref<1x256xf32, #tpu.memory_space<vmem>>, %arg4: memref<128x128xbf16, #tpu.memory_space<vmem>>, %arg5: memref<1x128xf32, #tpu.memory_space<vmem>>, %arg6: memref<2048x128xbf16, #tpu.memory_space<vmem>>) attributes {dimension_semantics = [#tpu.dimension_semantics<parallel>], iteration_bounds = array<i64: 2>, scalar_prefetch = 0 : i64, scratch_operands = 0 : i64, tpu.core_type = #tpu.core_type<tc>, window_params = [{transform_indices = @transform_0, window_bounds = array<i64: 2048, 64>}, {pipeline_mode = #tpu.pipeline_mode<synchronous>, transform_indices = @transform_1, window_bounds = array<i64: 64, 256>}, {pipeline_mode = #tpu.pipeline_mode<synchronous>, transform_indices = @transform_2, window_bounds = array<i64: 1, 256>}, {pipeline_mode = #tpu.pipeline_mode<synchronous>, transform_indices = @transform_3, window_bounds = array<i64: 128, 128>}, {pipeline_mode = #tpu.pipeline_mode<synchronous>, transform_indices = @transform_4, window_bounds = array<i64: 1, 128>}, {transform_indices = @transform_5, window_bounds = array<i64: 2048, 128>}]} {
    %c0 = arith.constant 0 : index
    %c0_0 = arith.constant 0 : index
    %0 = vector.load %arg1[%c0, %c0_0] : memref<2048x64xf32, #tpu.memory_space<vmem>>, vector<2048x64xf32>
    %1 = arith.truncf %0 : vector<2048x64xf32> to vector<2048x64xbf16>
    %c0_1 = arith.constant 0 : index
    %c0_2 = arith.constant 0 : index
    %2 = vector.load %arg2[%c0_1, %c0_2] : memref<64x256xbf16, #tpu.memory_space<vmem>>, vector<64x256xbf16>
    %cst = arith.constant dense<0.000000e+00> : vector<2048x256xf32>
    %3 = tpu.matmul %1, %2, %cst {dimension_numbers = #tpu.dot_dimension_numbers<[1], [0], [0], [1], [0, 0, 1, 1], [], []>} : vector<2048x64xbf16>, vector<64x256xbf16>, vector<2048x256xf32> -> vector<2048x256xf32>
    %c0_3 = arith.constant 0 : index
    %c0_4 = arith.constant 0 : index
    %4 = vector.load %arg3[%c0_3, %c0_4] : memref<1x256xf32, #tpu.memory_space<vmem>>, vector<1x256xf32>
    %5 = vector.broadcast %4 : vector<1x256xf32> to vector<2048x256xf32>
    %6 = arith.addf %3, %5 : vector<2048x256xf32>
    %7 = vector.extract_strided_slice %6 {offsets = [0, 0], sizes = [2048, 128], strides = [1, 1]} : vector<2048x256xf32> to vector<2048x128xf32>
    %cst_5 = arith.constant 0.000000e+00 : f32
    %8 = vector.broadcast %cst_5 : f32 to vector<2048x128xf32>
    %9 = arith.maximumf %7, %8 : vector<2048x128xf32>
    %10 = vector.extract_strided_slice %6 {offsets = [0, 128], sizes = [2048, 128], strides = [1, 1]} : vector<2048x256xf32> to vector<2048x128xf32>
    %11 = arith.truncf %9 : vector<2048x128xf32> to vector<2048x128xbf16>
    %c0_6 = arith.constant 0 : index
    %c0_7 = arith.constant 0 : index
    %12 = vector.load %arg4[%c0_6, %c0_7] : memref<128x128xbf16, #tpu.memory_space<vmem>>, vector<128x128xbf16>
    %cst_8 = arith.constant dense<0.000000e+00> : vector<2048x128xf32>
    %13 = tpu.matmul %11, %12, %cst_8 {dimension_numbers = #tpu.dot_dimension_numbers<[1], [0], [0], [1], [0, 0, 1, 1], [], []>} : vector<2048x128xbf16>, vector<128x128xbf16>, vector<2048x128xf32> -> vector<2048x128xf32>
    %c0_9 = arith.constant 0 : index
    %c0_10 = arith.constant 0 : index
    %14 = vector.load %arg5[%c0_9, %c0_10] : memref<1x128xf32, #tpu.memory_space<vmem>>, vector<1x128xf32>
    %15 = vector.broadcast %14 : vector<1x128xf32> to vector<2048x128xf32>
    %16 = arith.addf %13, %15 : vector<2048x128xf32>
    %17 = arith.addf %16, %10 : vector<2048x128xf32>
    %cst_11 = arith.constant 0.000000e+00 : f32
    %18 = vector.broadcast %cst_11 : f32 to vector<2048x128xf32>
    %19 = arith.maximumf %17, %18 : vector<2048x128xf32>
    %20 = arith.truncf %19 : vector<2048x128xf32> to vector<2048x128xbf16>
    %c0_12 = arith.constant 0 : index
    %c0_13 = arith.constant 0 : index
    %21 = vector.load %arg6[%c0_12, %c0_13] : memref<2048x128xbf16, #tpu.memory_space<vmem>>, vector<2048x128xbf16>
    tpu.vector_store %arg6[%c0_12, %c0_13], %20 {strides = array<i32>} : memref<2048x128xbf16, #tpu.memory_space<vmem>>, vector<2048x128xbf16>,
    return
  }
  func.func @transform_0(%arg0: i32) -> (i32, i32) {
    %c0_i32 = arith.constant 0 : i32
    %c0_i32_0 = arith.constant 0 : i32
    return %arg0, %c0_i32 : i32, i32
  }
  func.func @transform_1(%arg0: i32) -> (i32, i32) {
    %c0_i32 = arith.constant 0 : i32
    %c0_i32_0 = arith.constant 0 : i32
    %c0_i32_1 = arith.constant 0 : i32
    return %c0_i32, %c0_i32_0 : i32, i32
  }
  func.func @transform_2(%arg0: i32) -> (i32, i32) {
    %c0_i32 = arith.constant 0 : i32
    %c0_i32_0 = arith.constant 0 : i32
    %c0_i32_1 = arith.constant 0 : i32
    return %c0_i32, %c0_i32_0 : i32, i32
  }
  func.func @transform_3(%arg0: i32) -> (i32, i32) {
    %c0_i32 = arith.constant 0 : i32
    %c0_i32_0 = arith.constant 0 : i32
    %c0_i32_1 = arith.constant 0 : i32
    return %c0_i32, %c0_i32_0 : i32, i32
  }
  func.func @transform_4(%arg0: i32) -> (i32, i32) {
    %c0_i32 = arith.constant 0 : i32
    %c0_i32_0 = arith.constant 0 : i32
    %c0_i32_1 = arith.constant 0 : i32
    return %c0_i32, %c0_i32_0 : i32, i32
  }
  func.func @transform_5(%arg0: i32) -> (i32, i32) {
    %c0_i32 = arith.constant 0 : i32
    %c0_i32_0 = arith.constant 0 : i32
    return %arg0, %c0_i32 : i32, i32
  }
}

</mosaic_0001>

<llo_original>
// kernel: tpu_custom_call.1
$region0: #{tpu_custom_call.1}
  #allocation0 [shape = 'u32[]', space=smem, size = 0x4, offset = 0x4, fixed_abs, tag = 'smem constant byte address 0x4 - core index']
  #allocation1 [shape = 'u32[144,128]{1,0:T(1,128)}', space=vmem, size = 0x12000, scoped, tag = 'internal scratch']
  %s0 = inlined_call_operand.vmem [shape: f32[4000,64], index: 0, kind: input, shape index: {}]
  %s1 = inlined_call_operand.vmem [shape: bf16[64,256], index: 1, kind: input, shape index: {}]
  %s2 = inlined_call_operand.vmem [shape: f32[1,256], index: 2, kind: input, shape index: {}]
  %s3 = inlined_call_operand.vmem [shape: bf16[128,128], index: 3, kind: input, shape index: {}]
  %s4 = inlined_call_operand.vmem [shape: f32[1,128], index: 4, kind: input, shape index: {}]
  %s5 = inlined_call_operand.hbm [shape: bf16[4000,128], index: 5, kind: output, shape index: {}]
  %s6 = sld [smem:[#allocation0]]
  $region53: #{tpu_custom_call.1} parent=0
    _
  %s8 = ssub.s32 1, %s6
  %s9 = scalar_select 0, %s8, %s6
  $region1: #{tpu_custom_call.1} parent=0
    #allocation2 [shape = 'u8[1048576]{0}', space=vmem, size = 0x100000, scoped, tag = 'output window, operand 0']
    #allocation3 [shape = 's32[2]{0}', space=sflag, size = 0x8, scoped, tag = 'scoped memory for tpu_custom_call.1']
    %10 = vsyncpa [#allocation3], 0
    %s11 = scalar_lea.sflag [#allocation3], 1
    %12 = vsyncpa %s11, 0
    loop: start=0, step=1, limit=4
    $region2: #{tpu_custom_call.1} parent=1 // loop_pre_header
      _
    $region3: #{tpu_custom_call.1} parent=1 // loop_header
      %s14 = sphi 0, %s18
      %p15 = scmp.ge.s32.totalorder %s14, 4
      %s24 = sphi 0, %s26
      %s27 = sphi 0, %s24
      %s28 = sphi 0, %s27
      %s44 = sphi 0, %s28
      %s48 = sphi 0, %s48
      %s50 = sphi 0, %s48
      %s51 = sphi 0, %s50
      %s65 = sphi 0, %s51
      %s69 = sphi 0, %s69
      %s71 = sphi 0, %s69
      %s72 = sphi 0, %s71
      %s86 = sphi 0, %s72
      %s90 = sphi 0, %s90
      %s92 = sphi 0, %s90
      %s93 = sphi 0, %s92
      %s107 = sphi 0, %s93
      %s111 = sphi 0, %s111
      %s113 = sphi 0, %s111
      %s114 = sphi 0, %s113
      %s128 = sphi 0, %s114
      %s134 = sphi 0, %s136
      %s137 = sphi 0, %s134
      %s138 = sphi 0, %s137
      %s154 = sphi 0, %s138
    $region4: #{tpu_custom_call.1} parent=1 // loop_header_branch
      %17 = sbr.rel (%p15) target = $region8
    $region5: #{tpu_custom_call.1} parent=1 // loop_body
      %s19 = ssub.s32 %s14, 1
      %s20 = ssub.s32 %s14, 2
      %s21 = sadd.s32 %s14, 1
      %s22 = ssub.s32 %s14, %s21
      %p23 = scmp.eq.s32.totalorder %s22, 0
      %s25 = sadd.s32 %s24, 1
      %s26 = scalar_select %p23, %s24, %s25
      %p29 = pneg %p23
      %p30 = scmp.eq.s32.totalorder %s14, 1
      %p31 = por %p29, %p30
      %p32 = scmp.ne.s32.totalorder %s24, %s27
      %p33 = scmp.eq.s32.totalorder %s14, 0
      %p34 = por %p32, %p33
      %p35 = scmp.ne.s32.totalorder %s24, %s27
      %p36 = scmp.eq.s32.totalorder %s19, 1
      %p37 = por %p35, %p36
      %p38 = scmp.ne.s32.totalorder %s27, %s28
      %p39 = scmp.eq.s32.totalorder %s19, 0
      %p40 = por %p38, %p39
      %p41 = scmp.ne.s32.totalorder %s27, %s28
      %p42 = scmp.eq.s32.totalorder %s20, 1
      %p43 = por %p41, %p42
      %p45 = scmp.ne.s32.totalorder %s28, %s44
      %p46 = scmp.eq.s32.totalorder %s20, 0
      %p47 = por %p45, %p46
      %s49 = sadd.s32 %s48, 1
      %p52 = scmp.eq.s32.totalorder %s14, 1
      %p53 = scmp.ne.s32.totalorder %s48, %s50
      %p54 = scmp.eq.s32.totalorder %s14, 0
      %p55 = por %p53, %p54
      %p56 = scmp.ne.s32.totalorder %s48, %s50
      %p57 = scmp.eq.s32.totalorder %s19, 1
      %p58 = por %p56, %p57
      %p59 = scmp.ne.s32.totalorder %s50, %s51
      %p60 = scmp.eq.s32.totalorder %s19, 0
      %p61 = por %p59, %p60
      %p62 = scmp.ne.s32.totalorder %s50, %s51
      %p63 = scmp.eq.s32.totalorder %s20, 1
      %p64 = por %p62, %p63
      %p66 = scmp.ne.s32.totalorder %s51, %s65
      %p67 = scmp.eq.s32.totalorder %s20, 0
      %p68 = por %p66, %p67
      %s70 = sadd.s32 %s69, 1
      %p73 = scmp.eq.s32.totalorder %s14, 1
      %p74 = scmp.ne.s32.totalorder %s69, %s71
      %p75 = scmp.eq.s32.totalorder %s14, 0
      %p76 = por %p74, %p75
      %p77 = scmp.ne.s32.totalorder %s69, %s71
      %p78 = scmp.eq.s32.totalorder %s19, 1
      %p79 = por %p77, %p78
      %p80 = scmp.ne.s32.totalorder %s71, %s72
      %p81 = scmp.eq.s32.totalorder %s19, 0
      %p82 = por %p80, %p81
      %p83 = scmp.ne.s32.totalorder %s71, %s72
      %p84 = scmp.eq.s32.totalorder %s20, 1
      %p85 = por %p83, %p84
      %p87 = scmp.ne.s32.totalorder %s72, %s86
      %p88 = scmp.eq.s32.totalorder %s20, 0
      %p89 = por %p87, %p88
      %s91 = sadd.s32 %s90, 1
      %p94 = scmp.eq.s32.totalorder %s14, 1
      %p95 = scmp.ne.s32.totalorder %s90, %s92
      %p96 = scmp.eq.s32.totalorder %s14, 0
      %p97 = por %p95, %p96
      %p98 = scmp.ne.s32.totalorder %s90, %s92
      %p99 = scmp.eq.s32.totalorder %s19, 1
      %p100 = por %p98, %p99
      %p101 = scmp.ne.s32.totalorder %s92, %s93
      %p102 = scmp.eq.s32.totalorder %s19, 0
      %p103 = por %p101, %p102
      %p104 = scmp.ne.s32.totalorder %s92, %s93
      %p105 = scmp.eq.s32.totalorder %s20, 1
      %p106 = por %p104, %p105
      %p108 = scmp.ne.s32.totalorder %s93, %s107
      %p109 = scmp.eq.s32.totalorder %s20, 0
      %p110 = por %p108, %p109
      %s112 = sadd.s32 %s111, 1
      %p115 = scmp.eq.s32.totalorder %s14, 1
      %p116 = scmp.ne.s32.totalorder %s111, %s113
      %p117 = scmp.eq.s32.totalorder %s14, 0
      %p118 = por %p116, %p117
      %p119 = scmp.ne.s32.totalorder %s111, %s113
      %p120 = scmp.eq.s32.totalorder %s19, 1
      %p121 = por %p119, %p120
      %p122 = scmp.ne.s32.totalorder %s113, %s114
      %p123 = scmp.eq.s32.totalorder %s19, 0
      %p124 = por %p122, %p123
      %p125 = scmp.ne.s32.totalorder %s113, %s114
      %p126 = scmp.eq.s32.totalorder %s20, 1
      %p127 = por %p125, %p126
      %p129 = scmp.ne.s32.totalorder %s114, %s128
      %p130 = scmp.eq.s32.totalorder %s20, 0
      %p131 = por %p129, %p130
      %s132 = ssub.s32 %s14, %s21
      %p133 = scmp.eq.s32.totalorder %s132, 0
      %s135 = sadd.s32 %s134, 1
      %s136 = scalar_select %p133, %s134, %s135
      %p139 = pneg %p133
      %p140 = scmp.eq.s32.totalorder %s14, 1
      %p141 = por %p139, %p140
      %p142 = scmp.ne.s32.totalorder %s134, %s137
      %p143 = scmp.eq.s32.totalorder %s14, 0
      %p144 = por %p142, %p143
      %p145 = scmp.ne.s32.totalorder %s134, %s137
      %p146 = scmp.eq.s32.totalorder %s19, 1
      %p147 = por %p145, %p146
      %p148 = scmp.ne.s32.totalorder %s137, %s138
      %p149 = scmp.eq.s32.totalorder %s19, 0
      %p150 = por %p148, %p149
      %p151 = scmp.ne.s32.totalorder %s137, %s138
      %p152 = scmp.eq.s32.totalorder %s20, 1
      %p153 = por %p151, %p152
      %p155 = scmp.ne.s32.totalorder %s138, %s154
      %p156 = scmp.eq.s32.totalorder %s20, 0
      %p157 = por %p155, %p156
      %p158 = scmp.le.s32.totalorder 1, %s14
      %p159 = scmp.lt.s32.totalorder %s14, 3
      %p160 = pnand %p158, %p159
      %p161 = pneg %p160
      // Predicated region
      $region9: #{tpu_custom_call.1} parent=5 // pred_check
        _
      $region10: #{tpu_custom_call.1} parent=5 // pred_check_branch
        %163 = sbr.rel (%p160) target = $region12
      $region11: #{tpu_custom_call.1} parent=5 // pred_region
        %s164 = ssub.s32 %s14, 1
        // Predicated region
        $region13: #{tpu_custom_call.1} parent=11 // pred_check
          %p165 = pneg %p61
        $region14: #{tpu_custom_call.1} parent=11 // pred_check_branch
          %167 = sbr.rel (%p165) target = $region16
        $region15: #{tpu_custom_call.1} parent=11 // pred_region
          _
        $region16: #{tpu_custom_call.1} parent=11 // pred_fallthru
          _
        // Predicated region
        $region17: #{tpu_custom_call.1} parent=11 // pred_check
          %p168 = pneg %p82
        $region18: #{tpu_custom_call.1} parent=11 // pred_check_branch
          %170 = sbr.rel (%p168) target = $region20
        $region19: #{tpu_custom_call.1} parent=11 // pred_region
          _
        $region20: #{tpu_custom_call.1} parent=11 // pred_fallthru
          _
        // Predicated region
        $region21: #{tpu_custom_call.1} parent=11 // pred_check
          %p171 = pneg %p103
        $region22: #{tpu_custom_call.1} parent=11 // pred_check_branch
          %173 = sbr.rel (%p171) target = $region24
        $region23: #{tpu_custom_call.1} parent=11 // pred_region
          _
        $region24: #{tpu_custom_call.1} parent=11 // pred_fallthru
          _
        // Predicated region
        $region25: #{tpu_custom_call.1} parent=11 // pred_check
          %p174 = pneg %p124
        $region26: #{tpu_custom_call.1} parent=11 // pred_check_branch
          %176 = sbr.rel (%p174) target = $region28
        $region27: #{tpu_custom_call.1} parent=11 // pred_region
          _
        $region28: #{tpu_custom_call.1} parent=11 // pred_fallthru
          _
      $region12: #{tpu_custom_call.1} parent=5 // pred_fallthru
        _
      %p177 = scmp.lt.s32.totalorder %s14, 2
      // Predicated region
      $region29: #{tpu_custom_call.1} parent=5 // pred_check
        %p178 = pneg %p177
      $region30: #{tpu_custom_call.1} parent=5 // pred_check_branch
        %180 = sbr.rel (%p178) target = $region32
      $region31: #{tpu_custom_call.1} parent=5 // pred_region
        // Predicated region
        $region33: #{tpu_custom_call.1} parent=31 // pred_check
          %p181 = pneg %p34
        $region34: #{tpu_custom_call.1} parent=31 // pred_check_branch
          %183 = sbr.rel (%p181) target = $region36
        $region35: #{tpu_custom_call.1} parent=31 // pred_region
          %s184 = smul.u32 256, %s14
          %s185 = ssub.s32 500, %s184
          %p186 = scmp.lt.s32.totalorder %s185, 256
          %s187 = scalar_select %p186, %s185, 256
          %s188 = smul.u32 128, %s187
          %p189 = scmp.lt.s32.totalorder %s184, 499
          %s190 = scalar_select %p189, %s184, 499
          %s191 = smul.addr %s190, 8
          %s192 = scalar_lea.vmem %s0, %s191
          %s193 = smul.u32 256, %s14
          %s194 = ssub.s32 500, %s193
          %p195 = scmp.lt.s32.totalorder %s194, 256
          %s196 = scalar_select %p195, %s194, 256
          %s197 = smul.u32 128, %s196
        $region36: #{tpu_custom_call.1} parent=31 // pred_fallthru
          _
      $region32: #{tpu_custom_call.1} parent=5 // pred_fallthru
        _
      %p198 = scmp.le.s32.totalorder 1, %s14
      %p199 = scmp.lt.s32.totalorder %s14, 3
      %p200 = pnand %p198, %p199
      %p201 = pneg %p200
      // Predicated region
      $region37: #{tpu_custom_call.1} parent=5 // pred_check
        _
      $region38: #{tpu_custom_call.1} parent=5 // pred_check_branch
        %203 = sbr.rel (%p200) target = $region40
      $region39: #{tpu_custom_call.1} parent=5 // pred_region
        %s204 = ssub.s32 %s14, 1
        %s205 = smul.u32 256, %s19
        %s206 = ssub.s32 500, %s205
        %p207 = scmp.lt.s32.totalorder %s206, 256
        %s208 = scalar_select %p207, %s206, 256
        %s209 = smul.u32 128, %s208
        %p210 = scmp.lt.s32.totalorder %s205, 499
        %s211 = scalar_select %p210, %s205, 499
        %s212 = smul.addr %s211, 8
        %s213 = scalar_lea.vmem %s0, %s212
        %p214 = pneg %p40
        %p215 = pneg %p37
        %p216 = pneg %p61
        %p217 = pneg %p58
        %p218 = pneg %p82
        %p219 = pneg %p79
        %p220 = pneg %p103
        %p221 = pneg %p100
        %p222 = pneg %p124
        %p223 = pneg %p121
        %p224 = pneg %p150
        %p225 = pneg %p147
        %s226 = sand.u32 %s137, 1
        %s227 = scalar_lea.sflag [#allocation3], %s226
        %s228 = sand.u32 %s137, 1
        %s229 = smul.addr %s228, 1024
        %s230 = scalar_lea.vmem [#allocation2], %s229
        %s231 = smul.u32 256, %s19
        %s232 = ssub.s32 500, %s231
        %p233 = scmp.lt.s32.totalorder %s232, 256
        %s234 = scalar_select %p233, %s232, 256
        %s235 = smul.u32 128, %s234
        %p236 = scmp.lt.s32.totalorder %s231, 499
        %s237 = scalar_select %p236, %s231, 499
        %s238 = smul.addr %s237, 8
        %s239 = scalar_lea.vmem %s0, %s238
        %s240 = smul.u32 256, %s19
        %s241 = ssub.s32 500, %s240
        %p242 = scmp.lt.s32.totalorder %s241, 256
        %s243 = scalar_select %p242, %s241, 256
        %s244 = smul.u32 128, %s243
        %s245 = smul.u32 256, %s19
        %s246 = ssub.s32 500, %s245
        %p247 = scmp.lt.s32.totalorder %s246, 256
        %s248 = scalar_select %p247, %s246, 256
        %s249 = smul.u32 64, %s248
        %v251 = vld [vmem:[%s239] sm:$0xff]
        %v252 = vld [vmem:[%s239 + $0x8] sm:$0xff]
        %v253 = vld [vmem:[%s239 + $0x10] sm:$0xff]
        %v254 = vld [vmem:[%s239 + $0x18] sm:$0xff]
        %v255 = vld [vmem:[%s239 + $0x20] sm:$0xff]
        %v256 = vld [vmem:[%s239 + $0x28] sm:$0xff]
        %v257 = vld [vmem:[%s239 + $0x30] sm:$0xff]
        %v258 = vld [vmem:[%s239 + $0x38] sm:$0xff]
        %v259 = vld [vmem:[%s239 + $0x40] sm:$0xff]
        %v260 = vld [vmem:[%s239 + $0x48] sm:$0xff]
        %v261 = vld [vmem:[%s239 + $0x50] sm:$0xff]
        %v262 = vld [vmem:[%s239 + $0x58] sm:$0xff]
        %v263 = vld [vmem:[%s239 + $0x60] sm:$0xff]
        %v264 = vld [vmem:[%s239 + $0x68] sm:$0xff]
        %v265 = vld [vmem:[%s239 + $0x70] sm:$0xff]
        %v266 = vld [vmem:[%s239 + $0x78] sm:$0xff]
        %v267 = vld [vmem:[%s239 + $0x80] sm:$0xff]
        %v268 = vld [vmem:[%s239 + $0x88] sm:$0xff]
        %v269 = vld [vmem:[%s239 + $0x90] sm:$0xff]
        %v270 = vld [vmem:[%s239 + $0x98] sm:$0xff]
        %v271 = vld [vmem:[%s239 + $0xa0] sm:$0xff]
        %v272 = vld [vmem:[%s239 + $0xa8] sm:$0xff]
        %v273 = vld [vmem:[%s239 + $0xb0] sm:$0xff]
        %v274 = vld [vmem:[%s239 + $0xb8] sm:$0xff]
        %v275 = vld [vmem:[%s239 + $0xc0] sm:$0xff]
        %v276 = vld [vmem:[%s239 + $0xc8] sm:$0xff]
        %v277 = vld [vmem:[%s239 + $0xd0] sm:$0xff]
        %v278 = vld [vmem:[%s239 + $0xd8] sm:$0xff]
        %v279 = vld [vmem:[%s239 + $0xe0] sm:$0xff]
        %v280 = vld [vmem:[%s239 + $0xe8] sm:$0xff]
        %v281 = vld [vmem:[%s239 + $0xf0] sm:$0xff]
        %v282 = vld [vmem:[%s239 + $0xf8] sm:$0xff]
        %v283 = vld [vmem:[%s239 + $0x100] sm:$0xff]
        %v284 = vld [vmem:[%s239 + $0x108] sm:$0xff]
        %v285 = vld [vmem:[%s239 + $0x110] sm:$0xff]
        %v286 = vld [vmem:[%s239 + $0x118] sm:$0xff]
        %v287 = vld [vmem:[%s239 + $0x120] sm:$0xff]
        %v288 = vld [vmem:[%s239 + $0x128] sm:$0xff]
        %v289 = vld [vmem:[%s239 + $0x130] sm:$0xff]
        %v290 = vld [vmem:[%s239 + $0x138] sm:$0xff]
        %v291 = vld [vmem:[%s239 + $0x140] sm:$0xff]
        %v292 = vld [vmem:[%s239 + $0x148] sm:$0xff]
        %v293 = vld [vmem:[%s239 + $0x150] sm:$0xff]
        %v294 = vld [vmem:[%s239 + $0x158] sm:$0xff]
        %v295 = vld [vmem:[%s239 + $0x160] sm:$0xff]
        %v296 = vld [vmem:[%s239 + $0x168] sm:$0xff]
        %v297 = vld [vmem:[%s239 + $0x170] sm:$0xff]
        %v298 = vld [vmem:[%s239 + $0x178] sm:$0xff]
        %v299 = vld [vmem:[%s239 + $0x180] sm:$0xff]
        %v300 = vld [vmem:[%s239 + $0x188] sm:$0xff]
        %v301 = vld [vmem:[%s239 + $0x190] sm:$0xff]
        %v302 = vld [vmem:[%s239 + $0x198] sm:$0xff]
        %v303 = vld [vmem:[%s239 + $0x1a0] sm:$0xff]
        %v304 = vld [vmem:[%s239 + $0x1a8] sm:$0xff]
        %v305 = vld [vmem:[%s239 + $0x1b0] sm:$0xff]
        %v306 = vld [vmem:[%s239 + $0x1b8] sm:$0xff]
        %v307 = vld [vmem:[%s239 + $0x1c0] sm:$0xff]
        %v308 = vld [vmem:[%s239 + $0x1c8] sm:$0xff]
        %v309 = vld [vmem:[%s239 + $0x1d0] sm:$0xff]
        %v310 = vld [vmem:[%s239 + $0x1d8] sm:$0xff]
        %v311 = vld [vmem:[%s239 + $0x1e0] sm:$0xff]
        %v312 = vld [vmem:[%s239 + $0x1e8] sm:$0xff]
        %v313 = vld [vmem:[%s239 + $0x1f0] sm:$0xff]
        %v314 = vld [vmem:[%s239 + $0x1f8] sm:$0xff]
        %v315 = vld [vmem:[%s239 + $0x200] sm:$0xff]
        %v316 = vld [vmem:[%s239 + $0x208] sm:$0xff]
        %v317 = vld [vmem:[%s239 + $0x210] sm:$0xff]
        %v318 = vld [vmem:[%s239 + $0x218] sm:$0xff]
        %v319 = vld [vmem:[%s239 + $0x220] sm:$0xff]
        %v320 = vld [vmem:[%s239 + $0x228] sm:$0xff]
        %v321 = vld [vmem:[%s239 + $0x230] sm:$0xff]
        %v322 = vld [vmem:[%s239 + $0x238] sm:$0xff]
        %v323 = vld [vmem:[%s239 + $0x240] sm:$0xff]
        %v324 = vld [vmem:[%s239 + $0x248] sm:$0xff]
        %v325 = vld [vmem:[%s239 + $0x250] sm:$0xff]
        %v326 = vld [vmem:[%s239 + $0x258] sm:$0xff]
        %v327 = vld [vmem:[%s239 + $0x260] sm:$0xff]
        %v328 = vld [vmem:[%s239 + $0x268] sm:$0xff]
        %v329 = vld [vmem:[%s239 + $0x270] sm:$0xff]
        %v330 = vld [vmem:[%s239 + $0x278] sm:$0xff]
        %v331 = vld [vmem:[%s239 + $0x280] sm:$0xff]
        %v332 = vld [vmem:[%s239 + $0x288] sm:$0xff]
        %v333 = vld [vmem:[%s239 + $0x290] sm:$0xff]
        %v334 = vld [vmem:[%s239 + $0x298] sm:$0xff]
        %v335 = vld [vmem:[%s239 + $0x2a0] sm:$0xff]
        %v336 = vld [vmem:[%s239 + $0x2a8] sm:$0xff]
        %v337 = vld [vmem:[%s239 + $0x2b0] sm:$0xff]
        %v338 = vld [vmem:[%s239 + $0x2b8] sm:$0xff]
        %v339 = vld [vmem:[%s239 + $0x2c0] sm:$0xff]
        %v340 = vld [vmem:[%s239 + $0x2c8] sm:$0xff]
        %v341 = vld [vmem:[%s239 + $0x2d0] sm:$0xff]
        %v342 = vld [vmem:[%s239 + $0x2d8] sm:$0xff]
        %v343 = vld [vmem:[%s239 + $0x2e0] sm:$0xff]
        %v344 = vld [vmem:[%s239 + $0x2e8] sm:$0xff]
        %v345 = vld [vmem:[%s239 + $0x2f0] sm:$0xff]
        %v346 = vld [vmem:[%s239 + $0x2f8] sm:$0xff]
        %v347 = vld [vmem:[%s239 + $0x300] sm:$0xff]
        %v348 = vld [vmem:[%s239 + $0x308] sm:$0xff]
        %v349 = vld [vmem:[%s239 + $0x310] sm:$0xff]
        %v350 = vld [vmem:[%s239 + $0x318] sm:$0xff]
        %v351 = vld [vmem:[%s239 + $0x320] sm:$0xff]
        %v352 = vld [vmem:[%s239 + $0x328] sm:$0xff]
        %v353 = vld [vmem:[%s239 + $0x330] sm:$0xff]
        %v354 = vld [vmem:[%s239 + $0x338] sm:$0xff]
        %v355 = vld [vmem:[%s239 + $0x340] sm:$0xff]
        %v356 = vld [vmem:[%s239 + $0x348] sm:$0xff]
        %v357 = vld [vmem:[%s239 + $0x350] sm:$0xff]
        %v358 = vld [vmem:[%s239 + $0x358] sm:$0xff]
        %v359 = vld [vmem:[%s239 + $0x360] sm:$0xff]
        %v360 = vld [vmem:[%s239 + $0x368] sm:$0xff]
        %v361 = vld [vmem:[%s239 + $0x370] sm:$0xff]
        %v362 = vld [vmem:[%s239 + $0x378] sm:$0xff]
        %v363 = vld [vmem:[%s239 + $0x380] sm:$0xff]
        %v364 = vld [vmem:[%s239 + $0x388] sm:$0xff]
        %v365 = vld [vmem:[%s239 + $0x390] sm:$0xff]
        %v366 = vld [vmem:[%s239 + $0x398] sm:$0xff]
        %v367 = vld [vmem:[%s239 + $0x3a0] sm:$0xff]
        %v368 = vld [vmem:[%s239 + $0x3a8] sm:$0xff]
        %v369 = vld [vmem:[%s239 + $0x3b0] sm:$0xff]
        %v370 = vld [vmem:[%s239 + $0x3b8] sm:$0xff]
        %v371 = vld [vmem:[%s239 + $0x3c0] sm:$0xff]
        %v372 = vld [vmem:[%s239 + $0x3c8] sm:$0xff]
        %v373 = vld [vmem:[%s239 + $0x3d0] sm:$0xff]
        %v374 = vld [vmem:[%s239 + $0x3d8] sm:$0xff]
        %v375 = vld [vmem:[%s239 + $0x3e0] sm:$0xff]
        %v376 = vld [vmem:[%s239 + $0x3e8] sm:$0xff]
        %v377 = vld [vmem:[%s239 + $0x3f0] sm:$0xff]
        %v378 = vld [vmem:[%s239 + $0x3f8] sm:$0xff]
        %v379 = vld [vmem:[%s239 + $0x400] sm:$0xff]
        %v380 = vld [vmem:[%s239 + $0x408] sm:$0xff]
        %v381 = vld [vmem:[%s239 + $0x410] sm:$0xff]
        %v382 = vld [vmem:[%s239 + $0x418] sm:$0xff]
        %v383 = vld [vmem:[%s239 + $0x420] sm:$0xff]
        %v384 = vld [vmem:[%s239 + $0x428] sm:$0xff]
        %v385 = vld [vmem:[%s239 + $0x430] sm:$0xff]
        %v386 = vld [vmem:[%s239 + $0x438] sm:$0xff]
        %v387 = vld [vmem:[%s239 + $0x440] sm:$0xff]
        %v388 = vld [vmem:[%s239 + $0x448] sm:$0xff]
        %v389 = vld [vmem:[%s239 + $0x450] sm:$0xff]
        %v390 = vld [vmem:[%s239 + $0x458] sm:$0xff]
        %v391 = vld [vmem:[%s239 + $0x460] sm:$0xff]
        %v392 = vld [vmem:[%s239 + $0x468] sm:$0xff]
        %v393 = vld [vmem:[%s239 + $0x470] sm:$0xff]
        %v394 = vld [vmem:[%s239 + $0x478] sm:$0xff]
        %v395 = vld [vmem:[%s239 + $0x480] sm:$0xff]
        %v396 = vld [vmem:[%s239 + $0x488] sm:$0xff]
        %v397 = vld [vmem:[%s239 + $0x490] sm:$0xff]
        %v398 = vld [vmem:[%s239 + $0x498] sm:$0xff]
        %v399 = vld [vmem:[%s239 + $0x4a0] sm:$0xff]
        %v400 = vld [vmem:[%s239 + $0x4a8] sm:$0xff]
        %v401 = vld [vmem:[%s239 + $0x4b0] sm:$0xff]
        %v402 = vld [vmem:[%s239 + $0x4b8] sm:$0xff]
        %v403 = vld [vmem:[%s239 + $0x4c0] sm:$0xff]
        %v404 = vld [vmem:[%s239 + $0x4c8] sm:$0xff]
        %v405 = vld [vmem:[%s239 + $0x4d0] sm:$0xff]
        %v406 = vld [vmem:[%s239 + $0x4d8] sm:$0xff]
        %v407 = vld [vmem:[%s239 + $0x4e0] sm:$0xff]
        %v408 = vld [vmem:[%s239 + $0x4e8] sm:$0xff]
        %v409 = vld [vmem:[%s239 + $0x4f0] sm:$0xff]
        %v410 = vld [vmem:[%s239 + $0x4f8] sm:$0xff]
        %v411 = vld [vmem:[%s239 + $0x500] sm:$0xff]
        %v412 = vld [vmem:[%s239 + $0x508] sm:$0xff]
        %v413 = vld [vmem:[%s239 + $0x510] sm:$0xff]
        %v414 = vld [vmem:[%s239 + $0x518] sm:$0xff]
        %v415 = vld [vmem:[%s239 + $0x520] sm:$0xff]
        %v416 = vld [vmem:[%s239 + $0x528] sm:$0xff]
        %v417 = vld [vmem:[%s239 + $0x530] sm:$0xff]
        %v418 = vld [vmem:[%s239 + $0x538] sm:$0xff]
        %v419 = vld [vmem:[%s239 + $0x540] sm:$0xff]
        %v420 = vld [vmem:[%s239 + $0x548] sm:$0xff]
        %v421 = vld [vmem:[%s239 + $0x550] sm:$0xff]
        %v422 = vld [vmem:[%s239 + $0x558] sm:$0xff]
        %v423 = vld [vmem:[%s239 + $0x560] sm:$0xff]
        %v424 = vld [vmem:[%s239 + $0x568] sm:$0xff]
        %v425 = vld [vmem:[%s239 + $0x570] sm:$0xff]
        %v426 = vld [vmem:[%s239 + $0x578] sm:$0xff]
        %v427 = vld [vmem:[%s239 + $0x580] sm:$0xff]
        %v428 = vld [vmem:[%s239 + $0x588] sm:$0xff]
        %v429 = vld [vmem:[%s239 + $0x590] sm:$0xff]
        %v430 = vld [vmem:[%s239 + $0x598] sm:$0xff]
        %v431 = vld [vmem:[%s239 + $0x5a0] sm:$0xff]
        %v432 = vld [vmem:[%s239 + $0x5a8] sm:$0xff]
        %v433 = vld [vmem:[%s239 + $0x5b0] sm:$0xff]
        %v434 = vld [vmem:[%s239 + $0x5b8] sm:$0xff]
        %v435 = vld [vmem:[%s239 + $0x5c0] sm:$0xff]
        %v436 = vld [vmem:[%s239 + $0x5c8] sm:$0xff]
        %v437 = vld [vmem:[%s239 + $0x5d0] sm:$0xff]
        %v438 = vld [vmem:[%s239 + $0x5d8] sm:$0xff]
        %v439 = vld [vmem:[%s239 + $0x5e0] sm:$0xff]
        %v440 = vld [vmem:[%s239 + $0x5e8] sm:$0xff]
        %v441 = vld [vmem:[%s239 + $0x5f0] sm:$0xff]
        %v442 = vld [vmem:[%s239 + $0x5f8] sm:$0xff]
        %v443 = vld [vmem:[%s239 + $0x600] sm:$0xff]
        %v444 = vld [vmem:[%s239 + $0x608] sm:$0xff]
        %v445 = vld [vmem:[%s239 + $0x610] sm:$0xff]
        %v446 = vld [vmem:[%s239 + $0x618] sm:$0xff]
        %v447 = vld [vmem:[%s239 + $0x620] sm:$0xff]
        %v448 = vld [vmem:[%s239 + $0x628] sm:$0xff]
        %v449 = vld [vmem:[%s239 + $0x630] sm:$0xff]
        %v450 = vld [vmem:[%s239 + $0x638] sm:$0xff]
        %v451 = vld [vmem:[%s239 + $0x640] sm:$0xff]
        %v452 = vld [vmem:[%s239 + $0x648] sm:$0xff]
        %v453 = vld [vmem:[%s239 + $0x650] sm:$0xff]
        %v454 = vld [vmem:[%s239 + $0x658] sm:$0xff]
        %v455 = vld [vmem:[%s239 + $0x660] sm:$0xff]
        %v456 = vld [vmem:[%s239 + $0x668] sm:$0xff]
        %v457 = vld [vmem:[%s239 + $0x670] sm:$0xff]
        %v458 = vld [vmem:[%s239 + $0x678] sm:$0xff]
        %v459 = vld [vmem:[%s239 + $0x680] sm:$0xff]
        %v460 = vld [vmem:[%s239 + $0x688] sm:$0xff]
        %v461 = vld [vmem:[%s239 + $0x690] sm:$0xff]
        %v462 = vld [vmem:[%s239 + $0x698] sm:$0xff]
        %v463 = vld [vmem:[%s239 + $0x6a0] sm:$0xff]
        %v464 = vld [vmem:[%s239 + $0x6a8] sm:$0xff]
        %v465 = vld [vmem:[%s239 + $0x6b0] sm:$0xff]
        %v466 = vld [vmem:[%s239 + $0x6b8] sm:$0xff]
        %v467 = vld [vmem:[%s239 + $0x6c0] sm:$0xff]
        %v468 = vld [vmem:[%s239 + $0x6c8] sm:$0xff]
        %v469 = vld [vmem:[%s239 + $0x6d0] sm:$0xff]
        %v470 = vld [vmem:[%s239 + $0x6d8] sm:$0xff]
        %v471 = vld [vmem:[%s239 + $0x6e0] sm:$0xff]
        %v472 = vld [vmem:[%s239 + $0x6e8] sm:$0xff]
        %v473 = vld [vmem:[%s239 + $0x6f0] sm:$0xff]
        %v474 = vld [vmem:[%s239 + $0x6f8] sm:$0xff]
        %v475 = vld [vmem:[%s239 + $0x700] sm:$0xff]
        %v476 = vld [vmem:[%s239 + $0x708] sm:$0xff]
        %v477 = vld [vmem:[%s239 + $0x710] sm:$0xff]
        %v478 = vld [vmem:[%s239 + $0x718] sm:$0xff]
        %v479 = vld [vmem:[%s239 + $0x720] sm:$0xff]
        %v480 = vld [vmem:[%s239 + $0x728] sm:$0xff]
        %v481 = vld [vmem:[%s239 + $0x730] sm:$0xff]
        %v482 = vld [vmem:[%s239 + $0x738] sm:$0xff]
        %v483 = vld [vmem:[%s239 + $0x740] sm:$0xff]
        %v484 = vld [vmem:[%s239 + $0x748] sm:$0xff]
        %v485 = vld [vmem:[%s239 + $0x750] sm:$0xff]
        %v486 = vld [vmem:[%s239 + $0x758] sm:$0xff]
        %v487 = vld [vmem:[%s239 + $0x760] sm:$0xff]
        %v488 = vld [vmem:[%s239 + $0x768] sm:$0xff]
        %v489 = vld [vmem:[%s239 + $0x770] sm:$0xff]
        %v490 = vld [vmem:[%s239 + $0x778] sm:$0xff]
        %v491 = vld [vmem:[%s239 + $0x780] sm:$0xff]
        %v492 = vld [vmem:[%s239 + $0x788] sm:$0xff]
        %v493 = vld [vmem:[%s239 + $0x790] sm:$0xff]
        %v494 = vld [vmem:[%s239 + $0x798] sm:$0xff]
        %v495 = vld [vmem:[%s239 + $0x7a0] sm:$0xff]
        %v496 = vld [vmem:[%s239 + $0x7a8] sm:$0xff]
        %v497 = vld [vmem:[%s239 + $0x7b0] sm:$0xff]
        %v498 = vld [vmem:[%s239 + $0x7b8] sm:$0xff]
        %v499 = vld [vmem:[%s239 + $0x7c0] sm:$0xff]
        %v500 = vld [vmem:[%s239 + $0x7c8] sm:$0xff]
        %v501 = vld [vmem:[%s239 + $0x7d0] sm:$0xff]
        %v502 = vld [vmem:[%s239 + $0x7d8] sm:$0xff]
        %v503 = vld [vmem:[%s239 + $0x7e0] sm:$0xff]
        %v504 = vld [vmem:[%s239 + $0x7e8] sm:$0xff]
        %v505 = vld [vmem:[%s239 + $0x7f0] sm:$0xff]
        %v506 = vld [vmem:[%s239 + $0x7f8] sm:$0xff]
        %v507 = vpack.c.bf16 %v252, %v251
        %v508 = vpack.c.bf16 %v254, %v253
        %v509 = vpack.c.bf16 %v256, %v255
        %v510 = vpack.c.bf16 %v258, %v257
        %v511 = vpack.c.bf16 %v260, %v259
        %v512 = vpack.c.bf16 %v262, %v261
        %v513 = vpack.c.bf16 %v264, %v263
        %v514 = vpack.c.bf16 %v266, %v265
        %v515 = vpack.c.bf16 %v268, %v267
        %v516 = vpack.c.bf16 %v270, %v269
        %v517 = vpack.c.bf16 %v272, %v271
        %v518 = vpack.c.bf16 %v274, %v273
        %v519 = vpack.c.bf16 %v276, %v275
        %v520 = vpack.c.bf16 %v278, %v277
        %v521 = vpack.c.bf16 %v280, %v279
        %v522 = vpack.c.bf16 %v282, %v281
        %v523 = vpack.c.bf16 %v284, %v283
        %v524 = vpack.c.bf16 %v286, %v285
        %v525 = vpack.c.bf16 %v288, %v287
        %v526 = vpack.c.bf16 %v290, %v289
        %v527 = vpack.c.bf16 %v292, %v291
        %v528 = vpack.c.bf16 %v294, %v293
        %v529 = vpack.c.bf16 %v296, %v295
        %v530 = vpack.c.bf16 %v298, %v297
        %v531 = vpack.c.bf16 %v300, %v299
        %v532 = vpack.c.bf16 %v302, %v301
        %v533 = vpack.c.bf16 %v304, %v303
        %v534 = vpack.c.bf16 %v306, %v305
        %v535 = vpack.c.bf16 %v308, %v307
        %v536 = vpack.c.bf16 %v310, %v309
        %v537 = vpack.c.bf16 %v312, %v311
        %v538 = vpack.c.bf16 %v314, %v313
        %v539 = vpack.c.bf16 %v316, %v315
        %v540 = vpack.c.bf16 %v318, %v317
        %v541 = vpack.c.bf16 %v320, %v319
        %v542 = vpack.c.bf16 %v322, %v321
        %v543 = vpack.c.bf16 %v324, %v323
        %v544 = vpack.c.bf16 %v326, %v325
        %v545 = vpack.c.bf16 %v328, %v327
        %v546 = vpack.c.bf16 %v330, %v329
        %v547 = vpack.c.bf16 %v332, %v331
        %v548 = vpack.c.bf16 %v334, %v333
        %v549 = vpack.c.bf16 %v336, %v335
        %v550 = vpack.c.bf16 %v338, %v337
        %v551 = vpack.c.bf16 %v340, %v339
        %v552 = vpack.c.bf16 %v342, %v341
        %v553 = vpack.c.bf16 %v344, %v343
        %v554 = vpack.c.bf16 %v346, %v345
        %v555 = vpack.c.bf16 %v348, %v347
        %v556 = vpack.c.bf16 %v350, %v349
        %v557 = vpack.c.bf16 %v352, %v351
        %v558 = vpack.c.bf16 %v354, %v353
        %v559 = vpack.c.bf16 %v356, %v355
        %v560 = vpack.c.bf16 %v358, %v357
        %v561 = vpack.c.bf16 %v360, %v359
        %v562 = vpack.c.bf16 %v362, %v361
        %v563 = vpack.c.bf16 %v364, %v363
        %v564 = vpack.c.bf16 %v366, %v365
        %v565 = vpack.c.bf16 %v368, %v367
        %v566 = vpack.c.bf16 %v370, %v369
        %v567 = vpack.c.bf16 %v372, %v371
        %v568 = vpack.c.bf16 %v374, %v373
        %v569 = vpack.c.bf16 %v376, %v375
        %v570 = vpack.c.bf16 %v378, %v377
        %v571 = vpack.c.bf16 %v380, %v379
        %v572 = vpack.c.bf16 %v382, %v381
        %v573 = vpack.c.bf16 %v384, %v383
        %v574 = vpack.c.bf16 %v386, %v385
        %v575 = vpack.c.bf16 %v388, %v387
        %v576 = vpack.c.bf16 %v390, %v389
        %v577 = vpack.c.bf16 %v392, %v391
        %v578 = vpack.c.bf16 %v394, %v393
        %v579 = vpack.c.bf16 %v396, %v395
        %v580 = vpack.c.bf16 %v398, %v397
        %v581 = vpack.c.bf16 %v400, %v399
        %v582 = vpack.c.bf16 %v402, %v401
        %v583 = vpack.c.bf16 %v404, %v403
        %v584 = vpack.c.bf16 %v406, %v405
        %v585 = vpack.c.bf16 %v408, %v407
        %v586 = vpack.c.bf16 %v410, %v409
        %v587 = vpack.c.bf16 %v412, %v411
        %v588 = vpack.c.bf16 %v414, %v413
        %v589 = vpack.c.bf16 %v416, %v415
        %v590 = vpack.c.bf16 %v418, %v417
        %v591 = vpack.c.bf16 %v420, %v419
        %v592 = vpack.c.bf16 %v422, %v421
        %v593 = vpack.c.bf16 %v424, %v423
        %v594 = vpack.c.bf16 %v426, %v425
        %v595 = vpack.c.bf16 %v428, %v427
        %v596 = vpack.c.bf16 %v430, %v429
        %v597 = vpack.c.bf16 %v432, %v431
        %v598 = vpack.c.bf16 %v434, %v433
        %v599 = vpack.c.bf16 %v436, %v435
        %v600 = vpack.c.bf16 %v438, %v437
        %v601 = vpack.c.bf16 %v440, %v439
        %v602 = vpack.c.bf16 %v442, %v441
        %v603 = vpack.c.bf16 %v444, %v443
        %v604 = vpack.c.bf16 %v446, %v445
        %v605 = vpack.c.bf16 %v448, %v447
        %v606 = vpack.c.bf16 %v450, %v449
        %v607 = vpack.c.bf16 %v452, %v451
        %v608 = vpack.c.bf16 %v454, %v453
        %v609 = vpack.c.bf16 %v456, %v455
        %v610 = vpack.c.bf16 %v458, %v457
        %v611 = vpack.c.bf16 %v460, %v459
        %v612 = vpack.c.bf16 %v462, %v461
        %v613 = vpack.c.bf16 %v464, %v463
        %v614 = vpack.c.bf16 %v466, %v465
        %v615 = vpack.c.bf16 %v468, %v467
        %v616 = vpack.c.bf16 %v470, %v469
        %v617 = vpack.c.bf16 %v472, %v471
        %v618 = vpack.c.bf16 %v474, %v473
        %v619 = vpack.c.bf16 %v476, %v475
        %v620 = vpack.c.bf16 %v478, %v477
        %v621 = vpack.c.bf16 %v480, %v479
        %v622 = vpack.c.bf16 %v482, %v481
        %v623 = vpack.c.bf16 %v484, %v483
        %v624 = vpack.c.bf16 %v486, %v485
        %v625 = vpack.c.bf16 %v488, %v487
        %v626 = vpack.c.bf16 %v490, %v489
        %v627 = vpack.c.bf16 %v492, %v491
        %v628 = vpack.c.bf16 %v494, %v493
        %v629 = vpack.c.bf16 %v496, %v495
        %v630 = vpack.c.bf16 %v498, %v497
        %v631 = vpack.c.bf16 %v500, %v499
        %v632 = vpack.c.bf16 %v502, %v501
        %v633 = vpack.c.bf16 %v504, %v503
        %v634 = vpack.c.bf16 %v506, %v505
        %v635 = vld [vmem:[%s1] sm:$0xff]
        %v636 = vld [vmem:[%s1 + $0x8] sm:$0xff]
        %v637 = vld [vmem:[%s1 + $0x10] sm:$0xff]
        %v638 = vld [vmem:[%s1 + $0x18] sm:$0xff]
        %v639 = vld [vmem:[%s1 + $0x20] sm:$0xff]
        %v640 = vld [vmem:[%s1 + $0x28] sm:$0xff]
        %v641 = vld [vmem:[%s1 + $0x30] sm:$0xff]
        %v642 = vld [vmem:[%s1 + $0x38] sm:$0xff]
        %v643 = vld [vmem:[%s2] sm:$0x3]
        %v645 = vlaneseq
        %v646 = vshrl.u32 %v645, 7
        %v647 = vsub.s32 0, %v646
        %v648 = vrot.slane %v643, %v647
        %v649 = vlaneseq
        %v650 = vshrl.u32 %v649, 7
        %v651 = vsub.s32 1, %v650
        %v652 = vrot.slane %v643, %v651
        %v663 = vunpack.c.l.b16 %v635
        %v664 = vunpack.c.h.b16 %v635
        %v665 = vunpack.c.l.b16 %v636
        %v666 = vunpack.c.h.b16 %v636
        %v667 = vunpack.c.l.b16 %v637
        %v668 = vunpack.c.h.b16 %v637
        %v669 = vunpack.c.l.b16 %v638
        %v670 = vunpack.c.h.b16 %v638
        %v671 = vunpack.c.l.b16 %v639
        %v672 = vunpack.c.h.b16 %v639
        %v673 = vunpack.c.l.b16 %v640
        %v674 = vunpack.c.h.b16 %v640
        %v675 = vunpack.c.l.b16 %v641
        %v676 = vunpack.c.h.b16 %v641
        %v677 = vunpack.c.l.b16 %v642
        %v678 = vunpack.c.h.b16 %v642
        %v679 = vpack.c.b16 %v665, %v663
        %v680 = vpack.c.b16 %v666, %v664
        %v681 = vpack.c.b16 %v669, %v667
        %v682 = vpack.c.b16 %v670, %v668
        %v683 = vpack.c.b16 %v673, %v671
        %v684 = vpack.c.b16 %v674, %v672
        %v685 = vpack.c.b16 %v677, %v675
        %v686 = vpack.c.b16 %v678, %v676
        %vm695 = vcmask 523264
        %v697 = vsel %vm695, %v507, 0
        %v700 = vsel %vm695, %v508, 0
        %v703 = vsel %vm695, %v509, 0
        %v706 = vsel %vm695, %v510, 0
        %v709 = vsel %vm695, %v511, 0
        %v712 = vsel %vm695, %v512, 0
        %v715 = vsel %vm695, %v513, 0
        %v718 = vsel %vm695, %v514, 0
        %v721 = vsel %vm695, %v515, 0
        %v724 = vsel %vm695, %v516, 0
        %v727 = vsel %vm695, %v517, 0
        %v730 = vsel %vm695, %v518, 0
        %v733 = vsel %vm695, %v519, 0
        %v736 = vsel %vm695, %v520, 0
        %v739 = vsel %vm695, %v521, 0
        %v742 = vsel %vm695, %v522, 0
        %v745 = vsel %vm695, %v523, 0
        %v748 = vsel %vm695, %v524, 0
        %v751 = vsel %vm695, %v525, 0
        %v754 = vsel %vm695, %v526, 0
        %v757 = vsel %vm695, %v527, 0
        %v760 = vsel %vm695, %v528, 0
        %v763 = vsel %vm695, %v529, 0
        %v766 = vsel %vm695, %v530, 0
        %v769 = vsel %vm695, %v531, 0
        %v772 = vsel %vm695, %v532, 0
        %v775 = vsel %vm695, %v533, 0
        %v778 = vsel %vm695, %v534, 0
        %v781 = vsel %vm695, %v535, 0
        %v784 = vsel %vm695, %v536, 0
        %v787 = vsel %vm695, %v537, 0
        %v790 = vsel %vm695, %v538, 0
        %v793 = vsel %vm695, %v539, 0
        %v796 = vsel %vm695, %v540, 0
        %v799 = vsel %vm695, %v541, 0
        %v802 = vsel %vm695, %v542, 0
        %v805 = vsel %vm695, %v543, 0
        %v808 = vsel %vm695, %v544, 0
        %v811 = vsel %vm695, %v545, 0
        %v814 = vsel %vm695, %v546, 0
        %v817 = vsel %vm695, %v547, 0
        %v820 = vsel %vm695, %v548, 0
        %v823 = vsel %vm695, %v549, 0
        %v826 = vsel %vm695, %v550, 0
        %v829 = vsel %vm695, %v551, 0
        %v832 = vsel %vm695, %v552, 0
        %v835 = vsel %vm695, %v553, 0
        %v838 = vsel %vm695, %v554, 0
        %v841 = vsel %vm695, %v555, 0
        %v844 = vsel %vm695, %v556, 0
        %v847 = vsel %vm695, %v557, 0
        %v850 = vsel %vm695, %v558, 0
        %v853 = vsel %vm695, %v559, 0
        %v856 = vsel %vm695, %v560, 0
        %v859 = vsel %vm695, %v561, 0
        %v862 = vsel %vm695, %v562, 0
        %v865 = vsel %vm695, %v563, 0
        %v868 = vsel %vm695, %v564, 0
        %v871 = vsel %vm695, %v565, 0
        %v874 = vsel %vm695, %v566, 0
        %v877 = vsel %vm695, %v567, 0
        %v880 = vsel %vm695, %v568, 0
        %v883 = vsel %vm695, %v569, 0
        %v886 = vsel %vm695, %v570, 0
        %v889 = vsel %vm695, %v571, 0
        %v892 = vsel %vm695, %v572, 0
        %v895 = vsel %vm695, %v573, 0
        %v898 = vsel %vm695, %v574, 0
        %v901 = vsel %vm695, %v575, 0
        %v904 = vsel %vm695, %v576, 0
        %v907 = vsel %vm695, %v577, 0
        %v910 = vsel %vm695, %v578, 0
        %v913 = vsel %vm695, %v579, 0
        %v916 = vsel %vm695, %v580, 0
        %v919 = vsel %vm695, %v581, 0
        %v922 = vsel %vm695, %v582, 0
        %v925 = vsel %vm695, %v583, 0
        %v928 = vsel %vm695, %v584, 0
        %v931 = vsel %vm695, %v585, 0
        %v934 = vsel %vm695, %v586, 0
        %v937 = vsel %vm695, %v587, 0
        %v940 = vsel %vm695, %v588, 0
        %v943 = vsel %vm695, %v589, 0
        %v946 = vsel %vm695, %v590, 0
        %v949 = vsel %vm695, %v591, 0
        %v952 = vsel %vm695, %v592, 0
        %v955 = vsel %vm695, %v593, 0
        %v958 = vsel %vm695, %v594, 0
        %v961 = vsel %vm695, %v595, 0
        %v964 = vsel %vm695, %v596, 0
        %v967 = vsel %vm695, %v597, 0
        %v970 = vsel %vm695, %v598, 0
        %v973 = vsel %vm695, %v599, 0
        %v976 = vsel %vm695, %v600, 0
        %v979 = vsel %vm695, %v601, 0
        %v982 = vsel %vm695, %v602, 0
        %v985 = vsel %vm695, %v603, 0
        %v988 = vsel %vm695, %v604, 0
        %v991 = vsel %vm695, %v605, 0
        %v994 = vsel %vm695, %v606, 0
        %v997 = vsel %vm695, %v607, 0
        %v1000 = vsel %vm695, %v608, 0
        %v1003 = vsel %vm695, %v609, 0
        %v1006 = vsel %vm695, %v610, 0
        %v1009 = vsel %vm695, %v611, 0
        %v1012 = vsel %vm695, %v612, 0
        %v1015 = vsel %vm695, %v613, 0
        %v1018 = vsel %vm695, %v614, 0
        %v1021 = vsel %vm695, %v615, 0
        %v1024 = vsel %vm695, %v616, 0
        %v1027 = vsel %vm695, %v617, 0
        %v1030 = vsel %vm695, %v618, 0
        %v1033 = vsel %vm695, %v619, 0
        %v1036 = vsel %vm695, %v620, 0
        %v1039 = vsel %vm695, %v621, 0
        %v1042 = vsel %vm695, %v622, 0
        %v1045 = vsel %vm695, %v623, 0
        %v1048 = vsel %vm695, %v624, 0
        %v1051 = vsel %vm695, %v625, 0
        %v1054 = vsel %vm695, %v626, 0
        %v1057 = vsel %vm695, %v627, 0
        %v1060 = vsel %vm695, %v628, 0
        %v1063 = vsel %vm695, %v629, 0
        %v1066 = vsel %vm695, %v630, 0
        %v1069 = vsel %vm695, %v631, 0
        %v1072 = vsel %vm695, %v632, 0
        %v1075 = vsel %vm695, %v633, 0
        %v1078 = vsel %vm695, %v634, 0
        %1080 = vmatprep.subr.bf16.mxu0 %v680
        %1081 = vmatpush1.bf16.msra.mxu0 %v679
        %1082 = vmatprep.subr.bf16.mxu0 %v682
        %1083 = vmatpush1.bf16.msra.mxu0 %v681
        %1084 = vmatprep.subr.bf16.mxu0 %v684
        %1085 = vmatpush1.bf16.msra.mxu0 %v683
        %1086 = vmatprep.subr.bf16.mxu0 %v686
        %1087 = vmatpush1.bf16.msra.mxu0 %v685
        %1088 = vmatprep.subr.bf16.mxu0 0
        %1089 = vmatpush1.bf16.msra.mxu0 0
        %1090 = vmatprep.subr.bf16.mxu0 0
        %1091 = vmatpush1.bf16.msra.mxu0 0
        %1092 = vmatprep.subr.bf16.mxu0 0
        %1093 = vmatpush1.bf16.msra.mxu0 0
        %1094 = vmatprep.subr.bf16.mxu0 0
        %1095 = vmatpush1.bf16.msra.mxu0 0
        %1096 = vmatprep.subr.bf16.mxu0 0
        %1097 = vmatpush1.bf16.msra.mxu0 0
        %1098 = vmatprep.subr.bf16.mxu0 0
        %1099 = vmatpush1.bf16.msra.mxu0 0
        %1100 = vmatprep.subr.bf16.mxu0 0
        %1101 = vmatpush1.bf16.msra.mxu0 0
        %1102 = vmatprep.subr.bf16.mxu0 0
        %1103 = vmatpush1.bf16.msra.mxu0 0
        %1104 = vmatprep.subr.bf16.mxu0 0
        %1105 = vmatpush1.bf16.msra.mxu0 0
        %1106 = vmatprep.subr.bf16.mxu0 0
        %1107 = vmatpush1.bf16.msra.mxu0 0
        %1108 = vmatprep.subr.bf16.mxu0 0
        %1109 = vmatpush1.bf16.msra.mxu0 0
        %1110 = vmatprep.subr.bf16.mxu0 0
        %1111 = vmatpush1.bf16.msra.mxu0 0
        %1112 = vmatprep.mubr.bf16.mxu0 0
        %1113 = vmatmul.mubr.bf16.gmra.mrb[0].mxu0 %v697
        %v1114 = vpop.f32.mrb[0].mxu0
        %v1115 = vadd.f32 %v648, %v1114
        %v1116 = vpop.f32.mrb[0].mxu0
        %v1117 = vadd.f32 %v652, %v1116
        %v1118 = vpop.f32.mrb[0].mxu0
        %v1119 = vadd.f32 %v648, %v1118
        %v1120 = vpop.f32.mrb[0].mxu0
        %v1121 = vadd.f32 %v652, %v1120
        %1122 = vmatprep.mubr.bf16.mxu0 0
        %1123 = vmatmul.mubr.bf16.gmra.mrb[0].mxu0 %v700
        %v1124 = vpop.f32.mrb[0].mxu0
        %v1125 = vadd.f32 %v648, %v1124
        %v1126 = vpop.f32.mrb[0].mxu0
        %v1127 = vadd.f32 %v652, %v1126
        %v1128 = vpop.f32.mrb[0].mxu0
        %v1129 = vadd.f32 %v648, %v1128
        %v1130 = vpop.f32.mrb[0].mxu0
        %v1131 = vadd.f32 %v652, %v1130
        %1132 = vmatprep.mubr.bf16.mxu0 0
        %1133 = vmatmul.mubr.bf16.gmra.mrb[0].mxu0 %v703
        %v1134 = vpop.f32.mrb[0].mxu0
        %v1135 = vadd.f32 %v648, %v1134
        %v1136 = vpop.f32.mrb[0].mxu0
        %v1137 = vadd.f32 %v652, %v1136
        %v1138 = vpop.f32.mrb[0].mxu0
        %v1139 = vadd.f32 %v648, %v1138
        %v1140 = vpop.f32.mrb[0].mxu0
        %v1141 = vadd.f32 %v652, %v1140
        %1142 = vmatprep.mubr.bf16.mxu0 0
        %1143 = vmatmul.mubr.bf16.gmra.mrb[0].mxu0 %v706
        %v1144 = vpop.f32.mrb[0].mxu0
        %v1145 = vadd.f32 %v648, %v1144
        %v1146 = vpop.f32.mrb[0].mxu0
        %v1147 = vadd.f32 %v652, %v1146
        %v1148 = vpop.f32.mrb[0].mxu0
        %v1149 = vadd.f32 %v648, %v1148
        %v1150 = vpop.f32.mrb[0].mxu0
        %v1151 = vadd.f32 %v652, %v1150
        %1152 = vmatprep.mubr.bf16.mxu0 0
        %1153 = vmatmul.mubr.bf16.gmra.mrb[0].mxu0 %v709
        %v1154 = vpop.f32.mrb[0].mxu0
        %v1155 = vadd.f32 %v648, %v1154
        %v1156 = vpop.f32.mrb[0].mxu0
        %v1157 = vadd.f32 %v652, %v1156
        %v1158 = vpop.f32.mrb[0].mxu0
        %v1159 = vadd.f32 %v648, %v1158
        %v1160 = vpop.f32.mrb[0].mxu0
        %v1161 = vadd.f32 %v652, %v1160
        %1162 = vmatprep.mubr.bf16.mxu0 0
        %1163 = vmatmul.mubr.bf16.gmra.mrb[0].mxu0 %v712
        %v1164 = vpop.f32.mrb[0].mxu0
        %v1165 = vadd.f32 %v648, %v1164
        %v1166 = vpop.f32.mrb[0].mxu0
        %v1167 = vadd.f32 %v652, %v1166
        %v1168 = vpop.f32.mrb[0].mxu0
        %v1169 = vadd.f32 %v648, %v1168
        %v1170 = vpop.f32.mrb[0].mxu0
        %v1171 = vadd.f32 %v652, %v1170
        %1172 = vmatprep.mubr.bf16.mxu0 0
        %1173 = vmatmul.mubr.bf16.gmra.mrb[0].mxu0 %v715
        %v1174 = vpop.f32.mrb[0].mxu0
        %v1175 = vadd.f32 %v648, %v1174
        %v1176 = vpop.f32.mrb[0].mxu0
        %v1177 = vadd.f32 %v652, %v1176
        %v1178 = vpop.f32.mrb[0].mxu0
        %v1179 = vadd.f32 %v648, %v1178
        %v1180 = vpop.f32.mrb[0].mxu0
        %v1181 = vadd.f32 %v652, %v1180
        %1182 = vmatprep.mubr.bf16.mxu0 0
        %1183 = vmatmul.mubr.bf16.gmra.mrb[0].mxu0 %v718
        %v1184 = vpop.f32.mrb[0].mxu0
        %v1185 = vadd.f32 %v648, %v1184
        %v1186 = vpop.f32.mrb[0].mxu0
        %v1187 = vadd.f32 %v652, %v1186
        %v1188 = vpop.f32.mrb[0].mxu0
        %v1189 = vadd.f32 %v648, %v1188
        %v1190 = vpop.f32.mrb[0].mxu0
        %v1191 = vadd.f32 %v652, %v1190
        %1192 = vmatprep.mubr.bf16.mxu0 0
        %1193 = vmatmul.mubr.bf16.gmra.mrb[0].mxu0 %v721
        %v1194 = vpop.f32.mrb[0].mxu0
        %v1195 = vadd.f32 %v648, %v1194
        %v1196 = vpop.f32.mrb[0].mxu0
        %v1197 = vadd.f32 %v652, %v1196
        %v1198 = vpop.f32.mrb[0].mxu0
        %v1199 = vadd.f32 %v648, %v1198
        %v1200 = vpop.f32.mrb[0].mxu0
        %v1201 = vadd.f32 %v652, %v1200
        %1202 = vmatprep.mubr.bf16.mxu0 0
        %1203 = vmatmul.mubr.bf16.gmra.mrb[0].mxu0 %v724
        %v1204 = vpop.f32.mrb[0].mxu0
        %v1205 = vadd.f32 %v648, %v1204
        %v1206 = vpop.f32.mrb[0].mxu0
        %v1207 = vadd.f32 %v652, %v1206
        %v1208 = vpop.f32.mrb[0].mxu0
        %v1209 = vadd.f32 %v648, %v1208
        %v1210 = vpop.f32.mrb[0].mxu0
        %v1211 = vadd.f32 %v652, %v1210
        %1212 = vmatprep.mubr.bf16.mxu0 0
        %1213 = vmatmul.mubr.bf16.gmra.mrb[0].mxu0 %v727
        %v1214 = vpop.f32.mrb[0].mxu0
        %v1215 = vadd.f32 %v648, %v1214
        %v1216 = vpop.f32.mrb[0].mxu0
        %v1217 = vadd.f32 %v652, %v1216
        %v1218 = vpop.f32.mrb[0].mxu0
        %v1219 = vadd.f32 %v648, %v1218
        %v1220 = vpop.f32.mrb[0].mxu0
        %v1221 = vadd.f32 %v652, %v1220
        %1222 = vmatprep.mubr.bf16.mxu0 0
        %1223 = vmatmul.mubr.bf16.gmra.mrb[0].mxu0 %v730
        %v1224 = vpop.f32.mrb[0].mxu0
        %v1225 = vadd.f32 %v648, %v1224
        %v1226 = vpop.f32.mrb[0].mxu0
        %v1227 = vadd.f32 %v652, %v1226
        %v1228 = vpop.f32.mrb[0].mxu0
        %v1229 = vadd.f32 %v648, %v1228
        %v1230 = vpop.f32.mrb[0].mxu0
        %v1231 = vadd.f32 %v652, %v1230
        %1232 = vmatprep.mubr.bf16.mxu0 0
        %1233 = vmatmul.mubr.bf16.gmra.mrb[0].mxu0 %v733
        %v1234 = vpop.f32.mrb[0].mxu0
        %v1235 = vadd.f32 %v648, %v1234
        %v1236 = vpop.f32.mrb[0].mxu0
        %v1237 = vadd.f32 %v652, %v1236
        %v1238 = vpop.f32.mrb[0].mxu0
        %v1239 = vadd.f32 %v648, %v1238
        %v1240 = vpop.f32.mrb[0].mxu0
        %v1241 = vadd.f32 %v652, %v1240
        %1242 = vmatprep.mubr.bf16.mxu0 0
        %1243 = vmatmul.mubr.bf16.gmra.mrb[0].mxu0 %v736
        %v1244 = vpop.f32.mrb[0].mxu0
        %v1245 = vadd.f32 %v648, %v1244
        %v1246 = vpop.f32.mrb[0].mxu0
        %v1247 = vadd.f32 %v652, %v1246
        %v1248 = vpop.f32.mrb[0].mxu0
        %v1249 = vadd.f32 %v648, %v1248
        %v1250 = vpop.f32.mrb[0].mxu0
        %v1251 = vadd.f32 %v652, %v1250
        %1252 = vmatprep.mubr.bf16.mxu0 0
        %1253 = vmatmul.mubr.bf16.gmra.mrb[0].mxu0 %v739
        %v1254 = vpop.f32.mrb[0].mxu0
        %v1255 = vadd.f32 %v648, %v1254
        %v1256 = vpop.f32.mrb[0].mxu0
        %v1257 = vadd.f32 %v652, %v1256
        %v1258 = vpop.f32.mrb[0].mxu0
        %v1259 = vadd.f32 %v648, %v1258
        %v1260 = vpop.f32.mrb[0].mxu0
        %v1261 = vadd.f32 %v652, %v1260
        %1262 = vmatprep.mubr.bf16.mxu0 0
        %1263 = vmatmul.mubr.bf16.gmra.mrb[0].mxu0 %v742
        %v1264 = vpop.f32.mrb[0].mxu0
        %v1265 = vadd.f32 %v648, %v1264
        %v1266 = vpop.f32.mrb[0].mxu0
        %v1267 = vadd.f32 %v652, %v1266
        %v1268 = vpop.f32.mrb[0].mxu0
        %v1269 = vadd.f32 %v648, %v1268
        %v1270 = vpop.f32.mrb[0].mxu0
        %v1271 = vadd.f32 %v652, %v1270
        %1272 = vmatprep.mubr.bf16.mxu0 0
        %1273 = vmatmul.mubr.bf16.gmra.mrb[0].mxu0 %v745
        %v1274 = vpop.f32.mrb[0].mxu0
        %v1275 = vadd.f32 %v648, %v1274
        %v1276 = vpop.f32.mrb[0].mxu0
        %v1277 = vadd.f32 %v652, %v1276
        %v1278 = vpop.f32.mrb[0].mxu0
        %v1279 = vadd.f32 %v648, %v1278
        %v1280 = vpop.f32.mrb[0].mxu0
        %v1281 = vadd.f32 %v652, %v1280
        %1282 = vmatprep.mubr.bf16.mxu0 0
        %1283 = vmatmul.mubr.bf16.gmra.mrb[0].mxu0 %v748
        %v1284 = vpop.f32.mrb[0].mxu0
        %v1285 = vadd.f32 %v648, %v1284
        %v1286 = vpop.f32.mrb[0].mxu0
        %v1287 = vadd.f32 %v652, %v1286
        %v1288 = vpop.f32.mrb[0].mxu0
        %v1289 = vadd.f32 %v648, %v1288
        %v1290 = vpop.f32.mrb[0].mxu0
        %v1291 = vadd.f32 %v652, %v1290
        %1292 = vmatprep.mubr.bf16.mxu0 0
        %1293 = vmatmul.mubr.bf16.gmra.mrb[0].mxu0 %v751
        %v1294 = vpop.f32.mrb[0].mxu0
        %v1295 = vadd.f32 %v648, %v1294
        %v1296 = vpop.f32.mrb[0].mxu0
        %v1297 = vadd.f32 %v652, %v1296
        %v1298 = vpop.f32.mrb[0].mxu0
        %v1299 = vadd.f32 %v648, %v1298
        %v1300 = vpop.f32.mrb[0].mxu0
        %v1301 = vadd.f32 %v652, %v1300
        %1302 = vmatprep.mubr.bf16.mxu0 0
        %1303 = vmatmul.mubr.bf16.gmra.mrb[0].mxu0 %v754
        %v1304 = vpop.f32.mrb[0].mxu0
        %v1305 = vadd.f32 %v648, %v1304
        %v1306 = vpop.f32.mrb[0].mxu0
        %v1307 = vadd.f32 %v652, %v1306
        %v1308 = vpop.f32.mrb[0].mxu0
        %v1309 = vadd.f32 %v648, %v1308
        %v1310 = vpop.f32.mrb[0].mxu0
        %v1311 = vadd.f32 %v652, %v1310
        %1312 = vmatprep.mubr.bf16.mxu0 0
        %1313 = vmatmul.mubr.bf16.gmra.mrb[0].mxu0 %v757
        %v1314 = vpop.f32.mrb[0].mxu0
        %v1315 = vadd.f32 %v648, %v1314
        %v1316 = vpop.f32.mrb[0].mxu0
        %v1317 = vadd.f32 %v652, %v1316
        %v1318 = vpop.f32.mrb[0].mxu0
        %v1319 = vadd.f32 %v648, %v1318
        %v1320 = vpop.f32.mrb[0].mxu0
        %v1321 = vadd.f32 %v652, %v1320
        %1322 = vmatprep.mubr.bf16.mxu0 0
        %1323 = vmatmul.mubr.bf16.gmra.mrb[0].mxu0 %v760
        %v1324 = vpop.f32.mrb[0].mxu0
        %v1325 = vadd.f32 %v648, %v1324
        %v1326 = vpop.f32.mrb[0].mxu0
        %v1327 = vadd.f32 %v652, %v1326
        %v1328 = vpop.f32.mrb[0].mxu0
        %v1329 = vadd.f32 %v648, %v1328
        %v1330 = vpop.f32.mrb[0].mxu0
        %v1331 = vadd.f32 %v652, %v1330
        %1332 = vmatprep.mubr.bf16.mxu0 0
        %1333 = vmatmul.mubr.bf16.gmra.mrb[0].mxu0 %v763
        %v1334 = vpop.f32.mrb[0].mxu0
        %v1335 = vadd.f32 %v648, %v1334
        %v1336 = vpop.f32.mrb[0].mxu0
        %v1337 = vadd.f32 %v652, %v1336
        %v1338 = vpop.f32.mrb[0].mxu0
        %v1339 = vadd.f32 %v648, %v1338
        %v1340 = vpop.f32.mrb[0].mxu0
        %v1341 = vadd.f32 %v652, %v1340
        %1342 = vmatprep.mubr.bf16.mxu0 0
        %1343 = vmatmul.mubr.bf16.gmra.mrb[0].mxu0 %v766
        %v1344 = vpop.f32.mrb[0].mxu0
        %v1345 = vadd.f32 %v648, %v1344
        %v1346 = vpop.f32.mrb[0].mxu0
        %v1347 = vadd.f32 %v652, %v1346
        %v1348 = vpop.f32.mrb[0].mxu0
        %v1349 = vadd.f32 %v648, %v1348
        %v1350 = vpop.f32.mrb[0].mxu0
        %v1351 = vadd.f32 %v652, %v1350
        %1352 = vmatprep.mubr.bf16.mxu0 0
        %1353 = vmatmul.mubr.bf16.gmra.mrb[0].mxu0 %v769
        %v1354 = vpop.f32.mrb[0].mxu0
        %v1355 = vadd.f32 %v648, %v1354
        %v1356 = vpop.f32.mrb[0].mxu0
        %v1357 = vadd.f32 %v652, %v1356
        %v1358 = vpop.f32.mrb[0].mxu0
        %v1359 = vadd.f32 %v648, %v1358
        %v1360 = vpop.f32.mrb[0].mxu0
        %v1361 = vadd.f32 %v652, %v1360
        %1362 = vmatprep.mubr.bf16.mxu0 0
        %1363 = vmatmul.mubr.bf16.gmra.mrb[0].mxu0 %v772
        %v1364 = vpop.f32.mrb[0].mxu0
        %v1365 = vadd.f32 %v648, %v1364
        %v1366 = vpop.f32.mrb[0].mxu0
        %v1367 = vadd.f32 %v652, %v1366
        %v1368 = vpop.f32.mrb[0].mxu0
        %v1369 = vadd.f32 %v648, %v1368
        %v1370 = vpop.f32.mrb[0].mxu0
        %v1371 = vadd.f32 %v652, %v1370
        %1372 = vmatprep.mubr.bf16.mxu0 0
        %1373 = vmatmul.mubr.bf16.gmra.mrb[0].mxu0 %v775
        %v1374 = vpop.f32.mrb[0].mxu0
        %v1375 = vadd.f32 %v648, %v1374
        %v1376 = vpop.f32.mrb[0].mxu0
        %v1377 = vadd.f32 %v652, %v1376
        %v1378 = vpop.f32.mrb[0].mxu0
        %v1379 = vadd.f32 %v648, %v1378
        %v1380 = vpop.f32.mrb[0].mxu0
        %v1381 = vadd.f32 %v652, %v1380
        %1382 = vmatprep.mubr.bf16.mxu0 0
        %1383 = vmatmul.mubr.bf16.gmra.mrb[0].mxu0 %v778
        %v1384 = vpop.f32.mrb[0].mxu0
        %v1385 = vadd.f32 %v648, %v1384
        %v1386 = vpop.f32.mrb[0].mxu0
        %v1387 = vadd.f32 %v652, %v1386
        %v1388 = vpop.f32.mrb[0].mxu0
        %v1389 = vadd.f32 %v648, %v1388
        %v1390 = vpop.f32.mrb[0].mxu0
        %v1391 = vadd.f32 %v652, %v1390
        %1392 = vmatprep.mubr.bf16.mxu0 0
        %1393 = vmatmul.mubr.bf16.gmra.mrb[0].mxu0 %v781
        %v1394 = vpop.f32.mrb[0].mxu0
        %v1395 = vadd.f32 %v648, %v1394
        %v1396 = vpop.f32.mrb[0].mxu0
        %v1397 = vadd.f32 %v652, %v1396
        %v1398 = vpop.f32.mrb[0].mxu0
        %v1399 = vadd.f32 %v648, %v1398
        %v1400 = vpop.f32.mrb[0].mxu0
        %v1401 = vadd.f32 %v652, %v1400
        %1402 = vmatprep.mubr.bf16.mxu0 0
        %1403 = vmatmul.mubr.bf16.gmra.mrb[0].mxu0 %v784
        %v1404 = vpop.f32.mrb[0].mxu0
        %v1405 = vadd.f32 %v648, %v1404
        %v1406 = vpop.f32.mrb[0].mxu0
        %v1407 = vadd.f32 %v652, %v1406
        %v1408 = vpop.f32.mrb[0].mxu0
        %v1409 = vadd.f32 %v648, %v1408
        %v1410 = vpop.f32.mrb[0].mxu0
        %v1411 = vadd.f32 %v652, %v1410
        %1412 = vmatprep.mubr.bf16.mxu0 0
        %1413 = vmatmul.mubr.bf16.gmra.mrb[0].mxu0 %v787
        %v1414 = vpop.f32.mrb[0].mxu0
        %v1415 = vadd.f32 %v648, %v1414
        %v1416 = vpop.f32.mrb[0].mxu0
        %v1417 = vadd.f32 %v652, %v1416
        %v1418 = vpop.f32.mrb[0].mxu0
        %v1419 = vadd.f32 %v648, %v1418
        %v1420 = vpop.f32.mrb[0].mxu0
        %v1421 = vadd.f32 %v652, %v1420
        %1422 = vmatprep.mubr.bf16.mxu0 0
        %1423 = vmatmul.mubr.bf16.gmra.mrb[0].mxu0 %v790
        %v1424 = vpop.f32.mrb[0].mxu0
        %v1425 = vadd.f32 %v648, %v1424
        %v1426 = vpop.f32.mrb[0].mxu0
        %v1427 = vadd.f32 %v652, %v1426
        %v1428 = vpop.f32.mrb[0].mxu0
        %v1429 = vadd.f32 %v648, %v1428
        %v1430 = vpop.f32.mrb[0].mxu0
        %v1431 = vadd.f32 %v652, %v1430
        %1432 = vmatprep.mubr.bf16.mxu0 0
        %1433 = vmatmul.mubr.bf16.gmra.mrb[0].mxu0 %v793
        %v1434 = vpop.f32.mrb[0].mxu0
        %v1435 = vadd.f32 %v648, %v1434
        %v1436 = vpop.f32.mrb[0].mxu0
        %v1437 = vadd.f32 %v652, %v1436
        %v1438 = vpop.f32.mrb[0].mxu0
        %v1439 = vadd.f32 %v648, %v1438
        %v1440 = vpop.f32.mrb[0].mxu0
        %v1441 = vadd.f32 %v652, %v1440
        %1442 = vmatprep.mubr.bf16.mxu0 0
        %1443 = vmatmul.mubr.bf16.gmra.mrb[0].mxu0 %v796
        %v1444 = vpop.f32.mrb[0].mxu0
        %v1445 = vadd.f32 %v648, %v1444
        %v1446 = vpop.f32.mrb[0].mxu0
        %v1447 = vadd.f32 %v652, %v1446
        %v1448 = vpop.f32.mrb[0].mxu0
        %v1449 = vadd.f32 %v648, %v1448
        %v1450 = vpop.f32.mrb[0].mxu0
        %v1451 = vadd.f32 %v652, %v1450
        %1452 = vmatprep.mubr.bf16.mxu0 0
        %1453 = vmatmul.mubr.bf16.gmra.mrb[0].mxu0 %v799
        %v1454 = vpop.f32.mrb[0].mxu0
        %v1455 = vadd.f32 %v648, %v1454
        %v1456 = vpop.f32.mrb[0].mxu0
        %v1457 = vadd.f32 %v652, %v1456
        %v1458 = vpop.f32.mrb[0].mxu0
        %v1459 = vadd.f32 %v648, %v1458
        %v1460 = vpop.f32.mrb[0].mxu0
        %v1461 = vadd.f32 %v652, %v1460
        %1462 = vmatprep.mubr.bf16.mxu0 0
        %1463 = vmatmul.mubr.bf16.gmra.mrb[0].mxu0 %v802
        %v1464 = vpop.f32.mrb[0].mxu0
        %v1465 = vadd.f32 %v648, %v1464
        %v1466 = vpop.f32.mrb[0].mxu0
        %v1467 = vadd.f32 %v652, %v1466
        %v1468 = vpop.f32.mrb[0].mxu0
        %v1469 = vadd.f32 %v648, %v1468
        %v1470 = vpop.f32.mrb[0].mxu0
        %v1471 = vadd.f32 %v652, %v1470
        %1472 = vmatprep.mubr.bf16.mxu0 0
        %1473 = vmatmul.mubr.bf16.gmra.mrb[0].mxu0 %v805
        %v1474 = vpop.f32.mrb[0].mxu0
        %v1475 = vadd.f32 %v648, %v1474
        %v1476 = vpop.f32.mrb[0].mxu0
        %v1477 = vadd.f32 %v652, %v1476
        %v1478 = vpop.f32.mrb[0].mxu0
        %v1479 = vadd.f32 %v648, %v1478
        %v1480 = vpop.f32.mrb[0].mxu0
        %v1481 = vadd.f32 %v652, %v1480
        %1482 = vmatprep.mubr.bf16.mxu0 0
        %1483 = vmatmul.mubr.bf16.gmra.mrb[0].mxu0 %v808
        %v1484 = vpop.f32.mrb[0].mxu0
        %v1485 = vadd.f32 %v648, %v1484
        %v1486 = vpop.f32.mrb[0].mxu0
        %v1487 = vadd.f32 %v652, %v1486
        %v1488 = vpop.f32.mrb[0].mxu0
        %v1489 = vadd.f32 %v648, %v1488
        %v1490 = vpop.f32.mrb[0].mxu0
        %v1491 = vadd.f32 %v652, %v1490
        %1492 = vmatprep.mubr.bf16.mxu0 0
        %1493 = vmatmul.mubr.bf16.gmra.mrb[0].mxu0 %v811
        %v1494 = vpop.f32.mrb[0].mxu0
        %v1495 = vadd.f32 %v648, %v1494
        %v1496 = vpop.f32.mrb[0].mxu0
        %v1497 = vadd.f32 %v652, %v1496
        %v1498 = vpop.f32.mrb[0].mxu0
        %v1499 = vadd.f32 %v648, %v1498
        %v1500 = vpop.f32.mrb[0].mxu0
        %v1501 = vadd.f32 %v652, %v1500
        %1502 = vmatprep.mubr.bf16.mxu0 0
        %1503 = vmatmul.mubr.bf16.gmra.mrb[0].mxu0 %v814
        %v1504 = vpop.f32.mrb[0].mxu0
        %v1505 = vadd.f32 %v648, %v1504
        %v1506 = vpop.f32.mrb[0].mxu0
        %v1507 = vadd.f32 %v652, %v1506
        %v1508 = vpop.f32.mrb[0].mxu0
        %v1509 = vadd.f32 %v648, %v1508
        %v1510 = vpop.f32.mrb[0].mxu0
        %v1511 = vadd.f32 %v652, %v1510
        %1512 = vmatprep.mubr.bf16.mxu0 0
        %1513 = vmatmul.mubr.bf16.gmra.mrb[0].mxu0 %v817
        %v1514 = vpop.f32.mrb[0].mxu0
        %v1515 = vadd.f32 %v648, %v1514
        %v1516 = vpop.f32.mrb[0].mxu0
        %v1517 = vadd.f32 %v652, %v1516
        %v1518 = vpop.f32.mrb[0].mxu0
        %v1519 = vadd.f32 %v648, %v1518
        %v1520 = vpop.f32.mrb[0].mxu0
        %v1521 = vadd.f32 %v652, %v1520
        %1522 = vmatprep.mubr.bf16.mxu0 0
        %1523 = vmatmul.mubr.bf16.gmra.mrb[0].mxu0 %v820
        %v1524 = vpop.f32.mrb[0].mxu0
        %v1525 = vadd.f32 %v648, %v1524
        %v1526 = vpop.f32.mrb[0].mxu0
        %v1527 = vadd.f32 %v652, %v1526
        %v1528 = vpop.f32.mrb[0].mxu0
        %v1529 = vadd.f32 %v648, %v1528
        %v1530 = vpop.f32.mrb[0].mxu0
        %v1531 = vadd.f32 %v652, %v1530
        %1532 = vmatprep.mubr.bf16.mxu0 0
        %1533 = vmatmul.mubr.bf16.gmra.mrb[0].mxu0 %v823
        %v1534 = vpop.f32.mrb[0].mxu0
        %v1535 = vadd.f32 %v648, %v1534
        %v1536 = vpop.f32.mrb[0].mxu0
        %v1537 = vadd.f32 %v652, %v1536
        %v1538 = vpop.f32.mrb[0].mxu0
        %v1539 = vadd.f32 %v648, %v1538
        %v1540 = vpop.f32.mrb[0].mxu0
        %v1541 = vadd.f32 %v652, %v1540
        %1542 = vmatprep.mubr.bf16.mxu0 0
        %1543 = vmatmul.mubr.bf16.gmra.mrb[0].mxu0 %v826
        %v1544 = vpop.f32.mrb[0].mxu0
        %v1545 = vadd.f32 %v648, %v1544
        %v1546 = vpop.f32.mrb[0].mxu0
        %v1547 = vadd.f32 %v652, %v1546
        %v1548 = vpop.f32.mrb[0].mxu0
        %v1549 = vadd.f32 %v648, %v1548
        %v1550 = vpop.f32.mrb[0].mxu0
        %v1551 = vadd.f32 %v652, %v1550
        %1552 = vmatprep.mubr.bf16.mxu0 0
        %1553 = vmatmul.mubr.bf16.gmra.mrb[0].mxu0 %v829
        %v1554 = vpop.f32.mrb[0].mxu0
        %v1555 = vadd.f32 %v648, %v1554
        %v1556 = vpop.f32.mrb[0].mxu0
        %v1557 = vadd.f32 %v652, %v1556
        %v1558 = vpop.f32.mrb[0].mxu0
        %v1559 = vadd.f32 %v648, %v1558
        %v1560 = vpop.f32.mrb[0].mxu0
        %v1561 = vadd.f32 %v652, %v1560
        %1562 = vmatprep.mubr.bf16.mxu0 0
        %1563 = vmatmul.mubr.bf16.gmra.mrb[0].mxu0 %v832
        %v1564 = vpop.f32.mrb[0].mxu0
        %v1565 = vadd.f32 %v648, %v1564
        %v1566 = vpop.f32.mrb[0].mxu0
        %v1567 = vadd.f32 %v652, %v1566
        %v1568 = vpop.f32.mrb[0].mxu0
        %v1569 = vadd.f32 %v648, %v1568
        %v1570 = vpop.f32.mrb[0].mxu0
        %v1571 = vadd.f32 %v652, %v1570
        %1572 = vmatprep.mubr.bf16.mxu0 0
        %1573 = vmatmul.mubr.bf16.gmra.mrb[0].mxu0 %v835
        %v1574 = vpop.f32.mrb[0].mxu0
        %v1575 = vadd.f32 %v648, %v1574
        %v1576 = vpop.f32.mrb[0].mxu0
        %v1577 = vadd.f32 %v652, %v1576
        %v1578 = vpop.f32.mrb[0].mxu0
        %v1579 = vadd.f32 %v648, %v1578
        %v1580 = vpop.f32.mrb[0].mxu0
        %v1581 = vadd.f32 %v652, %v1580
        %1582 = vmatprep.mubr.bf16.mxu0 0
        %1583 = vmatmul.mubr.bf16.gmra.mrb[0].mxu0 %v838
        %v1584 = vpop.f32.mrb[0].mxu0
        %v1585 = vadd.f32 %v648, %v1584
        %v1586 = vpop.f32.mrb[0].mxu0
        %v1587 = vadd.f32 %v652, %v1586
        %v1588 = vpop.f32.mrb[0].mxu0
        %v1589 = vadd.f32 %v648, %v1588
        %v1590 = vpop.f32.mrb[0].mxu0
        %v1591 = vadd.f32 %v652, %v1590
        %1592 = vmatprep.mubr.bf16.mxu0 0
        %1593 = vmatmul.mubr.bf16.gmra.mrb[0].mxu0 %v841
        %v1594 = vpop.f32.mrb[0].mxu0
        %v1595 = vadd.f32 %v648, %v1594
        %v1596 = vpop.f32.mrb[0].mxu0
        %v1597 = vadd.f32 %v652, %v1596
        %v1598 = vpop.f32.mrb[0].mxu0
        %v1599 = vadd.f32 %v648, %v1598
        %v1600 = vpop.f32.mrb[0].mxu0
        %v1601 = vadd.f32 %v652, %v1600
        %1602 = vmatprep.mubr.bf16.mxu0 0
        %1603 = vmatmul.mubr.bf16.gmra.mrb[0].mxu0 %v844
        %v1604 = vpop.f32.mrb[0].mxu0
        %v1605 = vadd.f32 %v648, %v1604
        %v1606 = vpop.f32.mrb[0].mxu0
        %v1607 = vadd.f32 %v652, %v1606
        %v1608 = vpop.f32.mrb[0].mxu0
        %v1609 = vadd.f32 %v648, %v1608
        %v1610 = vpop.f32.mrb[0].mxu0
        %v1611 = vadd.f32 %v652, %v1610
        %1612 = vmatprep.mubr.bf16.mxu0 0
        %1613 = vmatmul.mubr.bf16.gmra.mrb[0].mxu0 %v847
        %v1614 = vpop.f32.mrb[0].mxu0
        %v1615 = vadd.f32 %v648, %v1614
        %v1616 = vpop.f32.mrb[0].mxu0
        %v1617 = vadd.f32 %v652, %v1616
        %v1618 = vpop.f32.mrb[0].mxu0
        %v1619 = vadd.f32 %v648, %v1618
        %v1620 = vpop.f32.mrb[0].mxu0
        %v1621 = vadd.f32 %v652, %v1620
        %1622 = vmatprep.mubr.bf16.mxu0 0
        %1623 = vmatmul.mubr.bf16.gmra.mrb[0].mxu0 %v850
        %v1624 = vpop.f32.mrb[0].mxu0
        %v1625 = vadd.f32 %v648, %v1624
        %v1626 = vpop.f32.mrb[0].mxu0
        %v1627 = vadd.f32 %v652, %v1626
        %v1628 = vpop.f32.mrb[0].mxu0
        %v1629 = vadd.f32 %v648, %v1628
        %v1630 = vpop.f32.mrb[0].mxu0
        %v1631 = vadd.f32 %v652, %v1630
        %1632 = vmatprep.mubr.bf16.mxu0 0
        %1633 = vmatmul.mubr.bf16.gmra.mrb[0].mxu0 %v853
        %v1634 = vpop.f32.mrb[0].mxu0
        %v1635 = vadd.f32 %v648, %v1634
        %v1636 = vpop.f32.mrb[0].mxu0
        %v1637 = vadd.f32 %v652, %v1636
        %v1638 = vpop.f32.mrb[0].mxu0
        %v1639 = vadd.f32 %v648, %v1638
        %v1640 = vpop.f32.mrb[0].mxu0
        %v1641 = vadd.f32 %v652, %v1640
        %1642 = vmatprep.mubr.bf16.mxu0 0
        %1643 = vmatmul.mubr.bf16.gmra.mrb[0].mxu0 %v856
        %v1644 = vpop.f32.mrb[0].mxu0
        %v1645 = vadd.f32 %v648, %v1644
        %v1646 = vpop.f32.mrb[0].mxu0
        %v1647 = vadd.f32 %v652, %v1646
        %v1648 = vpop.f32.mrb[0].mxu0
        %v1649 = vadd.f32 %v648, %v1648
        %v1650 = vpop.f32.mrb[0].mxu0
        %v1651 = vadd.f32 %v652, %v1650
        %1652 = vmatprep.mubr.bf16.mxu0 0
        %1653 = vmatmul.mubr.bf16.gmra.mrb[0].mxu0 %v859
        %v1654 = vpop.f32.mrb[0].mxu0
        %v1655 = vadd.f32 %v648, %v1654
        %v1656 = vpop.f32.mrb[0].mxu0
        %v1657 = vadd.f32 %v652, %v1656
        %v1658 = vpop.f32.mrb[0].mxu0
        %v1659 = vadd.f32 %v648, %v1658
        %v1660 = vpop.f32.mrb[0].mxu0
        %v1661 = vadd.f32 %v652, %v1660
        %1662 = vmatprep.mubr.bf16.mxu0 0
        %1663 = vmatmul.mubr.bf16.gmra.mrb[0].mxu0 %v862
        %v1664 = vpop.f32.mrb[0].mxu0
        %v1665 = vadd.f32 %v648, %v1664
        %v1666 = vpop.f32.mrb[0].mxu0
        %v1667 = vadd.f32 %v652, %v1666
        %v1668 = vpop.f32.mrb[0].mxu0
        %v1669 = vadd.f32 %v648, %v1668
        %v1670 = vpop.f32.mrb[0].mxu0
        %v1671 = vadd.f32 %v652, %v1670
        %1672 = vmatprep.mubr.bf16.mxu0 0
        %1673 = vmatmul.mubr.bf16.gmra.mrb[0].mxu0 %v865
        %v1674 = vpop.f32.mrb[0].mxu0
        %v1675 = vadd.f32 %v648, %v1674
        %v1676 = vpop.f32.mrb[0].mxu0
        %v1677 = vadd.f32 %v652, %v1676
        %v1678 = vpop.f32.mrb[0].mxu0
        %v1679 = vadd.f32 %v648, %v1678
        %v1680 = vpop.f32.mrb[0].mxu0
        %v1681 = vadd.f32 %v652, %v1680
        %1682 = vmatprep.mubr.bf16.mxu0 0
        %1683 = vmatmul.mubr.bf16.gmra.mrb[0].mxu0 %v868
        %v1684 = vpop.f32.mrb[0].mxu0
        %v1685 = vadd.f32 %v648, %v1684
        %v1686 = vpop.f32.mrb[0].mxu0
        %v1687 = vadd.f32 %v652, %v1686
        %v1688 = vpop.f32.mrb[0].mxu0
        %v1689 = vadd.f32 %v648, %v1688
        %v1690 = vpop.f32.mrb[0].mxu0
        %v1691 = vadd.f32 %v652, %v1690
        %1692 = vmatprep.mubr.bf16.mxu0 0
        %1693 = vmatmul.mubr.bf16.gmra.mrb[0].mxu0 %v871
        %v1694 = vpop.f32.mrb[0].mxu0
        %v1695 = vadd.f32 %v648, %v1694
        %v1696 = vpop.f32.mrb[0].mxu0
        %v1697 = vadd.f32 %v652, %v1696
        %v1698 = vpop.f32.mrb[0].mxu0
        %v1699 = vadd.f32 %v648, %v1698
        %v1700 = vpop.f32.mrb[0].mxu0
        %v1701 = vadd.f32 %v652, %v1700
        %1702 = vmatprep.mubr.bf16.mxu0 0
        %1703 = vmatmul.mubr.bf16.gmra.mrb[0].mxu0 %v874
        %v1704 = vpop.f32.mrb[0].mxu0
        %v1705 = vadd.f32 %v648, %v1704
        %v1706 = vpop.f32.mrb[0].mxu0
        %v1707 = vadd.f32 %v652, %v1706
        %v1708 = vpop.f32.mrb[0].mxu0
        %v1709 = vadd.f32 %v648, %v1708
        %v1710 = vpop.f32.mrb[0].mxu0
        %v1711 = vadd.f32 %v652, %v1710
        %1712 = vmatprep.mubr.bf16.mxu0 0
        %1713 = vmatmul.mubr.bf16.gmra.mrb[0].mxu0 %v877
        %v1714 = vpop.f32.mrb[0].mxu0
        %v1715 = vadd.f32 %v648, %v1714
        %v1716 = vpop.f32.mrb[0].mxu0
        %v1717 = vadd.f32 %v652, %v1716
        %v1718 = vpop.f32.mrb[0].mxu0
        %v1719 = vadd.f32 %v648, %v1718
        %v1720 = vpop.f32.mrb[0].mxu0
        %v1721 = vadd.f32 %v652, %v1720
        %1722 = vmatprep.mubr.bf16.mxu0 0
        %1723 = vmatmul.mubr.bf16.gmra.mrb[0].mxu0 %v880
        %v1724 = vpop.f32.mrb[0].mxu0
        %v1725 = vadd.f32 %v648, %v1724
        %v1726 = vpop.f32.mrb[0].mxu0
        %v1727 = vadd.f32 %v652, %v1726
        %v1728 = vpop.f32.mrb[0].mxu0
        %v1729 = vadd.f32 %v648, %v1728
        %v1730 = vpop.f32.mrb[0].mxu0
        %v1731 = vadd.f32 %v652, %v1730
        %1732 = vmatprep.mubr.bf16.mxu0 0
        %1733 = vmatmul.mubr.bf16.gmra.mrb[0].mxu0 %v883
        %v1734 = vpop.f32.mrb[0].mxu0
        %v1735 = vadd.f32 %v648, %v1734
        %v1736 = vpop.f32.mrb[0].mxu0
        %v1737 = vadd.f32 %v652, %v1736
        %v1738 = vpop.f32.mrb[0].mxu0
        %v1739 = vadd.f32 %v648, %v1738
        %v1740 = vpop.f32.mrb[0].mxu0
        %v1741 = vadd.f32 %v652, %v1740
        %1742 = vmatprep.mubr.bf16.mxu0 0
        %1743 = vmatmul.mubr.bf16.gmra.mrb[0].mxu0 %v886
        %v1744 = vpop.f32.mrb[0].mxu0
        %v1745 = vadd.f32 %v648, %v1744
        %v1746 = vpop.f32.mrb[0].mxu0
        %v1747 = vadd.f32 %v652, %v1746
        %v1748 = vpop.f32.mrb[0].mxu0
        %v1749 = vadd.f32 %v648, %v1748
        %v1750 = vpop.f32.mrb[0].mxu0
        %v1751 = vadd.f32 %v652, %v1750
        %1752 = vmatprep.mubr.bf16.mxu0 0
        %1753 = vmatmul.mubr.bf16.gmra.mrb[0].mxu0 %v889
        %v1754 = vpop.f32.mrb[0].mxu0
        %v1755 = vadd.f32 %v648, %v1754
        %v1756 = vpop.f32.mrb[0].mxu0
        %v1757 = vadd.f32 %v652, %v1756
        %v1758 = vpop.f32.mrb[0].mxu0
        %v1759 = vadd.f32 %v648, %v1758
        %v1760 = vpop.f32.mrb[0].mxu0
        %v1761 = vadd.f32 %v652, %v1760
        %1762 = vmatprep.mubr.bf16.mxu0 0
        %1763 = vmatmul.mubr.bf16.gmra.mrb[0].mxu0 %v892
        %v1764 = vpop.f32.mrb[0].mxu0
        %v1765 = vadd.f32 %v648, %v1764
        %v1766 = vpop.f32.mrb[0].mxu0
        %v1767 = vadd.f32 %v652, %v1766
        %v1768 = vpop.f32.mrb[0].mxu0
        %v1769 = vadd.f32 %v648, %v1768
        %v1770 = vpop.f32.mrb[0].mxu0
        %v1771 = vadd.f32 %v652, %v1770
        %1772 = vmatprep.mubr.bf16.mxu0 0
        %1773 = vmatmul.mubr.bf16.gmra.mrb[0].mxu0 %v895
        %v1774 = vpop.f32.mrb[0].mxu0
        %v1775 = vadd.f32 %v648, %v1774
        %v1776 = vpop.f32.mrb[0].mxu0
        %v1777 = vadd.f32 %v652, %v1776
        %v1778 = vpop.f32.mrb[0].mxu0
        %v1779 = vadd.f32 %v648, %v1778
        %v1780 = vpop.f32.mrb[0].mxu0
        %v1781 = vadd.f32 %v652, %v1780
        %1782 = vmatprep.mubr.bf16.mxu0 0
        %1783 = vmatmul.mubr.bf16.gmra.mrb[0].mxu0 %v898
        %v1784 = vpop.f32.mrb[0].mxu0
        %v1785 = vadd.f32 %v648, %v1784
        %v1786 = vpop.f32.mrb[0].mxu0
        %v1787 = vadd.f32 %v652, %v1786
        %v1788 = vpop.f32.mrb[0].mxu0
        %v1789 = vadd.f32 %v648, %v1788
        %v1790 = vpop.f32.mrb[0].mxu0
        %v1791 = vadd.f32 %v652, %v1790
        %1792 = vmatprep.mubr.bf16.mxu0 0
        %1793 = vmatmul.mubr.bf16.gmra.mrb[0].mxu0 %v901
        %v1794 = vpop.f32.mrb[0].mxu0
        %v1795 = vadd.f32 %v648, %v1794
        %v1796 = vpop.f32.mrb[0].mxu0
        %v1797 = vadd.f32 %v652, %v1796
        %v1798 = vpop.f32.mrb[0].mxu0
        %v1799 = vadd.f32 %v648, %v1798
        %v1800 = vpop.f32.mrb[0].mxu0
        %v1801 = vadd.f32 %v652, %v1800
        %1802 = vmatprep.mubr.bf16.mxu0 0
        %1803 = vmatmul.mubr.bf16.gmra.mrb[0].mxu0 %v904
        %v1804 = vpop.f32.mrb[0].mxu0
        %v1805 = vadd.f32 %v648, %v1804
        %v1806 = vpop.f32.mrb[0].mxu0
        %v1807 = vadd.f32 %v652, %v1806
        %v1808 = vpop.f32.mrb[0].mxu0
        %v1809 = vadd.f32 %v648, %v1808
        %v1810 = vpop.f32.mrb[0].mxu0
        %v1811 = vadd.f32 %v652, %v1810
        %1812 = vmatprep.mubr.bf16.mxu0 0
        %1813 = vmatmul.mubr.bf16.gmra.mrb[0].mxu0 %v907
        %v1814 = vpop.f32.mrb[0].mxu0
        %v1815 = vadd.f32 %v648, %v1814
        %v1816 = vpop.f32.mrb[0].mxu0
        %v1817 = vadd.f32 %v652, %v1816
        %v1818 = vpop.f32.mrb[0].mxu0
        %v1819 = vadd.f32 %v648, %v1818
        %v1820 = vpop.f32.mrb[0].mxu0
        %v1821 = vadd.f32 %v652, %v1820
        %1822 = vmatprep.mubr.bf16.mxu0 0
        %1823 = vmatmul.mubr.bf16.gmra.mrb[0].mxu0 %v910
        %v1824 = vpop.f32.mrb[0].mxu0
        %v1825 = vadd.f32 %v648, %v1824
        %v1826 = vpop.f32.mrb[0].mxu0
        %v1827 = vadd.f32 %v652, %v1826
        %v1828 = vpop.f32.mrb[0].mxu0
        %v1829 = vadd.f32 %v648, %v1828
        %v1830 = vpop.f32.mrb[0].mxu0
        %v1831 = vadd.f32 %v652, %v1830
        %1832 = vmatprep.mubr.bf16.mxu0 0
        %1833 = vmatmul.mubr.bf16.gmra.mrb[0].mxu0 %v913
        %v1834 = vpop.f32.mrb[0].mxu0
        %v1835 = vadd.f32 %v648, %v1834
        %v1836 = vpop.f32.mrb[0].mxu0
        %v1837 = vadd.f32 %v652, %v1836
        %v1838 = vpop.f32.mrb[0].mxu0
        %v1839 = vadd.f32 %v648, %v1838
        %v1840 = vpop.f32.mrb[0].mxu0
        %v1841 = vadd.f32 %v652, %v1840
        %1842 = vmatprep.mubr.bf16.mxu0 0
        %1843 = vmatmul.mubr.bf16.gmra.mrb[0].mxu0 %v916
        %v1844 = vpop.f32.mrb[0].mxu0
        %v1845 = vadd.f32 %v648, %v1844
        %v1846 = vpop.f32.mrb[0].mxu0
        %v1847 = vadd.f32 %v652, %v1846
        %v1848 = vpop.f32.mrb[0].mxu0
        %v1849 = vadd.f32 %v648, %v1848
        %v1850 = vpop.f32.mrb[0].mxu0
        %v1851 = vadd.f32 %v652, %v1850
        %1852 = vmatprep.mubr.bf16.mxu0 0
        %1853 = vmatmul.mubr.bf16.gmra.mrb[0].mxu0 %v919
        %v1854 = vpop.f32.mrb[0].mxu0
        %v1855 = vadd.f32 %v648, %v1854
        %v1856 = vpop.f32.mrb[0].mxu0
        %v1857 = vadd.f32 %v652, %v1856
        %v1858 = vpop.f32.mrb[0].mxu0
        %v1859 = vadd.f32 %v648, %v1858
        %v1860 = vpop.f32.mrb[0].mxu0
        %v1861 = vadd.f32 %v652, %v1860
        %1862 = vmatprep.mubr.bf16.mxu0 0
        %1863 = vmatmul.mubr.bf16.gmra.mrb[0].mxu0 %v922
        %v1864 = vpop.f32.mrb[0].mxu0
        %v1865 = vadd.f32 %v648, %v1864
        %v1866 = vpop.f32.mrb[0].mxu0
        %v1867 = vadd.f32 %v652, %v1866
        %v1868 = vpop.f32.mrb[0].mxu0
        %v1869 = vadd.f32 %v648, %v1868
        %v1870 = vpop.f32.mrb[0].mxu0
        %v1871 = vadd.f32 %v652, %v1870
        %1872 = vmatprep.mubr.bf16.mxu0 0
        %1873 = vmatmul.mubr.bf16.gmra.mrb[0].mxu0 %v925
        %v1874 = vpop.f32.mrb[0].mxu0
        %v1875 = vadd.f32 %v648, %v1874
        %v1876 = vpop.f32.mrb[0].mxu0
        %v1877 = vadd.f32 %v652, %v1876
        %v1878 = vpop.f32.mrb[0].mxu0
        %v1879 = vadd.f32 %v648, %v1878
        %v1880 = vpop.f32.mrb[0].mxu0
        %v1881 = vadd.f32 %v652, %v1880
        %1882 = vmatprep.mubr.bf16.mxu0 0
        %1883 = vmatmul.mubr.bf16.gmra.mrb[0].mxu0 %v928
        %v1884 = vpop.f32.mrb[0].mxu0
        %v1885 = vadd.f32 %v648, %v1884
        %v1886 = vpop.f32.mrb[0].mxu0
        %v1887 = vadd.f32 %v652, %v1886
        %v1888 = vpop.f32.mrb[0].mxu0
        %v1889 = vadd.f32 %v648, %v1888
        %v1890 = vpop.f32.mrb[0].mxu0
        %v1891 = vadd.f32 %v652, %v1890
        %1892 = vmatprep.mubr.bf16.mxu0 0
        %1893 = vmatmul.mubr.bf16.gmra.mrb[0].mxu0 %v931
        %v1894 = vpop.f32.mrb[0].mxu0
        %v1895 = vadd.f32 %v648, %v1894
        %v1896 = vpop.f32.mrb[0].mxu0
        %v1897 = vadd.f32 %v652, %v1896
        %v1898 = vpop.f32.mrb[0].mxu0
        %v1899 = vadd.f32 %v648, %v1898
        %v1900 = vpop.f32.mrb[0].mxu0
        %v1901 = vadd.f32 %v652, %v1900
        %1902 = vmatprep.mubr.bf16.mxu0 0
        %1903 = vmatmul.mubr.bf16.gmra.mrb[0].mxu0 %v934
        %v1904 = vpop.f32.mrb[0].mxu0
        %v1905 = vadd.f32 %v648, %v1904
        %v1906 = vpop.f32.mrb[0].mxu0
        %v1907 = vadd.f32 %v652, %v1906
        %v1908 = vpop.f32.mrb[0].mxu0
        %v1909 = vadd.f32 %v648, %v1908
        %v1910 = vpop.f32.mrb[0].mxu0
        %v1911 = vadd.f32 %v652, %v1910
        %1912 = vmatprep.mubr.bf16.mxu0 0
        %1913 = vmatmul.mubr.bf16.gmra.mrb[0].mxu0 %v937
        %v1914 = vpop.f32.mrb[0].mxu0
        %v1915 = vadd.f32 %v648, %v1914
        %v1916 = vpop.f32.mrb[0].mxu0
        %v1917 = vadd.f32 %v652, %v1916
        %v1918 = vpop.f32.mrb[0].mxu0
        %v1919 = vadd.f32 %v648, %v1918
        %v1920 = vpop.f32.mrb[0].mxu0
        %v1921 = vadd.f32 %v652, %v1920
        %1922 = vmatprep.mubr.bf16.mxu0 0
        %1923 = vmatmul.mubr.bf16.gmra.mrb[0].mxu0 %v940
        %v1924 = vpop.f32.mrb[0].mxu0
        %v1925 = vadd.f32 %v648, %v1924
        %v1926 = vpop.f32.mrb[0].mxu0
        %v1927 = vadd.f32 %v652, %v1926
        %v1928 = vpop.f32.mrb[0].mxu0
        %v1929 = vadd.f32 %v648, %v1928
        %v1930 = vpop.f32.mrb[0].mxu0
        %v1931 = vadd.f32 %v652, %v1930
        %1932 = vmatprep.mubr.bf16.mxu0 0
        %1933 = vmatmul.mubr.bf16.gmra.mrb[0].mxu0 %v943
        %v1934 = vpop.f32.mrb[0].mxu0
        %v1935 = vadd.f32 %v648, %v1934
        %v1936 = vpop.f32.mrb[0].mxu0
        %v1937 = vadd.f32 %v652, %v1936
        %v1938 = vpop.f32.mrb[0].mxu0
        %v1939 = vadd.f32 %v648, %v1938
        %v1940 = vpop.f32.mrb[0].mxu0
        %v1941 = vadd.f32 %v652, %v1940
        %1942 = vmatprep.mubr.bf16.mxu0 0
        %1943 = vmatmul.mubr.bf16.gmra.mrb[0].mxu0 %v946
        %v1944 = vpop.f32.mrb[0].mxu0
        %v1945 = vadd.f32 %v648, %v1944
        %v1946 = vpop.f32.mrb[0].mxu0
        %v1947 = vadd.f32 %v652, %v1946
        %v1948 = vpop.f32.mrb[0].mxu0
        %v1949 = vadd.f32 %v648, %v1948
        %v1950 = vpop.f32.mrb[0].mxu0
        %v1951 = vadd.f32 %v652, %v1950
        %1952 = vmatprep.mubr.bf16.mxu0 0
        %1953 = vmatmul.mubr.bf16.gmra.mrb[0].mxu0 %v949
        %v1954 = vpop.f32.mrb[0].mxu0
        %v1955 = vadd.f32 %v648, %v1954
        %v1956 = vpop.f32.mrb[0].mxu0
        %v1957 = vadd.f32 %v652, %v1956
        %v1958 = vpop.f32.mrb[0].mxu0
        %v1959 = vadd.f32 %v648, %v1958
        %v1960 = vpop.f32.mrb[0].mxu0
        %v1961 = vadd.f32 %v652, %v1960
        %1962 = vmatprep.mubr.bf16.mxu0 0
        %1963 = vmatmul.mubr.bf16.gmra.mrb[0].mxu0 %v952
        %v1964 = vpop.f32.mrb[0].mxu0
        %v1965 = vadd.f32 %v648, %v1964
        %v1966 = vpop.f32.mrb[0].mxu0
        %v1967 = vadd.f32 %v652, %v1966
        %v1968 = vpop.f32.mrb[0].mxu0
        %v1969 = vadd.f32 %v648, %v1968
        %v1970 = vpop.f32.mrb[0].mxu0
        %v1971 = vadd.f32 %v652, %v1970
        %1972 = vmatprep.mubr.bf16.mxu0 0
        %1973 = vmatmul.mubr.bf16.gmra.mrb[0].mxu0 %v955
        %v1974 = vpop.f32.mrb[0].mxu0
        %v1975 = vadd.f32 %v648, %v1974
        %v1976 = vpop.f32.mrb[0].mxu0
        %v1977 = vadd.f32 %v652, %v1976
        %v1978 = vpop.f32.mrb[0].mxu0
        %v1979 = vadd.f32 %v648, %v1978
        %v1980 = vpop.f32.mrb[0].mxu0
        %v1981 = vadd.f32 %v652, %v1980
        %1982 = vmatprep.mubr.bf16.mxu0 0
        %1983 = vmatmul.mubr.bf16.gmra.mrb[0].mxu0 %v958
        %v1984 = vpop.f32.mrb[0].mxu0
        %v1985 = vadd.f32 %v648, %v1984
        %v1986 = vpop.f32.mrb[0].mxu0
        %v1987 = vadd.f32 %v652, %v1986
        %v1988 = vpop.f32.mrb[0].mxu0
        %v1989 = vadd.f32 %v648, %v1988
        %v1990 = vpop.f32.mrb[0].mxu0
        %v1991 = vadd.f32 %v652, %v1990
        %1992 = vmatprep.mubr.bf16.mxu0 0
        %1993 = vmatmul.mubr.bf16.gmra.mrb[0].mxu0 %v961
        %v1994 = vpop.f32.mrb[0].mxu0
        %v1995 = vadd.f32 %v648, %v1994
        %v1996 = vpop.f32.mrb[0].mxu0
        %v1997 = vadd.f32 %v652, %v1996
        %v1998 = vpop.f32.mrb[0].mxu0
        %v1999 = vadd.f32 %v648, %v1998
        %v2000 = vpop.f32.mrb[0].mxu0
        %v2001 = vadd.f32 %v652, %v2000
        %2002 = vmatprep.mubr.bf16.mxu0 0
        %2003 = vmatmul.mubr.bf16.gmra.mrb[0].mxu0 %v964
        %v2004 = vpop.f32.mrb[0].mxu0
        %v2005 = vadd.f32 %v648, %v2004
        %v2006 = vpop.f32.mrb[0].mxu0
        %v2007 = vadd.f32 %v652, %v2006
        %v2008 = vpop.f32.mrb[0].mxu0
        %v2009 = vadd.f32 %v648, %v2008
        %v2010 = vpop.f32.mrb[0].mxu0
        %v2011 = vadd.f32 %v652, %v2010
        %2012 = vmatprep.mubr.bf16.mxu0 0
        %2013 = vmatmul.mubr.bf16.gmra.mrb[0].mxu0 %v967
        %v2014 = vpop.f32.mrb[0].mxu0
        %v2015 = vadd.f32 %v648, %v2014
        %v2016 = vpop.f32.mrb[0].mxu0
        %v2017 = vadd.f32 %v652, %v2016
        %v2018 = vpop.f32.mrb[0].mxu0
        %v2019 = vadd.f32 %v648, %v2018
        %v2020 = vpop.f32.mrb[0].mxu0
        %v2021 = vadd.f32 %v652, %v2020
        %2022 = vmatprep.mubr.bf16.mxu0 0
        %2023 = vmatmul.mubr.bf16.gmra.mrb[0].mxu0 %v970
        %v2024 = vpop.f32.mrb[0].mxu0
        %v2025 = vadd.f32 %v648, %v2024
        %v2026 = vpop.f32.mrb[0].mxu0
        %v2027 = vadd.f32 %v652, %v2026
        %v2028 = vpop.f32.mrb[0].mxu0
        %v2029 = vadd.f32 %v648, %v2028
        %v2030 = vpop.f32.mrb[0].mxu0
        %v2031 = vadd.f32 %v652, %v2030
        %2032 = vmatprep.mubr.bf16.mxu0 0
        %2033 = vmatmul.mubr.bf16.gmra.mrb[0].mxu0 %v973
        %v2034 = vpop.f32.mrb[0].mxu0
        %v2035 = vadd.f32 %v648, %v2034
        %v2036 = vpop.f32.mrb[0].mxu0
        %v2037 = vadd.f32 %v652, %v2036
        %v2038 = vpop.f32.mrb[0].mxu0
        %v2039 = vadd.f32 %v648, %v2038
        %v2040 = vpop.f32.mrb[0].mxu0
        %v2041 = vadd.f32 %v652, %v2040
        %2042 = vmatprep.mubr.bf16.mxu0 0
        %2043 = vmatmul.mubr.bf16.gmra.mrb[0].mxu0 %v976
        %v2044 = vpop.f32.mrb[0].mxu0
        %v2045 = vadd.f32 %v648, %v2044
        %v2046 = vpop.f32.mrb[0].mxu0
        %v2047 = vadd.f32 %v652, %v2046
        %v2048 = vpop.f32.mrb[0].mxu0
        %v2049 = vadd.f32 %v648, %v2048
        %v2050 = vpop.f32.mrb[0].mxu0
        %v2051 = vadd.f32 %v652, %v2050
        %2052 = vmatprep.mubr.bf16.mxu0 0
        %2053 = vmatmul.mubr.bf16.gmra.mrb[0].mxu0 %v979
        %v2054 = vpop.f32.mrb[0].mxu0
        %v2055 = vadd.f32 %v648, %v2054
        %v2056 = vpop.f32.mrb[0].mxu0
        %v2057 = vadd.f32 %v652, %v2056
        %v2058 = vpop.f32.mrb[0].mxu0
        %v2059 = vadd.f32 %v648, %v2058
        %v2060 = vpop.f32.mrb[0].mxu0
        %v2061 = vadd.f32 %v652, %v2060
        %2062 = vmatprep.mubr.bf16.mxu0 0
        %2063 = vmatmul.mubr.bf16.gmra.mrb[0].mxu0 %v982
        %v2064 = vpop.f32.mrb[0].mxu0
        %v2065 = vadd.f32 %v648, %v2064
        %v2066 = vpop.f32.mrb[0].mxu0
        %v2067 = vadd.f32 %v652, %v2066
        %v2068 = vpop.f32.mrb[0].mxu0
        %v2069 = vadd.f32 %v648, %v2068
        %v2070 = vpop.f32.mrb[0].mxu0
        %v2071 = vadd.f32 %v652, %v2070
        %2072 = vmatprep.mubr.bf16.mxu0 0
        %2073 = vmatmul.mubr.bf16.gmra.mrb[0].mxu0 %v985
        %v2074 = vpop.f32.mrb[0].mxu0
        %v2075 = vadd.f32 %v648, %v2074
        %v2076 = vpop.f32.mrb[0].mxu0
        %v2077 = vadd.f32 %v652, %v2076
        %v2078 = vpop.f32.mrb[0].mxu0
        %v2079 = vadd.f32 %v648, %v2078
        %v2080 = vpop.f32.mrb[0].mxu0
        %v2081 = vadd.f32 %v652, %v2080
        %2082 = vmatprep.mubr.bf16.mxu0 0
        %2083 = vmatmul.mubr.bf16.gmra.mrb[0].mxu0 %v988
        %v2084 = vpop.f32.mrb[0].mxu0
        %v2085 = vadd.f32 %v648, %v2084
        %v2086 = vpop.f32.mrb[0].mxu0
        %v2087 = vadd.f32 %v652, %v2086
        %v2088 = vpop.f32.mrb[0].mxu0
        %v2089 = vadd.f32 %v648, %v2088
        %v2090 = vpop.f32.mrb[0].mxu0
        %v2091 = vadd.f32 %v652, %v2090
        %2092 = vmatprep.mubr.bf16.mxu0 0
        %2093 = vmatmul.mubr.bf16.gmra.mrb[0].mxu0 %v991
        %v2094 = vpop.f32.mrb[0].mxu0
        %v2095 = vadd.f32 %v648, %v2094
        %v2096 = vpop.f32.mrb[0].mxu0
        %v2097 = vadd.f32 %v652, %v2096
        %v2098 = vpop.f32.mrb[0].mxu0
        %v2099 = vadd.f32 %v648, %v2098
        %v2100 = vpop.f32.mrb[0].mxu0
        %v2101 = vadd.f32 %v652, %v2100
        %2102 = vmatprep.mubr.bf16.mxu0 0
        %2103 = vmatmul.mubr.bf16.gmra.mrb[0].mxu0 %v994
        %v2104 = vpop.f32.mrb[0].mxu0
        %v2105 = vadd.f32 %v648, %v2104
        %v2106 = vpop.f32.mrb[0].mxu0
        %v2107 = vadd.f32 %v652, %v2106
        %v2108 = vpop.f32.mrb[0].mxu0
        %v2109 = vadd.f32 %v648, %v2108
        %v2110 = vpop.f32.mrb[0].mxu0
        %v2111 = vadd.f32 %v652, %v2110
        %2112 = vmatprep.mubr.bf16.mxu0 0
        %2113 = vmatmul.mubr.bf16.gmra.mrb[0].mxu0 %v997
        %v2114 = vpop.f32.mrb[0].mxu0
        %v2115 = vadd.f32 %v648, %v2114
        %v2116 = vpop.f32.mrb[0].mxu0
        %v2117 = vadd.f32 %v652, %v2116
        %v2118 = vpop.f32.mrb[0].mxu0
        %v2119 = vadd.f32 %v648, %v2118
        %v2120 = vpop.f32.mrb[0].mxu0
        %v2121 = vadd.f32 %v652, %v2120
        %2122 = vmatprep.mubr.bf16.mxu0 0
        %2123 = vmatmul.mubr.bf16.gmra.mrb[0].mxu0 %v1000
        %v2124 = vpop.f32.mrb[0].mxu0
        %v2125 = vadd.f32 %v648, %v2124
        %v2126 = vpop.f32.mrb[0].mxu0
        %v2127 = vadd.f32 %v652, %v2126
        %v2128 = vpop.f32.mrb[0].mxu0
        %v2129 = vadd.f32 %v648, %v2128
        %v2130 = vpop.f32.mrb[0].mxu0
        %v2131 = vadd.f32 %v652, %v2130
        %2132 = vmatprep.mubr.bf16.mxu0 0
        %2133 = vmatmul.mubr.bf16.gmra.mrb[0].mxu0 %v1003
        %v2134 = vpop.f32.mrb[0].mxu0
        %v2135 = vadd.f32 %v648, %v2134
        %v2136 = vpop.f32.mrb[0].mxu0
        %v2137 = vadd.f32 %v652, %v2136
        %v2138 = vpop.f32.mrb[0].mxu0
        %v2139 = vadd.f32 %v648, %v2138
        %v2140 = vpop.f32.mrb[0].mxu0
        %v2141 = vadd.f32 %v652, %v2140
        %2142 = vmatprep.mubr.bf16.mxu0 0
        %2143 = vmatmul.mubr.bf16.gmra.mrb[0].mxu0 %v1006
        %v2144 = vpop.f32.mrb[0].mxu0
        %v2145 = vadd.f32 %v648, %v2144
        %v2146 = vpop.f32.mrb[0].mxu0
        %v2147 = vadd.f32 %v652, %v2146
        %v2148 = vpop.f32.mrb[0].mxu0
        %v2149 = vadd.f32 %v648, %v2148
        %v2150 = vpop.f32.mrb[0].mxu0
        %v2151 = vadd.f32 %v652, %v2150
        %2152 = vmatprep.mubr.bf16.mxu0 0
        %2153 = vmatmul.mubr.bf16.gmra.mrb[0].mxu0 %v1009
        %v2154 = vpop.f32.mrb[0].mxu0
        %v2155 = vadd.f32 %v648, %v2154
        %v2156 = vpop.f32.mrb[0].mxu0
        %v2157 = vadd.f32 %v652, %v2156
        %v2158 = vpop.f32.mrb[0].mxu0
        %v2159 = vadd.f32 %v648, %v2158
        %v2160 = vpop.f32.mrb[0].mxu0
        %v2161 = vadd.f32 %v652, %v2160
        %2162 = vmatprep.mubr.bf16.mxu0 0
        %2163 = vmatmul.mubr.bf16.gmra.mrb[0].mxu0 %v1012
        %v2164 = vpop.f32.mrb[0].mxu0
        %v2165 = vadd.f32 %v648, %v2164
        %v2166 = vpop.f32.mrb[0].mxu0
        %v2167 = vadd.f32 %v652, %v2166
        %v2168 = vpop.f32.mrb[0].mxu0
        %v2169 = vadd.f32 %v648, %v2168
        %v2170 = vpop.f32.mrb[0].mxu0
        %v2171 = vadd.f32 %v652, %v2170
        %2172 = vmatprep.mubr.bf16.mxu0 0
        %2173 = vmatmul.mubr.bf16.gmra.mrb[0].mxu0 %v1015
        %v2174 = vpop.f32.mrb[0].mxu0
        %v2175 = vadd.f32 %v648, %v2174
        %v2176 = vpop.f32.mrb[0].mxu0
        %v2177 = vadd.f32 %v652, %v2176
        %v2178 = vpop.f32.mrb[0].mxu0
        %v2179 = vadd.f32 %v648, %v2178
        %v2180 = vpop.f32.mrb[0].mxu0
        %v2181 = vadd.f32 %v652, %v2180
        %2182 = vmatprep.mubr.bf16.mxu0 0
        %2183 = vmatmul.mubr.bf16.gmra.mrb[0].mxu0 %v1018
        %v2184 = vpop.f32.mrb[0].mxu0
        %v2185 = vadd.f32 %v648, %v2184
        %v2186 = vpop.f32.mrb[0].mxu0
        %v2187 = vadd.f32 %v652, %v2186
        %v2188 = vpop.f32.mrb[0].mxu0
        %v2189 = vadd.f32 %v648, %v2188
        %v2190 = vpop.f32.mrb[0].mxu0
        %v2191 = vadd.f32 %v652, %v2190
        %2192 = vmatprep.mubr.bf16.mxu0 0
        %2193 = vmatmul.mubr.bf16.gmra.mrb[0].mxu0 %v1021
        %v2194 = vpop.f32.mrb[0].mxu0
        %v2195 = vadd.f32 %v648, %v2194
        %v2196 = vpop.f32.mrb[0].mxu0
        %v2197 = vadd.f32 %v652, %v2196
        %v2198 = vpop.f32.mrb[0].mxu0
        %v2199 = vadd.f32 %v648, %v2198
        %v2200 = vpop.f32.mrb[0].mxu0
        %v2201 = vadd.f32 %v652, %v2200
        %2202 = vmatprep.mubr.bf16.mxu0 0
        %2203 = vmatmul.mubr.bf16.gmra.mrb[0].mxu0 %v1024
        %v2204 = vpop.f32.mrb[0].mxu0
        %v2205 = vadd.f32 %v648, %v2204
        %v2206 = vpop.f32.mrb[0].mxu0
        %v2207 = vadd.f32 %v652, %v2206
        %v2208 = vpop.f32.mrb[0].mxu0
        %v2209 = vadd.f32 %v648, %v2208
        %v2210 = vpop.f32.mrb[0].mxu0
        %v2211 = vadd.f32 %v652, %v2210
        %2212 = vmatprep.mubr.bf16.mxu0 0
        %2213 = vmatmul.mubr.bf16.gmra.mrb[0].mxu0 %v1027
        %v2214 = vpop.f32.mrb[0].mxu0
        %v2215 = vadd.f32 %v648, %v2214
        %v2216 = vpop.f32.mrb[0].mxu0
        %v2217 = vadd.f32 %v652, %v2216
        %v2218 = vpop.f32.mrb[0].mxu0
        %v2219 = vadd.f32 %v648, %v2218
        %v2220 = vpop.f32.mrb[0].mxu0
        %v2221 = vadd.f32 %v652, %v2220
        %2222 = vmatprep.mubr.bf16.mxu0 0
        %2223 = vmatmul.mubr.bf16.gmra.mrb[0].mxu0 %v1030
        %v2224 = vpop.f32.mrb[0].mxu0
        %v2225 = vadd.f32 %v648, %v2224
        %v2226 = vpop.f32.mrb[0].mxu0
        %v2227 = vadd.f32 %v652, %v2226
        %v2228 = vpop.f32.mrb[0].mxu0
        %v2229 = vadd.f32 %v648, %v2228
        %v2230 = vpop.f32.mrb[0].mxu0
        %v2231 = vadd.f32 %v652, %v2230
        %2232 = vmatprep.mubr.bf16.mxu0 0
        %2233 = vmatmul.mubr.bf16.gmra.mrb[0].mxu0 %v1033
        %v2234 = vpop.f32.mrb[0].mxu0
        %v2235 = vadd.f32 %v648, %v2234
        %v2236 = vpop.f32.mrb[0].mxu0
        %v2237 = vadd.f32 %v652, %v2236
        %v2238 = vpop.f32.mrb[0].mxu0
        %v2239 = vadd.f32 %v648, %v2238
        %v2240 = vpop.f32.mrb[0].mxu0
        %v2241 = vadd.f32 %v652, %v2240
        %2242 = vmatprep.mubr.bf16.mxu0 0
        %2243 = vmatmul.mubr.bf16.gmra.mrb[0].mxu0 %v1036
        %v2244 = vpop.f32.mrb[0].mxu0
        %v2245 = vadd.f32 %v648, %v2244
        %v2246 = vpop.f32.mrb[0].mxu0
        %v2247 = vadd.f32 %v652, %v2246
        %v2248 = vpop.f32.mrb[0].mxu0
        %v2249 = vadd.f32 %v648, %v2248
        %v2250 = vpop.f32.mrb[0].mxu0
        %v2251 = vadd.f32 %v652, %v2250
        %2252 = vmatprep.mubr.bf16.mxu0 0
        %2253 = vmatmul.mubr.bf16.gmra.mrb[0].mxu0 %v1039
        %v2254 = vpop.f32.mrb[0].mxu0
        %v2255 = vadd.f32 %v648, %v2254
        %v2256 = vpop.f32.mrb[0].mxu0
        %v2257 = vadd.f32 %v652, %v2256
        %v2258 = vpop.f32.mrb[0].mxu0
        %v2259 = vadd.f32 %v648, %v2258
        %v2260 = vpop.f32.mrb[0].mxu0
        %v2261 = vadd.f32 %v652, %v2260
        %2262 = vmatprep.mubr.bf16.mxu0 0
        %2263 = vmatmul.mubr.bf16.gmra.mrb[0].mxu0 %v1042
        %v2264 = vpop.f32.mrb[0].mxu0
        %v2265 = vadd.f32 %v648, %v2264
        %v2266 = vpop.f32.mrb[0].mxu0
        %v2267 = vadd.f32 %v652, %v2266
        %v2268 = vpop.f32.mrb[0].mxu0
        %v2269 = vadd.f32 %v648, %v2268
        %v2270 = vpop.f32.mrb[0].mxu0
        %v2271 = vadd.f32 %v652, %v2270
        %2272 = vmatprep.mubr.bf16.mxu0 0
        %2273 = vmatmul.mubr.bf16.gmra.mrb[0].mxu0 %v1045
        %v2274 = vpop.f32.mrb[0].mxu0
        %v2275 = vadd.f32 %v648, %v2274
        %v2276 = vpop.f32.mrb[0].mxu0
        %v2277 = vadd.f32 %v652, %v2276
        %v2278 = vpop.f32.mrb[0].mxu0
        %v2279 = vadd.f32 %v648, %v2278
        %v2280 = vpop.f32.mrb[0].mxu0
        %v2281 = vadd.f32 %v652, %v2280
        %2282 = vmatprep.mubr.bf16.mxu0 0
        %2283 = vmatmul.mubr.bf16.gmra.mrb[0].mxu0 %v1048
        %v2284 = vpop.f32.mrb[0].mxu0
        %v2285 = vadd.f32 %v648, %v2284
        %v2286 = vpop.f32.mrb[0].mxu0
        %v2287 = vadd.f32 %v652, %v2286
        %v2288 = vpop.f32.mrb[0].mxu0
        %v2289 = vadd.f32 %v648, %v2288
        %v2290 = vpop.f32.mrb[0].mxu0
        %v2291 = vadd.f32 %v652, %v2290
        %2292 = vmatprep.mubr.bf16.mxu0 0
        %2293 = vmatmul.mubr.bf16.gmra.mrb[0].mxu0 %v1051
        %v2294 = vpop.f32.mrb[0].mxu0
        %v2295 = vadd.f32 %v648, %v2294
        %v2296 = vpop.f32.mrb[0].mxu0
        %v2297 = vadd.f32 %v652, %v2296
        %v2298 = vpop.f32.mrb[0].mxu0
        %v2299 = vadd.f32 %v648, %v2298
        %v2300 = vpop.f32.mrb[0].mxu0
        %v2301 = vadd.f32 %v652, %v2300
        %2302 = vmatprep.mubr.bf16.mxu0 0
        %2303 = vmatmul.mubr.bf16.gmra.mrb[0].mxu0 %v1054
        %v2304 = vpop.f32.mrb[0].mxu0
        %v2305 = vadd.f32 %v648, %v2304
        %v2306 = vpop.f32.mrb[0].mxu0
        %v2307 = vadd.f32 %v652, %v2306
        %v2308 = vpop.f32.mrb[0].mxu0
        %v2309 = vadd.f32 %v648, %v2308
        %v2310 = vpop.f32.mrb[0].mxu0
        %v2311 = vadd.f32 %v652, %v2310
        %2312 = vmatprep.mubr.bf16.mxu0 0
        %2313 = vmatmul.mubr.bf16.gmra.mrb[0].mxu0 %v1057
        %v2314 = vpop.f32.mrb[0].mxu0
        %v2315 = vadd.f32 %v648, %v2314
        %v2316 = vpop.f32.mrb[0].mxu0
        %v2317 = vadd.f32 %v652, %v2316
        %v2318 = vpop.f32.mrb[0].mxu0
        %v2319 = vadd.f32 %v648, %v2318
        %v2320 = vpop.f32.mrb[0].mxu0
        %v2321 = vadd.f32 %v652, %v2320
        %2322 = vmatprep.mubr.bf16.mxu0 0
        %2323 = vmatmul.mubr.bf16.gmra.mrb[0].mxu0 %v1060
        %v2324 = vpop.f32.mrb[0].mxu0
        %v2325 = vadd.f32 %v648, %v2324
        %v2326 = vpop.f32.mrb[0].mxu0
        %v2327 = vadd.f32 %v652, %v2326
        %v2328 = vpop.f32.mrb[0].mxu0
        %v2329 = vadd.f32 %v648, %v2328
        %v2330 = vpop.f32.mrb[0].mxu0
        %v2331 = vadd.f32 %v652, %v2330
        %2332 = vmatprep.mubr.bf16.mxu0 0
        %2333 = vmatmul.mubr.bf16.gmra.mrb[0].mxu0 %v1063
        %v2334 = vpop.f32.mrb[0].mxu0
        %v2335 = vadd.f32 %v648, %v2334
        %v2336 = vpop.f32.mrb[0].mxu0
        %v2337 = vadd.f32 %v652, %v2336
        %v2338 = vpop.f32.mrb[0].mxu0
        %v2339 = vadd.f32 %v648, %v2338
        %v2340 = vpop.f32.mrb[0].mxu0
        %v2341 = vadd.f32 %v652, %v2340
        %2342 = vmatprep.mubr.bf16.mxu0 0
        %2343 = vmatmul.mubr.bf16.gmra.mrb[0].mxu0 %v1066
        %v2344 = vpop.f32.mrb[0].mxu0
        %v2345 = vadd.f32 %v648, %v2344
        %v2346 = vpop.f32.mrb[0].mxu0
        %v2347 = vadd.f32 %v652, %v2346
        %v2348 = vpop.f32.mrb[0].mxu0
        %v2349 = vadd.f32 %v648, %v2348
        %v2350 = vpop.f32.mrb[0].mxu0
        %v2351 = vadd.f32 %v652, %v2350
        %2352 = vmatprep.mubr.bf16.mxu0 0
        %2353 = vmatmul.mubr.bf16.gmra.mrb[0].mxu0 %v1069
        %v2354 = vpop.f32.mrb[0].mxu0
        %v2355 = vadd.f32 %v648, %v2354
        %v2356 = vpop.f32.mrb[0].mxu0
        %v2357 = vadd.f32 %v652, %v2356
        %v2358 = vpop.f32.mrb[0].mxu0
        %v2359 = vadd.f32 %v648, %v2358
        %v2360 = vpop.f32.mrb[0].mxu0
        %v2361 = vadd.f32 %v652, %v2360
        %2362 = vmatprep.mubr.bf16.mxu0 0
        %2363 = vmatmul.mubr.bf16.gmra.mrb[0].mxu0 %v1072
        %v2364 = vpop.f32.mrb[0].mxu0
        %v2365 = vadd.f32 %v648, %v2364
        %v2366 = vpop.f32.mrb[0].mxu0
        %v2367 = vadd.f32 %v652, %v2366
        %v2368 = vpop.f32.mrb[0].mxu0
        %v2369 = vadd.f32 %v648, %v2368
        %v2370 = vpop.f32.mrb[0].mxu0
        %v2371 = vadd.f32 %v652, %v2370
        %2372 = vmatprep.mubr.bf16.mxu0 0
        %2373 = vmatmul.mubr.bf16.gmra.mrb[0].mxu0 %v1075
        %v2374 = vpop.f32.mrb[0].mxu0
        %v2375 = vadd.f32 %v648, %v2374
        %v2376 = vpop.f32.mrb[0].mxu0
        %v2377 = vadd.f32 %v652, %v2376
        %v2378 = vpop.f32.mrb[0].mxu0
        %v2379 = vadd.f32 %v648, %v2378
        %v2380 = vpop.f32.mrb[0].mxu0
        %v2381 = vadd.f32 %v652, %v2380
        %2382 = vmatprep.mubr.bf16.mxu0 0
        %2383 = vmatmul.mubr.bf16.gmra.mrb[0].mxu0 %v1078
        %v2384 = vpop.f32.mrb[0].mxu0
        %v2385 = vadd.f32 %v648, %v2384
        %v2386 = vpop.f32.mrb[0].mxu0
        %v2387 = vadd.f32 %v652, %v2386
        %v2388 = vpop.f32.mrb[0].mxu0
        %v2389 = vadd.f32 %v648, %v2388
        %v2390 = vpop.f32.mrb[0].mxu0
        %v2391 = vadd.f32 %v652, %v2390
        %2392 = vdwg.mxu0
        %v2393 = vmax.f32 %v1115, 0.0
        %v2394 = vmax.f32 %v1119, 0.0
        %v2395 = vmax.f32 %v1125, 0.0
        %v2396 = vmax.f32 %v1129, 0.0
        %v2397 = vmax.f32 %v1135, 0.0
        %v2398 = vmax.f32 %v1139, 0.0
        %v2399 = vmax.f32 %v1145, 0.0
        %v2400 = vmax.f32 %v1149, 0.0
        %v2401 = vmax.f32 %v1155, 0.0
        %v2402 = vmax.f32 %v1159, 0.0
        %v2403 = vmax.f32 %v1165, 0.0
        %v2404 = vmax.f32 %v1169, 0.0
        %v2405 = vmax.f32 %v1175, 0.0
        %v2406 = vmax.f32 %v1179, 0.0
        %v2407 = vmax.f32 %v1185, 0.0
        %v2408 = vmax.f32 %v1189, 0.0
        %v2409 = vmax.f32 %v1195, 0.0
        %v2410 = vmax.f32 %v1199, 0.0
        %v2411 = vmax.f32 %v1205, 0.0
        %v2412 = vmax.f32 %v1209, 0.0
        %v2413 = vmax.f32 %v1215, 0.0
        %v2414 = vmax.f32 %v1219, 0.0
        %v2415 = vmax.f32 %v1225, 0.0
        %v2416 = vmax.f32 %v1229, 0.0
        %v2417 = vmax.f32 %v1235, 0.0
        %v2418 = vmax.f32 %v1239, 0.0
        %v2419 = vmax.f32 %v1245, 0.0
        %v2420 = vmax.f32 %v1249, 0.0
        %v2421 = vmax.f32 %v1255, 0.0
        %v2422 = vmax.f32 %v1259, 0.0
        %v2423 = vmax.f32 %v1265, 0.0
        %v2424 = vmax.f32 %v1269, 0.0
        %v2425 = vmax.f32 %v1275, 0.0
        %v2426 = vmax.f32 %v1279, 0.0
        %v2427 = vmax.f32 %v1285, 0.0
        %v2428 = vmax.f32 %v1289, 0.0
        %v2429 = vmax.f32 %v1295, 0.0
        %v2430 = vmax.f32 %v1299, 0.0
        %v2431 = vmax.f32 %v1305, 0.0
        %v2432 = vmax.f32 %v1309, 0.0
        %v2433 = vmax.f32 %v1315, 0.0
        %v2434 = vmax.f32 %v1319, 0.0
        %v2435 = vmax.f32 %v1325, 0.0
        %v2436 = vmax.f32 %v1329, 0.0
        %v2437 = vmax.f32 %v1335, 0.0
        %v2438 = vmax.f32 %v1339, 0.0
        %v2439 = vmax.f32 %v1345, 0.0
        %v2440 = vmax.f32 %v1349, 0.0
        %v2441 = vmax.f32 %v1355, 0.0
        %v2442 = vmax.f32 %v1359, 0.0
        %v2443 = vmax.f32 %v1365, 0.0
        %v2444 = vmax.f32 %v1369, 0.0
        %v2445 = vmax.f32 %v1375, 0.0
        %v2446 = vmax.f32 %v1379, 0.0
        %v2447 = vmax.f32 %v1385, 0.0
        %v2448 = vmax.f32 %v1389, 0.0
        %v2449 = vmax.f32 %v1395, 0.0
        %v2450 = vmax.f32 %v1399, 0.0
        %v2451 = vmax.f32 %v1405, 0.0
        %v2452 = vmax.f32 %v1409, 0.0
        %v2453 = vmax.f32 %v1415, 0.0
        %v2454 = vmax.f32 %v1419, 0.0
        %v2455 = vmax.f32 %v1425, 0.0
        %v2456 = vmax.f32 %v1429, 0.0
        %v2457 = vmax.f32 %v1435, 0.0
        %v2458 = vmax.f32 %v1439, 0.0
        %v2459 = vmax.f32 %v1445, 0.0
        %v2460 = vmax.f32 %v1449, 0.0
        %v2461 = vmax.f32 %v1455, 0.0
        %v2462 = vmax.f32 %v1459, 0.0
        %v2463 = vmax.f32 %v1465, 0.0
        %v2464 = vmax.f32 %v1469, 0.0
        %v2465 = vmax.f32 %v1475, 0.0
        %v2466 = vmax.f32 %v1479, 0.0
        %v2467 = vmax.f32 %v1485, 0.0
        %v2468 = vmax.f32 %v1489, 0.0
        %v2469 = vmax.f32 %v1495, 0.0
        %v2470 = vmax.f32 %v1499, 0.0
        %v2471 = vmax.f32 %v1505, 0.0
        %v2472 = vmax.f32 %v1509, 0.0
        %v2473 = vmax.f32 %v1515, 0.0
        %v2474 = vmax.f32 %v1519, 0.0
        %v2475 = vmax.f32 %v1525, 0.0
        %v2476 = vmax.f32 %v1529, 0.0
        %v2477 = vmax.f32 %v1535, 0.0
        %v2478 = vmax.f32 %v1539, 0.0
        %v2479 = vmax.f32 %v1545, 0.0
        %v2480 = vmax.f32 %v1549, 0.0
        %v2481 = vmax.f32 %v1555, 0.0
        %v2482 = vmax.f32 %v1559, 0.0
        %v2483 = vmax.f32 %v1565, 0.0
        %v2484 = vmax.f32 %v1569, 0.0
        %v2485 = vmax.f32 %v1575, 0.0
        %v2486 = vmax.f32 %v1579, 0.0
        %v2487 = vmax.f32 %v1585, 0.0
        %v2488 = vmax.f32 %v1589, 0.0
        %v2489 = vmax.f32 %v1595, 0.0
        %v2490 = vmax.f32 %v1599, 0.0
        %v2491 = vmax.f32 %v1605, 0.0
        %v2492 = vmax.f32 %v1609, 0.0
        %v2493 = vmax.f32 %v1615, 0.0
        %v2494 = vmax.f32 %v1619, 0.0
        %v2495 = vmax.f32 %v1625, 0.0
        %v2496 = vmax.f32 %v1629, 0.0
        %v2497 = vmax.f32 %v1635, 0.0
        %v2498 = vmax.f32 %v1639, 0.0
        %v2499 = vmax.f32 %v1645, 0.0
        %v2500 = vmax.f32 %v1649, 0.0
        %v2501 = vmax.f32 %v1655, 0.0
        %v2502 = vmax.f32 %v1659, 0.0
        %v2503 = vmax.f32 %v1665, 0.0
        %v2504 = vmax.f32 %v1669, 0.0
        %v2505 = vmax.f32 %v1675, 0.0
        %v2506 = vmax.f32 %v1679, 0.0
        %v2507 = vmax.f32 %v1685, 0.0
        %v2508 = vmax.f32 %v1689, 0.0
        %v2509 = vmax.f32 %v1695, 0.0
        %v2510 = vmax.f32 %v1699, 0.0
        %v2511 = vmax.f32 %v1705, 0.0
        %v2512 = vmax.f32 %v1709, 0.0
        %v2513 = vmax.f32 %v1715, 0.0
        %v2514 = vmax.f32 %v1719, 0.0
        %v2515 = vmax.f32 %v1725, 0.0
        %v2516 = vmax.f32 %v1729, 0.0
        %v2517 = vmax.f32 %v1735, 0.0
        %v2518 = vmax.f32 %v1739, 0.0
        %v2519 = vmax.f32 %v1745, 0.0
        %v2520 = vmax.f32 %v1749, 0.0
        %v2521 = vmax.f32 %v1755, 0.0
        %v2522 = vmax.f32 %v1759, 0.0
        %v2523 = vmax.f32 %v1765, 0.0
        %v2524 = vmax.f32 %v1769, 0.0
        %v2525 = vmax.f32 %v1775, 0.0
        %v2526 = vmax.f32 %v1779, 0.0
        %v2527 = vmax.f32 %v1785, 0.0
        %v2528 = vmax.f32 %v1789, 0.0
        %v2529 = vmax.f32 %v1795, 0.0
        %v2530 = vmax.f32 %v1799, 0.0
        %v2531 = vmax.f32 %v1805, 0.0
        %v2532 = vmax.f32 %v1809, 0.0
        %v2533 = vmax.f32 %v1815, 0.0
        %v2534 = vmax.f32 %v1819, 0.0
        %v2535 = vmax.f32 %v1825, 0.0
        %v2536 = vmax.f32 %v1829, 0.0
        %v2537 = vmax.f32 %v1835, 0.0
        %v2538 = vmax.f32 %v1839, 0.0
        %v2539 = vmax.f32 %v1845, 0.0
        %v2540 = vmax.f32 %v1849, 0.0
        %v2541 = vmax.f32 %v1855, 0.0
        %v2542 = vmax.f32 %v1859, 0.0
        %v2543 = vmax.f32 %v1865, 0.0
        %v2544 = vmax.f32 %v1869, 0.0
        %v2545 = vmax.f32 %v1875, 0.0
        %v2546 = vmax.f32 %v1879, 0.0
        %v2547 = vmax.f32 %v1885, 0.0
        %v2548 = vmax.f32 %v1889, 0.0
        %v2549 = vmax.f32 %v1895, 0.0
        %v2550 = vmax.f32 %v1899, 0.0
        %v2551 = vmax.f32 %v1905, 0.0
        %v2552 = vmax.f32 %v1909, 0.0
        %v2553 = vmax.f32 %v1915, 0.0
        %v2554 = vmax.f32 %v1919, 0.0
        %v2555 = vmax.f32 %v1925, 0.0
        %v2556 = vmax.f32 %v1929, 0.0
        %v2557 = vmax.f32 %v1935, 0.0
        %v2558 = vmax.f32 %v1939, 0.0
        %v2559 = vmax.f32 %v1945, 0.0
        %v2560 = vmax.f32 %v1949, 0.0
        %v2561 = vmax.f32 %v1955, 0.0
        %v2562 = vmax.f32 %v1959, 0.0
        %v2563 = vmax.f32 %v1965, 0.0
        %v2564 = vmax.f32 %v1969, 0.0
        %v2565 = vmax.f32 %v1975, 0.0
        %v2566 = vmax.f32 %v1979, 0.0
        %v2567 = vmax.f32 %v1985, 0.0
        %v2568 = vmax.f32 %v1989, 0.0
        %v2569 = vmax.f32 %v1995, 0.0
        %v2570 = vmax.f32 %v1999, 0.0
        %v2571 = vmax.f32 %v2005, 0.0
        %v2572 = vmax.f32 %v2009, 0.0
        %v2573 = vmax.f32 %v2015, 0.0
        %v2574 = vmax.f32 %v2019, 0.0
        %v2575 = vmax.f32 %v2025, 0.0
        %v2576 = vmax.f32 %v2029, 0.0
        %v2577 = vmax.f32 %v2035, 0.0
        %v2578 = vmax.f32 %v2039, 0.0
        %v2579 = vmax.f32 %v2045, 0.0
        %v2580 = vmax.f32 %v2049, 0.0
        %v2581 = vmax.f32 %v2055, 0.0
        %v2582 = vmax.f32 %v2059, 0.0
        %v2583 = vmax.f32 %v2065, 0.0
        %v2584 = vmax.f32 %v2069, 0.0
        %v2585 = vmax.f32 %v2075, 0.0
        %v2586 = vmax.f32 %v2079, 0.0
        %v2587 = vmax.f32 %v2085, 0.0
        %v2588 = vmax.f32 %v2089, 0.0
        %v2589 = vmax.f32 %v2095, 0.0
        %v2590 = vmax.f32 %v2099, 0.0
        %v2591 = vmax.f32 %v2105, 0.0
        %v2592 = vmax.f32 %v2109, 0.0
        %v2593 = vmax.f32 %v2115, 0.0
        %v2594 = vmax.f32 %v2119, 0.0
        %v2595 = vmax.f32 %v2125, 0.0
        %v2596 = vmax.f32 %v2129, 0.0
        %v2597 = vmax.f32 %v2135, 0.0
        %v2598 = vmax.f32 %v2139, 0.0
        %v2599 = vmax.f32 %v2145, 0.0
        %v2600 = vmax.f32 %v2149, 0.0
        %v2601 = vmax.f32 %v2155, 0.0
        %v2602 = vmax.f32 %v2159, 0.0
        %v2603 = vmax.f32 %v2165, 0.0
        %v2604 = vmax.f32 %v2169, 0.0
        %v2605 = vmax.f32 %v2175, 0.0
        %v2606 = vmax.f32 %v2179, 0.0
        %v2607 = vmax.f32 %v2185, 0.0
        %v2608 = vmax.f32 %v2189, 0.0
        %v2609 = vmax.f32 %v2195, 0.0
        %v2610 = vmax.f32 %v2199, 0.0
        %v2611 = vmax.f32 %v2205, 0.0
        %v2612 = vmax.f32 %v2209, 0.0
        %v2613 = vmax.f32 %v2215, 0.0
        %v2614 = vmax.f32 %v2219, 0.0
        %v2615 = vmax.f32 %v2225, 0.0
        %v2616 = vmax.f32 %v2229, 0.0
        %v2617 = vmax.f32 %v2235, 0.0
        %v2618 = vmax.f32 %v2239, 0.0
        %v2619 = vmax.f32 %v2245, 0.0
        %v2620 = vmax.f32 %v2249, 0.0
        %v2621 = vmax.f32 %v2255, 0.0
        %v2622 = vmax.f32 %v2259, 0.0
        %v2623 = vmax.f32 %v2265, 0.0
        %v2624 = vmax.f32 %v2269, 0.0
        %v2625 = vmax.f32 %v2275, 0.0
        %v2626 = vmax.f32 %v2279, 0.0
        %v2627 = vmax.f32 %v2285, 0.0
        %v2628 = vmax.f32 %v2289, 0.0
        %v2629 = vmax.f32 %v2295, 0.0
        %v2630 = vmax.f32 %v2299, 0.0
        %v2631 = vmax.f32 %v2305, 0.0
        %v2632 = vmax.f32 %v2309, 0.0
        %v2633 = vmax.f32 %v2315, 0.0
        %v2634 = vmax.f32 %v2319, 0.0
        %v2635 = vmax.f32 %v2325, 0.0
        %v2636 = vmax.f32 %v2329, 0.0
        %v2637 = vmax.f32 %v2335, 0.0
        %v2638 = vmax.f32 %v2339, 0.0
        %v2639 = vmax.f32 %v2345, 0.0
        %v2640 = vmax.f32 %v2349, 0.0
        %v2641 = vmax.f32 %v2355, 0.0
        %v2642 = vmax.f32 %v2359, 0.0
        %v2643 = vmax.f32 %v2365, 0.0
        %v2644 = vmax.f32 %v2369, 0.0
        %v2645 = vmax.f32 %v2375, 0.0
        %v2646 = vmax.f32 %v2379, 0.0
        %v2647 = vmax.f32 %v2385, 0.0
        %v2648 = vmax.f32 %v2389, 0.0
        %v2649 = vpack.c.bf16 %v2394, %v2393
        %v2650 = vpack.c.bf16 %v2396, %v2395
        %v2651 = vpack.c.bf16 %v2398, %v2397
        %v2652 = vpack.c.bf16 %v2400, %v2399
        %v2653 = vpack.c.bf16 %v2402, %v2401
        %v2654 = vpack.c.bf16 %v2404, %v2403
        %v2655 = vpack.c.bf16 %v2406, %v2405
        %v2656 = vpack.c.bf16 %v2408, %v2407
        %v2657 = vpack.c.bf16 %v2410, %v2409
        %v2658 = vpack.c.bf16 %v2412, %v2411
        %v2659 = vpack.c.bf16 %v2414, %v2413
        %v2660 = vpack.c.bf16 %v2416, %v2415
        %v2661 = vpack.c.bf16 %v2418, %v2417
        %v2662 = vpack.c.bf16 %v2420, %v2419
        %v2663 = vpack.c.bf16 %v2422, %v2421
        %v2664 = vpack.c.bf16 %v2424, %v2423
        %v2665 = vpack.c.bf16 %v2426, %v2425
        %v2666 = vpack.c.bf16 %v2428, %v2427
        %v2667 = vpack.c.bf16 %v2430, %v2429
        %v2668 = vpack.c.bf16 %v2432, %v2431
        %v2669 = vpack.c.bf16 %v2434, %v2433
        %v2670 = vpack.c.bf16 %v2436, %v2435
        %v2671 = vpack.c.bf16 %v2438, %v2437
        %v2672 = vpack.c.bf16 %v2440, %v2439
        %v2673 = vpack.c.bf16 %v2442, %v2441
        %v2674 = vpack.c.bf16 %v2444, %v2443
        %v2675 = vpack.c.bf16 %v2446, %v2445
        %v2676 = vpack.c.bf16 %v2448, %v2447
        %v2677 = vpack.c.bf16 %v2450, %v2449
        %v2678 = vpack.c.bf16 %v2452, %v2451
        %v2679 = vpack.c.bf16 %v2454, %v2453
        %v2680 = vpack.c.bf16 %v2456, %v2455
        %v2681 = vpack.c.bf16 %v2458, %v2457
        %v2682 = vpack.c.bf16 %v2460, %v2459
        %v2683 = vpack.c.bf16 %v2462, %v2461
        %v2684 = vpack.c.bf16 %v2464, %v2463
        %v2685 = vpack.c.bf16 %v2466, %v2465
        %v2686 = vpack.c.bf16 %v2468, %v2467
        %v2687 = vpack.c.bf16 %v2470, %v2469
        %v2688 = vpack.c.bf16 %v2472, %v2471
        %v2689 = vpack.c.bf16 %v2474, %v2473
        %v2690 = vpack.c.bf16 %v2476, %v2475
        %v2691 = vpack.c.bf16 %v2478, %v2477
        %v2692 = vpack.c.bf16 %v2480, %v2479
        %v2693 = vpack.c.bf16 %v2482, %v2481
        %v2694 = vpack.c.bf16 %v2484, %v2483
        %v2695 = vpack.c.bf16 %v2486, %v2485
        %v2696 = vpack.c.bf16 %v2488, %v2487
        %v2697 = vpack.c.bf16 %v2490, %v2489
        %v2698 = vpack.c.bf16 %v2492, %v2491
        %v2699 = vpack.c.bf16 %v2494, %v2493
        %v2700 = vpack.c.bf16 %v2496, %v2495
        %v2701 = vpack.c.bf16 %v2498, %v2497
        %v2702 = vpack.c.bf16 %v2500, %v2499
        %v2703 = vpack.c.bf16 %v2502, %v2501
        %v2704 = vpack.c.bf16 %v2504, %v2503
        %v2705 = vpack.c.bf16 %v2506, %v2505
        %v2706 = vpack.c.bf16 %v2508, %v2507
        %v2707 = vpack.c.bf16 %v2510, %v2509
        %v2708 = vpack.c.bf16 %v2512, %v2511
        %v2709 = vpack.c.bf16 %v2514, %v2513
        %v2710 = vpack.c.bf16 %v2516, %v2515
        %v2711 = vpack.c.bf16 %v2518, %v2517
        %v2712 = vpack.c.bf16 %v2520, %v2519
        %v2713 = vpack.c.bf16 %v2522, %v2521
        %v2714 = vpack.c.bf16 %v2524, %v2523
        %v2715 = vpack.c.bf16 %v2526, %v2525
        %v2716 = vpack.c.bf16 %v2528, %v2527
        %v2717 = vpack.c.bf16 %v2530, %v2529
        %v2718 = vpack.c.bf16 %v2532, %v2531
        %v2719 = vpack.c.bf16 %v2534, %v2533
        %v2720 = vpack.c.bf16 %v2536, %v2535
        %v2721 = vpack.c.bf16 %v2538, %v2537
        %v2722 = vpack.c.bf16 %v2540, %v2539
        %v2723 = vpack.c.bf16 %v2542, %v2541
        %v2724 = vpack.c.bf16 %v2544, %v2543
        %v2725 = vpack.c.bf16 %v2546, %v2545
        %v2726 = vpack.c.bf16 %v2548, %v2547
        %v2727 = vpack.c.bf16 %v2550, %v2549
        %v2728 = vpack.c.bf16 %v2552, %v2551
        %v2729 = vpack.c.bf16 %v2554, %v2553
        %v2730 = vpack.c.bf16 %v2556, %v2555
        %v2731 = vpack.c.bf16 %v2558, %v2557
        %v2732 = vpack.c.bf16 %v2560, %v2559
        %v2733 = vpack.c.bf16 %v2562, %v2561
        %v2734 = vpack.c.bf16 %v2564, %v2563
        %v2735 = vpack.c.bf16 %v2566, %v2565
        %v2736 = vpack.c.bf16 %v2568, %v2567
        %v2737 = vpack.c.bf16 %v2570, %v2569
        %v2738 = vpack.c.bf16 %v2572, %v2571
        %v2739 = vpack.c.bf16 %v2574, %v2573
        %v2740 = vpack.c.bf16 %v2576, %v2575
        %v2741 = vpack.c.bf16 %v2578, %v2577
        %v2742 = vpack.c.bf16 %v2580, %v2579
        %v2743 = vpack.c.bf16 %v2582, %v2581
        %v2744 = vpack.c.bf16 %v2584, %v2583
        %v2745 = vpack.c.bf16 %v2586, %v2585
        %v2746 = vpack.c.bf16 %v2588, %v2587
        %v2747 = vpack.c.bf16 %v2590, %v2589
        %v2748 = vpack.c.bf16 %v2592, %v2591
        %v2749 = vpack.c.bf16 %v2594, %v2593
        %v2750 = vpack.c.bf16 %v2596, %v2595
        %v2751 = vpack.c.bf16 %v2598, %v2597
        %v2752 = vpack.c.bf16 %v2600, %v2599
        %v2753 = vpack.c.bf16 %v2602, %v2601
        %v2754 = vpack.c.bf16 %v2604, %v2603
        %v2755 = vpack.c.bf16 %v2606, %v2605
        %v2756 = vpack.c.bf16 %v2608, %v2607
        %v2757 = vpack.c.bf16 %v2610, %v2609
        %v2758 = vpack.c.bf16 %v2612, %v2611
        %v2759 = vpack.c.bf16 %v2614, %v2613
        %v2760 = vpack.c.bf16 %v2616, %v2615
        %v2761 = vpack.c.bf16 %v2618, %v2617
        %v2762 = vpack.c.bf16 %v2620, %v2619
        %v2763 = vpack.c.bf16 %v2622, %v2621
        %v2764 = vpack.c.bf16 %v2624, %v2623
        %v2765 = vpack.c.bf16 %v2626, %v2625
        %v2766 = vpack.c.bf16 %v2628, %v2627
        %v2767 = vpack.c.bf16 %v2630, %v2629
        %v2768 = vpack.c.bf16 %v2632, %v2631
        %v2769 = vpack.c.bf16 %v2634, %v2633
        %v2770 = vpack.c.bf16 %v2636, %v2635
        %v2771 = vpack.c.bf16 %v2638, %v2637
        %v2772 = vpack.c.bf16 %v2640, %v2639
        %v2773 = vpack.c.bf16 %v2642, %v2641
        %v2774 = vpack.c.bf16 %v2644, %v2643
        %v2775 = vpack.c.bf16 %v2646, %v2645
        %v2776 = vpack.c.bf16 %v2648, %v2647
        %v2777 = vld [vmem:[%s3] sm:$0xf]
        %v2778 = vld [vmem:[%s3 + $0x4] sm:$0xf]
        %v2779 = vld [vmem:[%s3 + $0x8] sm:$0xf]
        %v2780 = vld [vmem:[%s3 + $0xc] sm:$0xf]
        %v2781 = vld [vmem:[%s3 + $0x10] sm:$0xf]
        %v2782 = vld [vmem:[%s3 + $0x14] sm:$0xf]
        %v2783 = vld [vmem:[%s3 + $0x18] sm:$0xf]
        %v2784 = vld [vmem:[%s3 + $0x1c] sm:$0xf]
        %v2785 = vld [vmem:[%s3 + $0x20] sm:$0xf]
        %v2786 = vld [vmem:[%s3 + $0x24] sm:$0xf]
        %v2787 = vld [vmem:[%s3 + $0x28] sm:$0xf]
        %v2788 = vld [vmem:[%s3 + $0x2c] sm:$0xf]
        %v2789 = vld [vmem:[%s3 + $0x30] sm:$0xf]
        %v2790 = vld [vmem:[%s3 + $0x34] sm:$0xf]
        %v2791 = vld [vmem:[%s3 + $0x38] sm:$0xf]
        %v2792 = vld [vmem:[%s3 + $0x3c] sm:$0xf]
        %v2793 = vld [vmem:[%s4] sm:$0x1]
        %v2795 = vlaneseq
        %v2796 = vshrl.u32 %v2795, 7
        %v2797 = vsub.s32 0, %v2796
        %v2798 = vrot.slane %v2793, %v2797
        %v2816 = vunpack.c.l.b16 %v2777
        %v2817 = vunpack.c.l.b16 %v2778
        %v2818 = vunpack.c.l.b16 %v2779
        %v2819 = vunpack.c.l.b16 %v2780
        %v2820 = vunpack.c.l.b16 %v2781
        %v2821 = vunpack.c.l.b16 %v2782
        %v2822 = vunpack.c.l.b16 %v2783
        %v2823 = vunpack.c.l.b16 %v2784
        %v2824 = vunpack.c.l.b16 %v2785
        %v2825 = vunpack.c.l.b16 %v2786
        %v2826 = vunpack.c.l.b16 %v2787
        %v2827 = vunpack.c.l.b16 %v2788
        %v2828 = vunpack.c.l.b16 %v2789
        %v2829 = vunpack.c.l.b16 %v2790
        %v2830 = vunpack.c.l.b16 %v2791
        %v2831 = vunpack.c.l.b16 %v2792
        %v2832 = vpack.c.b16 %v2817, %v2816
        %v2833 = vpack.c.b16 %v2819, %v2818
        %v2834 = vpack.c.b16 %v2821, %v2820
        %v2835 = vpack.c.b16 %v2823, %v2822
        %v2836 = vpack.c.b16 %v2825, %v2824
        %v2837 = vpack.c.b16 %v2827, %v2826
        %v2838 = vpack.c.b16 %v2829, %v2828
        %v2839 = vpack.c.b16 %v2831, %v2830
        %2848 = vmatprep.subr.bf16.mxu0 0
        %2849 = vmatpush1.bf16.msra.mxu0 %v2832
        %2850 = vmatprep.subr.bf16.mxu0 0
        %2851 = vmatpush1.bf16.msra.mxu0 %v2833
        %2852 = vmatprep.subr.bf16.mxu0 0
        %2853 = vmatpush1.bf16.msra.mxu0 %v2834
        %2854 = vmatprep.subr.bf16.mxu0 0
        %2855 = vmatpush1.bf16.msra.mxu0 %v2835
        %2856 = vmatprep.subr.bf16.mxu0 0
        %2857 = vmatpush1.bf16.msra.mxu0 %v2836
        %2858 = vmatprep.subr.bf16.mxu0 0
        %2859 = vmatpush1.bf16.msra.mxu0 %v2837
        %2860 = vmatprep.subr.bf16.mxu0 0
        %2861 = vmatpush1.bf16.msra.mxu0 %v2838
        %2862 = vmatprep.subr.bf16.mxu0 0
        %2863 = vmatpush1.bf16.msra.mxu0 %v2839
        %2864 = vmatprep.subr.bf16.mxu0 0
        %2865 = vmatpush1.bf16.msra.mxu0 0
        %2866 = vmatprep.subr.bf16.mxu0 0
        %2867 = vmatpush1.bf16.msra.mxu0 0
        %2868 = vmatprep.subr.bf16.mxu0 0
        %2869 = vmatpush1.bf16.msra.mxu0 0
        %2870 = vmatprep.subr.bf16.mxu0 0
        %2871 = vmatpush1.bf16.msra.mxu0 0
        %2872 = vmatprep.subr.bf16.mxu0 0
        %2873 = vmatpush1.bf16.msra.mxu0 0
        %2874 = vmatprep.subr.bf16.mxu0 0
        %2875 = vmatpush1.bf16.msra.mxu0 0
        %2876 = vmatprep.subr.bf16.mxu0 0
        %2877 = vmatpush1.bf16.msra.mxu0 0
        %2878 = vmatprep.subr.bf16.mxu0 0
        %2879 = vmatpush1.bf16.msra.mxu0 0
        %2880 = vmatprep.mubr.bf16.mxu0 0
        %2881 = vmatmul.mubr.bf16.gmra.mrb[0].mxu0 %v2649
        %v2882 = vpop.f32.mrb[0].mxu0
        %v2883 = vadd.f32 %v2798, %v2882
        %v2884 = vpop.f32.mrb[0].mxu0
        %v2885 = vpop.f32.mrb[0].mxu0
        %v2886 = vadd.f32 %v2798, %v2885
        %v2887 = vpop.f32.mrb[0].mxu0
        %2888 = vmatprep.mubr.bf16.mxu0 0
        %2889 = vmatmul.mubr.bf16.gmra.mrb[0].mxu0 %v2650
        %v2890 = vpop.f32.mrb[0].mxu0
        %v2891 = vadd.f32 %v2798, %v2890
        %v2892 = vpop.f32.mrb[0].mxu0
        %v2893 = vpop.f32.mrb[0].mxu0
        %v2894 = vadd.f32 %v2798, %v2893
        %v2895 = vpop.f32.mrb[0].mxu0
        %2896 = vmatprep.mubr.bf16.mxu0 0
        %2897 = vmatmul.mubr.bf16.gmra.mrb[0].mxu0 %v2651
        %v2898 = vpop.f32.mrb[0].mxu0
        %v2899 = vadd.f32 %v2798, %v2898
        %v2900 = vpop.f32.mrb[0].mxu0
        %v2901 = vpop.f32.mrb[0].mxu0
        %v2902 = vadd.f32 %v2798, %v2901
        %v2903 = vpop.f32.mrb[0].mxu0
        %2904 = vmatprep.mubr.bf16.mxu0 0
        %2905 = vmatmul.mubr.bf16.gmra.mrb[0].mxu0 %v2652
        %v2906 = vpop.f32.mrb[0].mxu0
        %v2907 = vadd.f32 %v2798, %v2906
        %v2908 = vpop.f32.mrb[0].mxu0
        %v2909 = vpop.f32.mrb[0].mxu0
        %v2910 = vadd.f32 %v2798, %v2909
        %v2911 = vpop.f32.mrb[0].mxu0
        %2912 = vmatprep.mubr.bf16.mxu0 0
        %2913 = vmatmul.mubr.bf16.gmra.mrb[0].mxu0 %v2653
        %v2914 = vpop.f32.mrb[0].mxu0
        %v2915 = vadd.f32 %v2798, %v2914
        %v2916 = vpop.f32.mrb[0].mxu0
        %v2917 = vpop.f32.mrb[0].mxu0
        %v2918 = vadd.f32 %v2798, %v2917
        %v2919 = vpop.f32.mrb[0].mxu0
        %2920 = vmatprep.mubr.bf16.mxu0 0
        %2921 = vmatmul.mubr.bf16.gmra.mrb[0].mxu0 %v2654
        %v2922 = vpop.f32.mrb[0].mxu0
        %v2923 = vadd.f32 %v2798, %v2922
        %v2924 = vpop.f32.mrb[0].mxu0
        %v2925 = vpop.f32.mrb[0].mxu0
        %v2926 = vadd.f32 %v2798, %v2925
        %v2927 = vpop.f32.mrb[0].mxu0
        %2928 = vmatprep.mubr.bf16.mxu0 0
        %2929 = vmatmul.mubr.bf16.gmra.mrb[0].mxu0 %v2655
        %v2930 = vpop.f32.mrb[0].mxu0
        %v2931 = vadd.f32 %v2798, %v2930
        %v2932 = vpop.f32.mrb[0].mxu0
        %v2933 = vpop.f32.mrb[0].mxu0
        %v2934 = vadd.f32 %v2798, %v2933
        %v2935 = vpop.f32.mrb[0].mxu0
        %2936 = vmatprep.mubr.bf16.mxu0 0
        %2937 = vmatmul.mubr.bf16.gmra.mrb[0].mxu0 %v2656
        %v2938 = vpop.f32.mrb[0].mxu0
        %v2939 = vadd.f32 %v2798, %v2938
        %v2940 = vpop.f32.mrb[0].mxu0
        %v2941 = vpop.f32.mrb[0].mxu0
        %v2942 = vadd.f32 %v2798, %v2941
        %v2943 = vpop.f32.mrb[0].mxu0
        %2944 = vmatprep.mubr.bf16.mxu0 0
        %2945 = vmatmul.mubr.bf16.gmra.mrb[0].mxu0 %v2657
        %v2946 = vpop.f32.mrb[0].mxu0
        %v2947 = vadd.f32 %v2798, %v2946
        %v2948 = vpop.f32.mrb[0].mxu0
        %v2949 = vpop.f32.mrb[0].mxu0
        %v2950 = vadd.f32 %v2798, %v2949
        %v2951 = vpop.f32.mrb[0].mxu0
        %2952 = vmatprep.mubr.bf16.mxu0 0
        %2953 = vmatmul.mubr.bf16.gmra.mrb[0].mxu0 %v2658
        %v2954 = vpop.f32.mrb[0].mxu0
        %v2955 = vadd.f32 %v2798, %v2954
        %v2956 = vpop.f32.mrb[0].mxu0
        %v2957 = vpop.f32.mrb[0].mxu0
        %v2958 = vadd.f32 %v2798, %v2957
        %v2959 = vpop.f32.mrb[0].mxu0
        %2960 = vmatprep.mubr.bf16.mxu0 0
        %2961 = vmatmul.mubr.bf16.gmra.mrb[0].mxu0 %v2659
        %v2962 = vpop.f32.mrb[0].mxu0
        %v2963 = vadd.f32 %v2798, %v2962
        %v2964 = vpop.f32.mrb[0].mxu0
        %v2965 = vpop.f32.mrb[0].mxu0
        %v2966 = vadd.f32 %v2798, %v2965
        %v2967 = vpop.f32.mrb[0].mxu0
        %2968 = vmatprep.mubr.bf16.mxu0 0
        %2969 = vmatmul.mubr.bf16.gmra.mrb[0].mxu0 %v2660
        %v2970 = vpop.f32.mrb[0].mxu0
        %v2971 = vadd.f32 %v2798, %v2970
        %v2972 = vpop.f32.mrb[0].mxu0
        %v2973 = vpop.f32.mrb[0].mxu0
        %v2974 = vadd.f32 %v2798, %v2973
        %v2975 = vpop.f32.mrb[0].mxu0
        %2976 = vmatprep.mubr.bf16.mxu0 0
        %2977 = vmatmul.mubr.bf16.gmra.mrb[0].mxu0 %v2661
        %v2978 = vpop.f32.mrb[0].mxu0
        %v2979 = vadd.f32 %v2798, %v2978
        %v2980 = vpop.f32.mrb[0].mxu0
        %v2981 = vpop.f32.mrb[0].mxu0
        %v2982 = vadd.f32 %v2798, %v2981
        %v2983 = vpop.f32.mrb[0].mxu0
        %2984 = vmatprep.mubr.bf16.mxu0 0
        %2985 = vmatmul.mubr.bf16.gmra.mrb[0].mxu0 %v2662
        %v2986 = vpop.f32.mrb[0].mxu0
        %v2987 = vadd.f32 %v2798, %v2986
        %v2988 = vpop.f32.mrb[0].mxu0
        %v2989 = vpop.f32.mrb[0].mxu0
        %v2990 = vadd.f32 %v2798, %v2989
        %v2991 = vpop.f32.mrb[0].mxu0
        %2992 = vmatprep.mubr.bf16.mxu0 0
        %2993 = vmatmul.mubr.bf16.gmra.mrb[0].mxu0 %v2663
        %v2994 = vpop.f32.mrb[0].mxu0
        %v2995 = vadd.f32 %v2798, %v2994
        %v2996 = vpop.f32.mrb[0].mxu0
        %v2997 = vpop.f32.mrb[0].mxu0
        %v2998 = vadd.f32 %v2798, %v2997
        %v2999 = vpop.f32.mrb[0].mxu0
        %3000 = vmatprep.mubr.bf16.mxu0 0
        %3001 = vmatmul.mubr.bf16.gmra.mrb[0].mxu0 %v2664
        %v3002 = vpop.f32.mrb[0].mxu0
        %v3003 = vadd.f32 %v2798, %v3002
        %v3004 = vpop.f32.mrb[0].mxu0
        %v3005 = vpop.f32.mrb[0].mxu0
        %v3006 = vadd.f32 %v2798, %v3005
        %v3007 = vpop.f32.mrb[0].mxu0
        %3008 = vmatprep.mubr.bf16.mxu0 0
        %3009 = vmatmul.mubr.bf16.gmra.mrb[0].mxu0 %v2665
        %v3010 = vpop.f32.mrb[0].mxu0
        %v3011 = vadd.f32 %v2798, %v3010
        %v3012 = vpop.f32.mrb[0].mxu0
        %v3013 = vpop.f32.mrb[0].mxu0
        %v3014 = vadd.f32 %v2798, %v3013
        %v3015 = vpop.f32.mrb[0].mxu0
        %3016 = vmatprep.mubr.bf16.mxu0 0
        %3017 = vmatmul.mubr.bf16.gmra.mrb[0].mxu0 %v2666
        %v3018 = vpop.f32.mrb[0].mxu0
        %v3019 = vadd.f32 %v2798, %v3018
        %v3020 = vpop.f32.mrb[0].mxu0
        %v3021 = vpop.f32.mrb[0].mxu0
        %v3022 = vadd.f32 %v2798, %v3021
        %v3023 = vpop.f32.mrb[0].mxu0
        %3024 = vmatprep.mubr.bf16.mxu0 0
        %3025 = vmatmul.mubr.bf16.gmra.mrb[0].mxu0 %v2667
        %v3026 = vpop.f32.mrb[0].mxu0
        %v3027 = vadd.f32 %v2798, %v3026
        %v3028 = vpop.f32.mrb[0].mxu0
        %v3029 = vpop.f32.mrb[0].mxu0
        %v3030 = vadd.f32 %v2798, %v3029
        %v3031 = vpop.f32.mrb[0].mxu0
        %3032 = vmatprep.mubr.bf16.mxu0 0
        %3033 = vmatmul.mubr.bf16.gmra.mrb[0].mxu0 %v2668
        %v3034 = vpop.f32.mrb[0].mxu0
        %v3035 = vadd.f32 %v2798, %v3034
        %v3036 = vpop.f32.mrb[0].mxu0
        %v3037 = vpop.f32.mrb[0].mxu0
        %v3038 = vadd.f32 %v2798, %v3037
        %v3039 = vpop.f32.mrb[0].mxu0
        %3040 = vmatprep.mubr.bf16.mxu0 0
        %3041 = vmatmul.mubr.bf16.gmra.mrb[0].mxu0 %v2669
        %v3042 = vpop.f32.mrb[0].mxu0
        %v3043 = vadd.f32 %v2798, %v3042
        %v3044 = vpop.f32.mrb[0].mxu0
        %v3045 = vpop.f32.mrb[0].mxu0
        %v3046 = vadd.f32 %v2798, %v3045
        %v3047 = vpop.f32.mrb[0].mxu0
        %3048 = vmatprep.mubr.bf16.mxu0 0
        %3049 = vmatmul.mubr.bf16.gmra.mrb[0].mxu0 %v2670
        %v3050 = vpop.f32.mrb[0].mxu0
        %v3051 = vadd.f32 %v2798, %v3050
        %v3052 = vpop.f32.mrb[0].mxu0
        %v3053 = vpop.f32.mrb[0].mxu0
        %v3054 = vadd.f32 %v2798, %v3053
        %v3055 = vpop.f32.mrb[0].mxu0
        %3056 = vmatprep.mubr.bf16.mxu0 0
        %3057 = vmatmul.mubr.bf16.gmra.mrb[0].mxu0 %v2671
        %v3058 = vpop.f32.mrb[0].mxu0
        %v3059 = vadd.f32 %v2798, %v3058
        %v3060 = vpop.f32.mrb[0].mxu0
        %v3061 = vpop.f32.mrb[0].mxu0
        %v3062 = vadd.f32 %v2798, %v3061
        %v3063 = vpop.f32.mrb[0].mxu0
        %3064 = vmatprep.mubr.bf16.mxu0 0
        %3065 = vmatmul.mubr.bf16.gmra.mrb[0].mxu0 %v2672
        %v3066 = vpop.f32.mrb[0].mxu0
        %v3067 = vadd.f32 %v2798, %v3066
        %v3068 = vpop.f32.mrb[0].mxu0
        %v3069 = vpop.f32.mrb[0].mxu0
        %v3070 = vadd.f32 %v2798, %v3069
        %v3071 = vpop.f32.mrb[0].mxu0
        %3072 = vmatprep.mubr.bf16.mxu0 0
        %3073 = vmatmul.mubr.bf16.gmra.mrb[0].mxu0 %v2673
        %v3074 = vpop.f32.mrb[0].mxu0
        %v3075 = vadd.f32 %v2798, %v3074
        %v3076 = vpop.f32.mrb[0].mxu0
        %v3077 = vpop.f32.mrb[0].mxu0
        %v3078 = vadd.f32 %v2798, %v3077
        %v3079 = vpop.f32.mrb[0].mxu0
        %3080 = vmatprep.mubr.bf16.mxu0 0
        %3081 = vmatmul.mubr.bf16.gmra.mrb[0].mxu0 %v2674
        %v3082 = vpop.f32.mrb[0].mxu0
        %v3083 = vadd.f32 %v2798, %v3082
        %v3084 = vpop.f32.mrb[0].mxu0
        %v3085 = vpop.f32.mrb[0].mxu0
        %v3086 = vadd.f32 %v2798, %v3085
        %v3087 = vpop.f32.mrb[0].mxu0
        %3088 = vmatprep.mubr.bf16.mxu0 0
        %3089 = vmatmul.mubr.bf16.gmra.mrb[0].mxu0 %v2675
        %v3090 = vpop.f32.mrb[0].mxu0
        %v3091 = vadd.f32 %v2798, %v3090
        %v3092 = vpop.f32.mrb[0].mxu0
        %v3093 = vpop.f32.mrb[0].mxu0
        %v3094 = vadd.f32 %v2798, %v3093
        %v3095 = vpop.f32.mrb[0].mxu0
        %3096 = vmatprep.mubr.bf16.mxu0 0
        %3097 = vmatmul.mubr.bf16.gmra.mrb[0].mxu0 %v2676
        %v3098 = vpop.f32.mrb[0].mxu0
        %v3099 = vadd.f32 %v2798, %v3098
        %v3100 = vpop.f32.mrb[0].mxu0
        %v3101 = vpop.f32.mrb[0].mxu0
        %v3102 = vadd.f32 %v2798, %v3101
        %v3103 = vpop.f32.mrb[0].mxu0
        %3104 = vmatprep.mubr.bf16.mxu0 0
        %3105 = vmatmul.mubr.bf16.gmra.mrb[0].mxu0 %v2677
        %v3106 = vpop.f32.mrb[0].mxu0
        %v3107 = vadd.f32 %v2798, %v3106
        %v3108 = vpop.f32.mrb[0].mxu0
        %v3109 = vpop.f32.mrb[0].mxu0
        %v3110 = vadd.f32 %v2798, %v3109
        %v3111 = vpop.f32.mrb[0].mxu0
        %3112 = vmatprep.mubr.bf16.mxu0 0
        %3113 = vmatmul.mubr.bf16.gmra.mrb[0].mxu0 %v2678
        %v3114 = vpop.f32.mrb[0].mxu0
        %v3115 = vadd.f32 %v2798, %v3114
        %v3116 = vpop.f32.mrb[0].mxu0
        %v3117 = vpop.f32.mrb[0].mxu0
        %v3118 = vadd.f32 %v2798, %v3117
        %v3119 = vpop.f32.mrb[0].mxu0
        %3120 = vmatprep.mubr.bf16.mxu0 0
        %3121 = vmatmul.mubr.bf16.gmra.mrb[0].mxu0 %v2679
        %v3122 = vpop.f32.mrb[0].mxu0
        %v3123 = vadd.f32 %v2798, %v3122
        %v3124 = vpop.f32.mrb[0].mxu0
        %v3125 = vpop.f32.mrb[0].mxu0
        %v3126 = vadd.f32 %v2798, %v3125
        %v3127 = vpop.f32.mrb[0].mxu0
        %3128 = vmatprep.mubr.bf16.mxu0 0
        %3129 = vmatmul.mubr.bf16.gmra.mrb[0].mxu0 %v2680
        %v3130 = vpop.f32.mrb[0].mxu0
        %v3131 = vadd.f32 %v2798, %v3130
        %v3132 = vpop.f32.mrb[0].mxu0
        %v3133 = vpop.f32.mrb[0].mxu0
        %v3134 = vadd.f32 %v2798, %v3133
        %v3135 = vpop.f32.mrb[0].mxu0
        %3136 = vmatprep.mubr.bf16.mxu0 0
        %3137 = vmatmul.mubr.bf16.gmra.mrb[0].mxu0 %v2681
        %v3138 = vpop.f32.mrb[0].mxu0
        %v3139 = vadd.f32 %v2798, %v3138
        %v3140 = vpop.f32.mrb[0].mxu0
        %v3141 = vpop.f32.mrb[0].mxu0
        %v3142 = vadd.f32 %v2798, %v3141
        %v3143 = vpop.f32.mrb[0].mxu0
        %3144 = vmatprep.mubr.bf16.mxu0 0
        %3145 = vmatmul.mubr.bf16.gmra.mrb[0].mxu0 %v2682
        %v3146 = vpop.f32.mrb[0].mxu0
        %v3147 = vadd.f32 %v2798, %v3146
        %v3148 = vpop.f32.mrb[0].mxu0
        %v3149 = vpop.f32.mrb[0].mxu0
        %v3150 = vadd.f32 %v2798, %v3149
        %v3151 = vpop.f32.mrb[0].mxu0
        %3152 = vmatprep.mubr.bf16.mxu0 0
        %3153 = vmatmul.mubr.bf16.gmra.mrb[0].mxu0 %v2683
        %v3154 = vpop.f32.mrb[0].mxu0
        %v3155 = vadd.f32 %v2798, %v3154
        %v3156 = vpop.f32.mrb[0].mxu0
        %v3157 = vpop.f32.mrb[0].mxu0
        %v3158 = vadd.f32 %v2798, %v3157
        %v3159 = vpop.f32.mrb[0].mxu0
        %3160 = vmatprep.mubr.bf16.mxu0 0
        %3161 = vmatmul.mubr.bf16.gmra.mrb[0].mxu0 %v2684
        %v3162 = vpop.f32.mrb[0].mxu0
        %v3163 = vadd.f32 %v2798, %v3162
        %v3164 = vpop.f32.mrb[0].mxu0
        %v3165 = vpop.f32.mrb[0].mxu0
        %v3166 = vadd.f32 %v2798, %v3165
        %v3167 = vpop.f32.mrb[0].mxu0
        %3168 = vmatprep.mubr.bf16.mxu0 0
        %3169 = vmatmul.mubr.bf16.gmra.mrb[0].mxu0 %v2685
        %v3170 = vpop.f32.mrb[0].mxu0
        %v3171 = vadd.f32 %v2798, %v3170
        %v3172 = vpop.f32.mrb[0].mxu0
        %v3173 = vpop.f32.mrb[0].mxu0
        %v3174 = vadd.f32 %v2798, %v3173
        %v3175 = vpop.f32.mrb[0].mxu0
        %3176 = vmatprep.mubr.bf16.mxu0 0
        %3177 = vmatmul.mubr.bf16.gmra.mrb[0].mxu0 %v2686
        %v3178 = vpop.f32.mrb[0].mxu0
        %v3179 = vadd.f32 %v2798, %v3178
        %v3180 = vpop.f32.mrb[0].mxu0
        %v3181 = vpop.f32.mrb[0].mxu0
        %v3182 = vadd.f32 %v2798, %v3181
        %v3183 = vpop.f32.mrb[0].mxu0
        %3184 = vmatprep.mubr.bf16.mxu0 0
        %3185 = vmatmul.mubr.bf16.gmra.mrb[0].mxu0 %v2687
        %v3186 = vpop.f32.mrb[0].mxu0
        %v3187 = vadd.f32 %v2798, %v3186
        %v3188 = vpop.f32.mrb[0].mxu0
        %v3189 = vpop.f32.mrb[0].mxu0
        %v3190 = vadd.f32 %v2798, %v3189
        %v3191 = vpop.f32.mrb[0].mxu0
        %3192 = vmatprep.mubr.bf16.mxu0 0
        %3193 = vmatmul.mubr.bf16.gmra.mrb[0].mxu0 %v2688
        %v3194 = vpop.f32.mrb[0].mxu0
        %v3195 = vadd.f32 %v2798, %v3194
        %v3196 = vpop.f32.mrb[0].mxu0
        %v3197 = vpop.f32.mrb[0].mxu0
        %v3198 = vadd.f32 %v2798, %v3197
        %v3199 = vpop.f32.mrb[0].mxu0
        %3200 = vmatprep.mubr.bf16.mxu0 0
        %3201 = vmatmul.mubr.bf16.gmra.mrb[0].mxu0 %v2689
        %v3202 = vpop.f32.mrb[0].mxu0
        %v3203 = vadd.f32 %v2798, %v3202
        %v3204 = vpop.f32.mrb[0].mxu0
        %v3205 = vpop.f32.mrb[0].mxu0
        %v3206 = vadd.f32 %v2798, %v3205
        %v3207 = vpop.f32.mrb[0].mxu0
        %3208 = vmatprep.mubr.bf16.mxu0 0
        %3209 = vmatmul.mubr.bf16.gmra.mrb[0].mxu0 %v2690
        %v3210 = vpop.f32.mrb[0].mxu0
        %v3211 = vadd.f32 %v2798, %v3210
        %v3212 = vpop.f32.mrb[0].mxu0
        %v3213 = vpop.f32.mrb[0].mxu0
        %v3214 = vadd.f32 %v2798, %v3213
        %v3215 = vpop.f32.mrb[0].mxu0
        %3216 = vmatprep.mubr.bf16.mxu0 0
        %3217 = vmatmul.mubr.bf16.gmra.mrb[0].mxu0 %v2691
        %v3218 = vpop.f32.mrb[0].mxu0
        %v3219 = vadd.f32 %v2798, %v3218
        %v3220 = vpop.f32.mrb[0].mxu0
        %v3221 = vpop.f32.mrb[0].mxu0
        %v3222 = vadd.f32 %v2798, %v3221
        %v3223 = vpop.f32.mrb[0].mxu0
        %3224 = vmatprep.mubr.bf16.mxu0 0
        %3225 = vmatmul.mubr.bf16.gmra.mrb[0].mxu0 %v2692
        %v3226 = vpop.f32.mrb[0].mxu0
        %v3227 = vadd.f32 %v2798, %v3226
        %v3228 = vpop.f32.mrb[0].mxu0
        %v3229 = vpop.f32.mrb[0].mxu0
        %v3230 = vadd.f32 %v2798, %v3229
        %v3231 = vpop.f32.mrb[0].mxu0
        %3232 = vmatprep.mubr.bf16.mxu0 0
        %3233 = vmatmul.mubr.bf16.gmra.mrb[0].mxu0 %v2693
        %v3234 = vpop.f32.mrb[0].mxu0
        %v3235 = vadd.f32 %v2798, %v3234
        %v3236 = vpop.f32.mrb[0].mxu0
        %v3237 = vpop.f32.mrb[0].mxu0
        %v3238 = vadd.f32 %v2798, %v3237
        %v3239 = vpop.f32.mrb[0].mxu0
        %3240 = vmatprep.mubr.bf16.mxu0 0
        %3241 = vmatmul.mubr.bf16.gmra.mrb[0].mxu0 %v2694
        %v3242 = vpop.f32.mrb[0].mxu0
        %v3243 = vadd.f32 %v2798, %v3242
        %v3244 = vpop.f32.mrb[0].mxu0
        %v3245 = vpop.f32.mrb[0].mxu0
        %v3246 = vadd.f32 %v2798, %v3245
        %v3247 = vpop.f32.mrb[0].mxu0
        %3248 = vmatprep.mubr.bf16.mxu0 0
        %3249 = vmatmul.mubr.bf16.gmra.mrb[0].mxu0 %v2695
        %v3250 = vpop.f32.mrb[0].mxu0
        %v3251 = vadd.f32 %v2798, %v3250
        %v3252 = vpop.f32.mrb[0].mxu0
        %v3253 = vpop.f32.mrb[0].mxu0
        %v3254 = vadd.f32 %v2798, %v3253
        %v3255 = vpop.f32.mrb[0].mxu0
        %3256 = vmatprep.mubr.bf16.mxu0 0
        %3257 = vmatmul.mubr.bf16.gmra.mrb[0].mxu0 %v2696
        %v3258 = vpop.f32.mrb[0].mxu0
        %v3259 = vadd.f32 %v2798, %v3258
        %v3260 = vpop.f32.mrb[0].mxu0
        %v3261 = vpop.f32.mrb[0].mxu0
        %v3262 = vadd.f32 %v2798, %v3261
        %v3263 = vpop.f32.mrb[0].mxu0
        %3264 = vmatprep.mubr.bf16.mxu0 0
        %3265 = vmatmul.mubr.bf16.gmra.mrb[0].mxu0 %v2697
        %v3266 = vpop.f32.mrb[0].mxu0
        %v3267 = vadd.f32 %v2798, %v3266
        %v3268 = vpop.f32.mrb[0].mxu0
        %v3269 = vpop.f32.mrb[0].mxu0
        %v3270 = vadd.f32 %v2798, %v3269
        %v3271 = vpop.f32.mrb[0].mxu0
        %3272 = vmatprep.mubr.bf16.mxu0 0
        %3273 = vmatmul.mubr.bf16.gmra.mrb[0].mxu0 %v2698
        %v3274 = vpop.f32.mrb[0].mxu0
        %v3275 = vadd.f32 %v2798, %v3274
        %v3276 = vpop.f32.mrb[0].mxu0
        %v3277 = vpop.f32.mrb[0].mxu0
        %v3278 = vadd.f32 %v2798, %v3277
        %v3279 = vpop.f32.mrb[0].mxu0
        %3280 = vmatprep.mubr.bf16.mxu0 0
        %3281 = vmatmul.mubr.bf16.gmra.mrb[0].mxu0 %v2699
        %v3282 = vpop.f32.mrb[0].mxu0
        %v3283 = vadd.f32 %v2798, %v3282
        %v3284 = vpop.f32.mrb[0].mxu0
        %v3285 = vpop.f32.mrb[0].mxu0
        %v3286 = vadd.f32 %v2798, %v3285
        %v3287 = vpop.f32.mrb[0].mxu0
        %3288 = vmatprep.mubr.bf16.mxu0 0
        %3289 = vmatmul.mubr.bf16.gmra.mrb[0].mxu0 %v2700
        %v3290 = vpop.f32.mrb[0].mxu0
        %v3291 = vadd.f32 %v2798, %v3290
        %v3292 = vpop.f32.mrb[0].mxu0
        %v3293 = vpop.f32.mrb[0].mxu0
        %v3294 = vadd.f32 %v2798, %v3293
        %v3295 = vpop.f32.mrb[0].mxu0
        %3296 = vmatprep.mubr.bf16.mxu0 0
        %3297 = vmatmul.mubr.bf16.gmra.mrb[0].mxu0 %v2701
        %v3298 = vpop.f32.mrb[0].mxu0
        %v3299 = vadd.f32 %v2798, %v3298
        %v3300 = vpop.f32.mrb[0].mxu0
        %v3301 = vpop.f32.mrb[0].mxu0
        %v3302 = vadd.f32 %v2798, %v3301
        %v3303 = vpop.f32.mrb[0].mxu0
        %3304 = vmatprep.mubr.bf16.mxu0 0
        %3305 = vmatmul.mubr.bf16.gmra.mrb[0].mxu0 %v2702
        %v3306 = vpop.f32.mrb[0].mxu0
        %v3307 = vadd.f32 %v2798, %v3306
        %v3308 = vpop.f32.mrb[0].mxu0
        %v3309 = vpop.f32.mrb[0].mxu0
        %v3310 = vadd.f32 %v2798, %v3309
        %v3311 = vpop.f32.mrb[0].mxu0
        %3312 = vmatprep.mubr.bf16.mxu0 0
        %3313 = vmatmul.mubr.bf16.gmra.mrb[0].mxu0 %v2703
        %v3314 = vpop.f32.mrb[0].mxu0
        %v3315 = vadd.f32 %v2798, %v3314
        %v3316 = vpop.f32.mrb[0].mxu0
        %v3317 = vpop.f32.mrb[0].mxu0
        %v3318 = vadd.f32 %v2798, %v3317
        %v3319 = vpop.f32.mrb[0].mxu0
        %3320 = vmatprep.mubr.bf16.mxu0 0
        %3321 = vmatmul.mubr.bf16.gmra.mrb[0].mxu0 %v2704
        %v3322 = vpop.f32.mrb[0].mxu0
        %v3323 = vadd.f32 %v2798, %v3322
        %v3324 = vpop.f32.mrb[0].mxu0
        %v3325 = vpop.f32.mrb[0].mxu0
        %v3326 = vadd.f32 %v2798, %v3325
        %v3327 = vpop.f32.mrb[0].mxu0
        %3328 = vmatprep.mubr.bf16.mxu0 0
        %3329 = vmatmul.mubr.bf16.gmra.mrb[0].mxu0 %v2705
        %v3330 = vpop.f32.mrb[0].mxu0
        %v3331 = vadd.f32 %v2798, %v3330
        %v3332 = vpop.f32.mrb[0].mxu0
        %v3333 = vpop.f32.mrb[0].mxu0
        %v3334 = vadd.f32 %v2798, %v3333
        %v3335 = vpop.f32.mrb[0].mxu0
        %3336 = vmatprep.mubr.bf16.mxu0 0
        %3337 = vmatmul.mubr.bf16.gmra.mrb[0].mxu0 %v2706
        %v3338 = vpop.f32.mrb[0].mxu0
        %v3339 = vadd.f32 %v2798, %v3338
        %v3340 = vpop.f32.mrb[0].mxu0
        %v3341 = vpop.f32.mrb[0].mxu0
        %v3342 = vadd.f32 %v2798, %v3341
        %v3343 = vpop.f32.mrb[0].mxu0
        %3344 = vmatprep.mubr.bf16.mxu0 0
        %3345 = vmatmul.mubr.bf16.gmra.mrb[0].mxu0 %v2707
        %v3346 = vpop.f32.mrb[0].mxu0
        %v3347 = vadd.f32 %v2798, %v3346
        %v3348 = vpop.f32.mrb[0].mxu0
        %v3349 = vpop.f32.mrb[0].mxu0
        %v3350 = vadd.f32 %v2798, %v3349
        %v3351 = vpop.f32.mrb[0].mxu0
        %3352 = vmatprep.mubr.bf16.mxu0 0
        %3353 = vmatmul.mubr.bf16.gmra.mrb[0].mxu0 %v2708
        %v3354 = vpop.f32.mrb[0].mxu0
        %v3355 = vadd.f32 %v2798, %v3354
        %v3356 = vpop.f32.mrb[0].mxu0
        %v3357 = vpop.f32.mrb[0].mxu0
        %v3358 = vadd.f32 %v2798, %v3357
        %v3359 = vpop.f32.mrb[0].mxu0
        %3360 = vmatprep.mubr.bf16.mxu0 0
        %3361 = vmatmul.mubr.bf16.gmra.mrb[0].mxu0 %v2709
        %v3362 = vpop.f32.mrb[0].mxu0
        %v3363 = vadd.f32 %v2798, %v3362
        %v3364 = vpop.f32.mrb[0].mxu0
        %v3365 = vpop.f32.mrb[0].mxu0
        %v3366 = vadd.f32 %v2798, %v3365
        %v3367 = vpop.f32.mrb[0].mxu0
        %3368 = vmatprep.mubr.bf16.mxu0 0
        %3369 = vmatmul.mubr.bf16.gmra.mrb[0].mxu0 %v2710
        %v3370 = vpop.f32.mrb[0].mxu0
        %v3371 = vadd.f32 %v2798, %v3370
        %v3372 = vpop.f32.mrb[0].mxu0
        %v3373 = vpop.f32.mrb[0].mxu0
        %v3374 = vadd.f32 %v2798, %v3373
        %v3375 = vpop.f32.mrb[0].mxu0
        %3376 = vmatprep.mubr.bf16.mxu0 0
        %3377 = vmatmul.mubr.bf16.gmra.mrb[0].mxu0 %v2711
        %v3378 = vpop.f32.mrb[0].mxu0
        %v3379 = vadd.f32 %v2798, %v3378
        %v3380 = vpop.f32.mrb[0].mxu0
        %v3381 = vpop.f32.mrb[0].mxu0
        %v3382 = vadd.f32 %v2798, %v3381
        %v3383 = vpop.f32.mrb[0].mxu0
        %3384 = vmatprep.mubr.bf16.mxu0 0
        %3385 = vmatmul.mubr.bf16.gmra.mrb[0].mxu0 %v2712
        %v3386 = vpop.f32.mrb[0].mxu0
        %v3387 = vadd.f32 %v2798, %v3386
        %v3388 = vpop.f32.mrb[0].mxu0
        %v3389 = vpop.f32.mrb[0].mxu0
        %v3390 = vadd.f32 %v2798, %v3389
        %v3391 = vpop.f32.mrb[0].mxu0
        %3392 = vmatprep.mubr.bf16.mxu0 0
        %3393 = vmatmul.mubr.bf16.gmra.mrb[0].mxu0 %v2713
        %v3394 = vpop.f32.mrb[0].mxu0
        %v3395 = vadd.f32 %v2798, %v3394
        %v3396 = vpop.f32.mrb[0].mxu0
        %v3397 = vpop.f32.mrb[0].mxu0
        %v3398 = vadd.f32 %v2798, %v3397
        %v3399 = vpop.f32.mrb[0].mxu0
        %3400 = vmatprep.mubr.bf16.mxu0 0
        %3401 = vmatmul.mubr.bf16.gmra.mrb[0].mxu0 %v2714
        %v3402 = vpop.f32.mrb[0].mxu0
        %v3403 = vadd.f32 %v2798, %v3402
        %v3404 = vpop.f32.mrb[0].mxu0
        %v3405 = vpop.f32.mrb[0].mxu0
        %v3406 = vadd.f32 %v2798, %v3405
        %v3407 = vpop.f32.mrb[0].mxu0
        %3408 = vmatprep.mubr.bf16.mxu0 0
        %3409 = vmatmul.mubr.bf16.gmra.mrb[0].mxu0 %v2715
        %v3410 = vpop.f32.mrb[0].mxu0
        %v3411 = vadd.f32 %v2798, %v3410
        %v3412 = vpop.f32.mrb[0].mxu0
        %v3413 = vpop.f32.mrb[0].mxu0
        %v3414 = vadd.f32 %v2798, %v3413
        %v3415 = vpop.f32.mrb[0].mxu0
        %3416 = vmatprep.mubr.bf16.mxu0 0
        %3417 = vmatmul.mubr.bf16.gmra.mrb[0].mxu0 %v2716
        %v3418 = vpop.f32.mrb[0].mxu0
        %v3419 = vadd.f32 %v2798, %v3418
        %v3420 = vpop.f32.mrb[0].mxu0
        %v3421 = vpop.f32.mrb[0].mxu0
        %v3422 = vadd.f32 %v2798, %v3421
        %v3423 = vpop.f32.mrb[0].mxu0
        %3424 = vmatprep.mubr.bf16.mxu0 0
        %3425 = vmatmul.mubr.bf16.gmra.mrb[0].mxu0 %v2717
        %v3426 = vpop.f32.mrb[0].mxu0
        %v3427 = vadd.f32 %v2798, %v3426
        %v3428 = vpop.f32.mrb[0].mxu0
        %v3429 = vpop.f32.mrb[0].mxu0
        %v3430 = vadd.f32 %v2798, %v3429
        %v3431 = vpop.f32.mrb[0].mxu0
        %3432 = vmatprep.mubr.bf16.mxu0 0
        %3433 = vmatmul.mubr.bf16.gmra.mrb[0].mxu0 %v2718
        %v3434 = vpop.f32.mrb[0].mxu0
        %v3435 = vadd.f32 %v2798, %v3434
        %v3436 = vpop.f32.mrb[0].mxu0
        %v3437 = vpop.f32.mrb[0].mxu0
        %v3438 = vadd.f32 %v2798, %v3437
        %v3439 = vpop.f32.mrb[0].mxu0
        %3440 = vmatprep.mubr.bf16.mxu0 0
        %3441 = vmatmul.mubr.bf16.gmra.mrb[0].mxu0 %v2719
        %v3442 = vpop.f32.mrb[0].mxu0
        %v3443 = vadd.f32 %v2798, %v3442
        %v3444 = vpop.f32.mrb[0].mxu0
        %v3445 = vpop.f32.mrb[0].mxu0
        %v3446 = vadd.f32 %v2798, %v3445
        %v3447 = vpop.f32.mrb[0].mxu0
        %3448 = vmatprep.mubr.bf16.mxu0 0
        %3449 = vmatmul.mubr.bf16.gmra.mrb[0].mxu0 %v2720
        %v3450 = vpop.f32.mrb[0].mxu0
        %v3451 = vadd.f32 %v2798, %v3450
        %v3452 = vpop.f32.mrb[0].mxu0
        %v3453 = vpop.f32.mrb[0].mxu0
        %v3454 = vadd.f32 %v2798, %v3453
        %v3455 = vpop.f32.mrb[0].mxu0
        %3456 = vmatprep.mubr.bf16.mxu0 0
        %3457 = vmatmul.mubr.bf16.gmra.mrb[0].mxu0 %v2721
        %v3458 = vpop.f32.mrb[0].mxu0
        %v3459 = vadd.f32 %v2798, %v3458
        %v3460 = vpop.f32.mrb[0].mxu0
        %v3461 = vpop.f32.mrb[0].mxu0
        %v3462 = vadd.f32 %v2798, %v3461
        %v3463 = vpop.f32.mrb[0].mxu0
        %3464 = vmatprep.mubr.bf16.mxu0 0
        %3465 = vmatmul.mubr.bf16.gmra.mrb[0].mxu0 %v2722
        %v3466 = vpop.f32.mrb[0].mxu0
        %v3467 = vadd.f32 %v2798, %v3466
        %v3468 = vpop.f32.mrb[0].mxu0
        %v3469 = vpop.f32.mrb[0].mxu0
        %v3470 = vadd.f32 %v2798, %v3469
        %v3471 = vpop.f32.mrb[0].mxu0
        %3472 = vmatprep.mubr.bf16.mxu0 0
        %3473 = vmatmul.mubr.bf16.gmra.mrb[0].mxu0 %v2723
        %v3474 = vpop.f32.mrb[0].mxu0
        %v3475 = vadd.f32 %v2798, %v3474
        %v3476 = vpop.f32.mrb[0].mxu0
        %v3477 = vpop.f32.mrb[0].mxu0
        %v3478 = vadd.f32 %v2798, %v3477
        %v3479 = vpop.f32.mrb[0].mxu0
        %3480 = vmatprep.mubr.bf16.mxu0 0
        %3481 = vmatmul.mubr.bf16.gmra.mrb[0].mxu0 %v2724
        %v3482 = vpop.f32.mrb[0].mxu0
        %v3483 = vadd.f32 %v2798, %v3482
        %v3484 = vpop.f32.mrb[0].mxu0
        %v3485 = vpop.f32.mrb[0].mxu0
        %v3486 = vadd.f32 %v2798, %v3485
        %v3487 = vpop.f32.mrb[0].mxu0
        %3488 = vmatprep.mubr.bf16.mxu0 0
        %3489 = vmatmul.mubr.bf16.gmra.mrb[0].mxu0 %v2725
        %v3490 = vpop.f32.mrb[0].mxu0
        %v3491 = vadd.f32 %v2798, %v3490
        %v3492 = vpop.f32.mrb[0].mxu0
        %v3493 = vpop.f32.mrb[0].mxu0
        %v3494 = vadd.f32 %v2798, %v3493
        %v3495 = vpop.f32.mrb[0].mxu0
        %3496 = vmatprep.mubr.bf16.mxu0 0
        %3497 = vmatmul.mubr.bf16.gmra.mrb[0].mxu0 %v2726
        %v3498 = vpop.f32.mrb[0].mxu0
        %v3499 = vadd.f32 %v2798, %v3498
        %v3500 = vpop.f32.mrb[0].mxu0
        %v3501 = vpop.f32.mrb[0].mxu0
        %v3502 = vadd.f32 %v2798, %v3501
        %v3503 = vpop.f32.mrb[0].mxu0
        %3504 = vmatprep.mubr.bf16.mxu0 0
        %3505 = vmatmul.mubr.bf16.gmra.mrb[0].mxu0 %v2727
        %v3506 = vpop.f32.mrb[0].mxu0
        %v3507 = vadd.f32 %v2798, %v3506
        %v3508 = vpop.f32.mrb[0].mxu0
        %v3509 = vpop.f32.mrb[0].mxu0
        %v3510 = vadd.f32 %v2798, %v3509
        %v3511 = vpop.f32.mrb[0].mxu0
        %3512 = vmatprep.mubr.bf16.mxu0 0
        %3513 = vmatmul.mubr.bf16.gmra.mrb[0].mxu0 %v2728
        %v3514 = vpop.f32.mrb[0].mxu0
        %v3515 = vadd.f32 %v2798, %v3514
        %v3516 = vpop.f32.mrb[0].mxu0
        %v3517 = vpop.f32.mrb[0].mxu0
        %v3518 = vadd.f32 %v2798, %v3517
        %v3519 = vpop.f32.mrb[0].mxu0
        %3520 = vmatprep.mubr.bf16.mxu0 0
        %3521 = vmatmul.mubr.bf16.gmra.mrb[0].mxu0 %v2729
        %v3522 = vpop.f32.mrb[0].mxu0
        %v3523 = vadd.f32 %v2798, %v3522
        %v3524 = vpop.f32.mrb[0].mxu0
        %v3525 = vpop.f32.mrb[0].mxu0
        %v3526 = vadd.f32 %v2798, %v3525
        %v3527 = vpop.f32.mrb[0].mxu0
        %3528 = vmatprep.mubr.bf16.mxu0 0
        %3529 = vmatmul.mubr.bf16.gmra.mrb[0].mxu0 %v2730
        %v3530 = vpop.f32.mrb[0].mxu0
        %v3531 = vadd.f32 %v2798, %v3530
        %v3532 = vpop.f32.mrb[0].mxu0
        %v3533 = vpop.f32.mrb[0].mxu0
        %v3534 = vadd.f32 %v2798, %v3533
        %v3535 = vpop.f32.mrb[0].mxu0
        %3536 = vmatprep.mubr.bf16.mxu0 0
        %3537 = vmatmul.mubr.bf16.gmra.mrb[0].mxu0 %v2731
        %v3538 = vpop.f32.mrb[0].mxu0
        %v3539 = vadd.f32 %v2798, %v3538
        %v3540 = vpop.f32.mrb[0].mxu0
        %v3541 = vpop.f32.mrb[0].mxu0
        %v3542 = vadd.f32 %v2798, %v3541
        %v3543 = vpop.f32.mrb[0].mxu0
        %3544 = vmatprep.mubr.bf16.mxu0 0
        %3545 = vmatmul.mubr.bf16.gmra.mrb[0].mxu0 %v2732
        %v3546 = vpop.f32.mrb[0].mxu0
        %v3547 = vadd.f32 %v2798, %v3546
        %v3548 = vpop.f32.mrb[0].mxu0
        %v3549 = vpop.f32.mrb[0].mxu0
        %v3550 = vadd.f32 %v2798, %v3549
        %v3551 = vpop.f32.mrb[0].mxu0
        %3552 = vmatprep.mubr.bf16.mxu0 0
        %3553 = vmatmul.mubr.bf16.gmra.mrb[0].mxu0 %v2733
        %v3554 = vpop.f32.mrb[0].mxu0
        %v3555 = vadd.f32 %v2798, %v3554
        %v3556 = vpop.f32.mrb[0].mxu0
        %v3557 = vpop.f32.mrb[0].mxu0
        %v3558 = vadd.f32 %v2798, %v3557
        %v3559 = vpop.f32.mrb[0].mxu0
        %3560 = vmatprep.mubr.bf16.mxu0 0
        %3561 = vmatmul.mubr.bf16.gmra.mrb[0].mxu0 %v2734
        %v3562 = vpop.f32.mrb[0].mxu0
        %v3563 = vadd.f32 %v2798, %v3562
        %v3564 = vpop.f32.mrb[0].mxu0
        %v3565 = vpop.f32.mrb[0].mxu0
        %v3566 = vadd.f32 %v2798, %v3565
        %v3567 = vpop.f32.mrb[0].mxu0
        %3568 = vmatprep.mubr.bf16.mxu0 0
        %3569 = vmatmul.mubr.bf16.gmra.mrb[0].mxu0 %v2735
        %v3570 = vpop.f32.mrb[0].mxu0
        %v3571 = vadd.f32 %v2798, %v3570
        %v3572 = vpop.f32.mrb[0].mxu0
        %v3573 = vpop.f32.mrb[0].mxu0
        %v3574 = vadd.f32 %v2798, %v3573
        %v3575 = vpop.f32.mrb[0].mxu0
        %3576 = vmatprep.mubr.bf16.mxu0 0
        %3577 = vmatmul.mubr.bf16.gmra.mrb[0].mxu0 %v2736
        %v3578 = vpop.f32.mrb[0].mxu0
        %v3579 = vadd.f32 %v2798, %v3578
        %v3580 = vpop.f32.mrb[0].mxu0
        %v3581 = vpop.f32.mrb[0].mxu0
        %v3582 = vadd.f32 %v2798, %v3581
        %v3583 = vpop.f32.mrb[0].mxu0
        %3584 = vmatprep.mubr.bf16.mxu0 0
        %3585 = vmatmul.mubr.bf16.gmra.mrb[0].mxu0 %v2737
        %v3586 = vpop.f32.mrb[0].mxu0
        %v3587 = vadd.f32 %v2798, %v3586
        %v3588 = vpop.f32.mrb[0].mxu0
        %v3589 = vpop.f32.mrb[0].mxu0
        %v3590 = vadd.f32 %v2798, %v3589
        %v3591 = vpop.f32.mrb[0].mxu0
        %3592 = vmatprep.mubr.bf16.mxu0 0
        %3593 = vmatmul.mubr.bf16.gmra.mrb[0].mxu0 %v2738
        %v3594 = vpop.f32.mrb[0].mxu0
        %v3595 = vadd.f32 %v2798, %v3594
        %v3596 = vpop.f32.mrb[0].mxu0
        %v3597 = vpop.f32.mrb[0].mxu0
        %v3598 = vadd.f32 %v2798, %v3597
        %v3599 = vpop.f32.mrb[0].mxu0
        %3600 = vmatprep.mubr.bf16.mxu0 0
        %3601 = vmatmul.mubr.bf16.gmra.mrb[0].mxu0 %v2739
        %v3602 = vpop.f32.mrb[0].mxu0
        %v3603 = vadd.f32 %v2798, %v3602
        %v3604 = vpop.f32.mrb[0].mxu0
        %v3605 = vpop.f32.mrb[0].mxu0
        %v3606 = vadd.f32 %v2798, %v3605
        %v3607 = vpop.f32.mrb[0].mxu0
        %3608 = vmatprep.mubr.bf16.mxu0 0
        %3609 = vmatmul.mubr.bf16.gmra.mrb[0].mxu0 %v2740
        %v3610 = vpop.f32.mrb[0].mxu0
        %v3611 = vadd.f32 %v2798, %v3610
        %v3612 = vpop.f32.mrb[0].mxu0
        %v3613 = vpop.f32.mrb[0].mxu0
        %v3614 = vadd.f32 %v2798, %v3613
        %v3615 = vpop.f32.mrb[0].mxu0
        %3616 = vmatprep.mubr.bf16.mxu0 0
        %3617 = vmatmul.mubr.bf16.gmra.mrb[0].mxu0 %v2741
        %v3618 = vpop.f32.mrb[0].mxu0
        %v3619 = vadd.f32 %v2798, %v3618
        %v3620 = vpop.f32.mrb[0].mxu0
        %v3621 = vpop.f32.mrb[0].mxu0
        %v3622 = vadd.f32 %v2798, %v3621
        %v3623 = vpop.f32.mrb[0].mxu0
        %3624 = vmatprep.mubr.bf16.mxu0 0
        %3625 = vmatmul.mubr.bf16.gmra.mrb[0].mxu0 %v2742
        %v3626 = vpop.f32.mrb[0].mxu0
        %v3627 = vadd.f32 %v2798, %v3626
        %v3628 = vpop.f32.mrb[0].mxu0
        %v3629 = vpop.f32.mrb[0].mxu0
        %v3630 = vadd.f32 %v2798, %v3629
        %v3631 = vpop.f32.mrb[0].mxu0
        %3632 = vmatprep.mubr.bf16.mxu0 0
        %3633 = vmatmul.mubr.bf16.gmra.mrb[0].mxu0 %v2743
        %v3634 = vpop.f32.mrb[0].mxu0
        %v3635 = vadd.f32 %v2798, %v3634
        %v3636 = vpop.f32.mrb[0].mxu0
        %v3637 = vpop.f32.mrb[0].mxu0
        %v3638 = vadd.f32 %v2798, %v3637
        %v3639 = vpop.f32.mrb[0].mxu0
        %3640 = vmatprep.mubr.bf16.mxu0 0
        %3641 = vmatmul.mubr.bf16.gmra.mrb[0].mxu0 %v2744
        %v3642 = vpop.f32.mrb[0].mxu0
        %v3643 = vadd.f32 %v2798, %v3642
        %v3644 = vpop.f32.mrb[0].mxu0
        %v3645 = vpop.f32.mrb[0].mxu0
        %v3646 = vadd.f32 %v2798, %v3645
        %v3647 = vpop.f32.mrb[0].mxu0
        %3648 = vmatprep.mubr.bf16.mxu0 0
        %3649 = vmatmul.mubr.bf16.gmra.mrb[0].mxu0 %v2745
        %v3650 = vpop.f32.mrb[0].mxu0
        %v3651 = vadd.f32 %v2798, %v3650
        %v3652 = vpop.f32.mrb[0].mxu0
        %v3653 = vpop.f32.mrb[0].mxu0
        %v3654 = vadd.f32 %v2798, %v3653
        %v3655 = vpop.f32.mrb[0].mxu0
        %3656 = vmatprep.mubr.bf16.mxu0 0
        %3657 = vmatmul.mubr.bf16.gmra.mrb[0].mxu0 %v2746
        %v3658 = vpop.f32.mrb[0].mxu0
        %v3659 = vadd.f32 %v2798, %v3658
        %v3660 = vpop.f32.mrb[0].mxu0
        %v3661 = vpop.f32.mrb[0].mxu0
        %v3662 = vadd.f32 %v2798, %v3661
        %v3663 = vpop.f32.mrb[0].mxu0
        %3664 = vmatprep.mubr.bf16.mxu0 0
        %3665 = vmatmul.mubr.bf16.gmra.mrb[0].mxu0 %v2747
        %v3666 = vpop.f32.mrb[0].mxu0
        %v3667 = vadd.f32 %v2798, %v3666
        %v3668 = vpop.f32.mrb[0].mxu0
        %v3669 = vpop.f32.mrb[0].mxu0
        %v3670 = vadd.f32 %v2798, %v3669
        %v3671 = vpop.f32.mrb[0].mxu0
        %3672 = vmatprep.mubr.bf16.mxu0 0
        %3673 = vmatmul.mubr.bf16.gmra.mrb[0].mxu0 %v2748
        %v3674 = vpop.f32.mrb[0].mxu0
        %v3675 = vadd.f32 %v2798, %v3674
        %v3676 = vpop.f32.mrb[0].mxu0
        %v3677 = vpop.f32.mrb[0].mxu0
        %v3678 = vadd.f32 %v2798, %v3677
        %v3679 = vpop.f32.mrb[0].mxu0
        %3680 = vmatprep.mubr.bf16.mxu0 0
        %3681 = vmatmul.mubr.bf16.gmra.mrb[0].mxu0 %v2749
        %v3682 = vpop.f32.mrb[0].mxu0
        %v3683 = vadd.f32 %v2798, %v3682
        %v3684 = vpop.f32.mrb[0].mxu0
        %v3685 = vpop.f32.mrb[0].mxu0
        %v3686 = vadd.f32 %v2798, %v3685
        %v3687 = vpop.f32.mrb[0].mxu0
        %3688 = vmatprep.mubr.bf16.mxu0 0
        %3689 = vmatmul.mubr.bf16.gmra.mrb[0].mxu0 %v2750
        %v3690 = vpop.f32.mrb[0].mxu0
        %v3691 = vadd.f32 %v2798, %v3690
        %v3692 = vpop.f32.mrb[0].mxu0
        %v3693 = vpop.f32.mrb[0].mxu0
        %v3694 = vadd.f32 %v2798, %v3693
        %v3695 = vpop.f32.mrb[0].mxu0
        %3696 = vmatprep.mubr.bf16.mxu0 0
        %3697 = vmatmul.mubr.bf16.gmra.mrb[0].mxu0 %v2751
        %v3698 = vpop.f32.mrb[0].mxu0
        %v3699 = vadd.f32 %v2798, %v3698
        %v3700 = vpop.f32.mrb[0].mxu0
        %v3701 = vpop.f32.mrb[0].mxu0
        %v3702 = vadd.f32 %v2798, %v3701
        %v3703 = vpop.f32.mrb[0].mxu0
        %3704 = vmatprep.mubr.bf16.mxu0 0
        %3705 = vmatmul.mubr.bf16.gmra.mrb[0].mxu0 %v2752
        %v3706 = vpop.f32.mrb[0].mxu0
        %v3707 = vadd.f32 %v2798, %v3706
        %v3708 = vpop.f32.mrb[0].mxu0
        %v3709 = vpop.f32.mrb[0].mxu0
        %v3710 = vadd.f32 %v2798, %v3709
        %v3711 = vpop.f32.mrb[0].mxu0
        %3712 = vmatprep.mubr.bf16.mxu0 0
        %3713 = vmatmul.mubr.bf16.gmra.mrb[0].mxu0 %v2753
        %v3714 = vpop.f32.mrb[0].mxu0
        %v3715 = vadd.f32 %v2798, %v3714
        %v3716 = vpop.f32.mrb[0].mxu0
        %v3717 = vpop.f32.mrb[0].mxu0
        %v3718 = vadd.f32 %v2798, %v3717
        %v3719 = vpop.f32.mrb[0].mxu0
        %3720 = vmatprep.mubr.bf16.mxu0 0
        %3721 = vmatmul.mubr.bf16.gmra.mrb[0].mxu0 %v2754
        %v3722 = vpop.f32.mrb[0].mxu0
        %v3723 = vadd.f32 %v2798, %v3722
        %v3724 = vpop.f32.mrb[0].mxu0
        %v3725 = vpop.f32.mrb[0].mxu0
        %v3726 = vadd.f32 %v2798, %v3725
        %v3727 = vpop.f32.mrb[0].mxu0
        %3728 = vmatprep.mubr.bf16.mxu0 0
        %3729 = vmatmul.mubr.bf16.gmra.mrb[0].mxu0 %v2755
        %v3730 = vpop.f32.mrb[0].mxu0
        %v3731 = vadd.f32 %v2798, %v3730
        %v3732 = vpop.f32.mrb[0].mxu0
        %v3733 = vpop.f32.mrb[0].mxu0
        %v3734 = vadd.f32 %v2798, %v3733
        %v3735 = vpop.f32.mrb[0].mxu0
        %3736 = vmatprep.mubr.bf16.mxu0 0
        %3737 = vmatmul.mubr.bf16.gmra.mrb[0].mxu0 %v2756
        %v3738 = vpop.f32.mrb[0].mxu0
        %v3739 = vadd.f32 %v2798, %v3738
        %v3740 = vpop.f32.mrb[0].mxu0
        %v3741 = vpop.f32.mrb[0].mxu0
        %v3742 = vadd.f32 %v2798, %v3741
        %v3743 = vpop.f32.mrb[0].mxu0
        %3744 = vmatprep.mubr.bf16.mxu0 0
        %3745 = vmatmul.mubr.bf16.gmra.mrb[0].mxu0 %v2757
        %v3746 = vpop.f32.mrb[0].mxu0
        %v3747 = vadd.f32 %v2798, %v3746
        %v3748 = vpop.f32.mrb[0].mxu0
        %v3749 = vpop.f32.mrb[0].mxu0
        %v3750 = vadd.f32 %v2798, %v3749
        %v3751 = vpop.f32.mrb[0].mxu0
        %3752 = vmatprep.mubr.bf16.mxu0 0
        %3753 = vmatmul.mubr.bf16.gmra.mrb[0].mxu0 %v2758
        %v3754 = vpop.f32.mrb[0].mxu0
        %v3755 = vadd.f32 %v2798, %v3754
        %v3756 = vpop.f32.mrb[0].mxu0
        %v3757 = vpop.f32.mrb[0].mxu0
        %v3758 = vadd.f32 %v2798, %v3757
        %v3759 = vpop.f32.mrb[0].mxu0
        %3760 = vmatprep.mubr.bf16.mxu0 0
        %3761 = vmatmul.mubr.bf16.gmra.mrb[0].mxu0 %v2759
        %v3762 = vpop.f32.mrb[0].mxu0
        %v3763 = vadd.f32 %v2798, %v3762
        %v3764 = vpop.f32.mrb[0].mxu0
        %v3765 = vpop.f32.mrb[0].mxu0
        %v3766 = vadd.f32 %v2798, %v3765
        %v3767 = vpop.f32.mrb[0].mxu0
        %3768 = vmatprep.mubr.bf16.mxu0 0
        %3769 = vmatmul.mubr.bf16.gmra.mrb[0].mxu0 %v2760
        %v3770 = vpop.f32.mrb[0].mxu0
        %v3771 = vadd.f32 %v2798, %v3770
        %v3772 = vpop.f32.mrb[0].mxu0
        %v3773 = vpop.f32.mrb[0].mxu0
        %v3774 = vadd.f32 %v2798, %v3773
        %v3775 = vpop.f32.mrb[0].mxu0
        %3776 = vmatprep.mubr.bf16.mxu0 0
        %3777 = vmatmul.mubr.bf16.gmra.mrb[0].mxu0 %v2761
        %v3778 = vpop.f32.mrb[0].mxu0
        %v3779 = vadd.f32 %v2798, %v3778
        %v3780 = vpop.f32.mrb[0].mxu0
        %v3781 = vpop.f32.mrb[0].mxu0
        %v3782 = vadd.f32 %v2798, %v3781
        %v3783 = vpop.f32.mrb[0].mxu0
        %3784 = vmatprep.mubr.bf16.mxu0 0
        %3785 = vmatmul.mubr.bf16.gmra.mrb[0].mxu0 %v2762
        %v3786 = vpop.f32.mrb[0].mxu0
        %v3787 = vadd.f32 %v2798, %v3786
        %v3788 = vpop.f32.mrb[0].mxu0
        %v3789 = vpop.f32.mrb[0].mxu0
        %v3790 = vadd.f32 %v2798, %v3789
        %v3791 = vpop.f32.mrb[0].mxu0
        %3792 = vmatprep.mubr.bf16.mxu0 0
        %3793 = vmatmul.mubr.bf16.gmra.mrb[0].mxu0 %v2763
        %v3794 = vpop.f32.mrb[0].mxu0
        %v3795 = vadd.f32 %v2798, %v3794
        %v3796 = vpop.f32.mrb[0].mxu0
        %v3797 = vpop.f32.mrb[0].mxu0
        %v3798 = vadd.f32 %v2798, %v3797
        %v3799 = vpop.f32.mrb[0].mxu0
        %3800 = vmatprep.mubr.bf16.mxu0 0
        %3801 = vmatmul.mubr.bf16.gmra.mrb[0].mxu0 %v2764
        %v3802 = vpop.f32.mrb[0].mxu0
        %v3803 = vadd.f32 %v2798, %v3802
        %v3804 = vpop.f32.mrb[0].mxu0
        %v3805 = vpop.f32.mrb[0].mxu0
        %v3806 = vadd.f32 %v2798, %v3805
        %v3807 = vpop.f32.mrb[0].mxu0
        %3808 = vmatprep.mubr.bf16.mxu0 0
        %3809 = vmatmul.mubr.bf16.gmra.mrb[0].mxu0 %v2765
        %v3810 = vpop.f32.mrb[0].mxu0
        %v3811 = vadd.f32 %v2798, %v3810
        %v3812 = vpop.f32.mrb[0].mxu0
        %v3813 = vpop.f32.mrb[0].mxu0
        %v3814 = vadd.f32 %v2798, %v3813
        %v3815 = vpop.f32.mrb[0].mxu0
        %3816 = vmatprep.mubr.bf16.mxu0 0
        %3817 = vmatmul.mubr.bf16.gmra.mrb[0].mxu0 %v2766
        %v3818 = vpop.f32.mrb[0].mxu0
        %v3819 = vadd.f32 %v2798, %v3818
        %v3820 = vpop.f32.mrb[0].mxu0
        %v3821 = vpop.f32.mrb[0].mxu0
        %v3822 = vadd.f32 %v2798, %v3821
        %v3823 = vpop.f32.mrb[0].mxu0
        %3824 = vmatprep.mubr.bf16.mxu0 0
        %3825 = vmatmul.mubr.bf16.gmra.mrb[0].mxu0 %v2767
        %v3826 = vpop.f32.mrb[0].mxu0
        %v3827 = vadd.f32 %v2798, %v3826
        %v3828 = vpop.f32.mrb[0].mxu0
        %v3829 = vpop.f32.mrb[0].mxu0
        %v3830 = vadd.f32 %v2798, %v3829
        %v3831 = vpop.f32.mrb[0].mxu0
        %3832 = vmatprep.mubr.bf16.mxu0 0
        %3833 = vmatmul.mubr.bf16.gmra.mrb[0].mxu0 %v2768
        %v3834 = vpop.f32.mrb[0].mxu0
        %v3835 = vadd.f32 %v2798, %v3834
        %v3836 = vpop.f32.mrb[0].mxu0
        %v3837 = vpop.f32.mrb[0].mxu0
        %v3838 = vadd.f32 %v2798, %v3837
        %v3839 = vpop.f32.mrb[0].mxu0
        %3840 = vmatprep.mubr.bf16.mxu0 0
        %3841 = vmatmul.mubr.bf16.gmra.mrb[0].mxu0 %v2769
        %v3842 = vpop.f32.mrb[0].mxu0
        %v3843 = vadd.f32 %v2798, %v3842
        %v3844 = vpop.f32.mrb[0].mxu0
        %v3845 = vpop.f32.mrb[0].mxu0
        %v3846 = vadd.f32 %v2798, %v3845
        %v3847 = vpop.f32.mrb[0].mxu0
        %3848 = vmatprep.mubr.bf16.mxu0 0
        %3849 = vmatmul.mubr.bf16.gmra.mrb[0].mxu0 %v2770
        %v3850 = vpop.f32.mrb[0].mxu0
        %v3851 = vadd.f32 %v2798, %v3850
        %v3852 = vpop.f32.mrb[0].mxu0
        %v3853 = vpop.f32.mrb[0].mxu0
        %v3854 = vadd.f32 %v2798, %v3853
        %v3855 = vpop.f32.mrb[0].mxu0
        %3856 = vmatprep.mubr.bf16.mxu0 0
        %3857 = vmatmul.mubr.bf16.gmra.mrb[0].mxu0 %v2771
        %v3858 = vpop.f32.mrb[0].mxu0
        %v3859 = vadd.f32 %v2798, %v3858
        %v3860 = vpop.f32.mrb[0].mxu0
        %v3861 = vpop.f32.mrb[0].mxu0
        %v3862 = vadd.f32 %v2798, %v3861
        %v3863 = vpop.f32.mrb[0].mxu0
        %3864 = vmatprep.mubr.bf16.mxu0 0
        %3865 = vmatmul.mubr.bf16.gmra.mrb[0].mxu0 %v2772
        %v3866 = vpop.f32.mrb[0].mxu0
        %v3867 = vadd.f32 %v2798, %v3866
        %v3868 = vpop.f32.mrb[0].mxu0
        %v3869 = vpop.f32.mrb[0].mxu0
        %v3870 = vadd.f32 %v2798, %v3869
        %v3871 = vpop.f32.mrb[0].mxu0
        %3872 = vmatprep.mubr.bf16.mxu0 0
        %3873 = vmatmul.mubr.bf16.gmra.mrb[0].mxu0 %v2773
        %v3874 = vpop.f32.mrb[0].mxu0
        %v3875 = vadd.f32 %v2798, %v3874
        %v3876 = vpop.f32.mrb[0].mxu0
        %v3877 = vpop.f32.mrb[0].mxu0
        %v3878 = vadd.f32 %v2798, %v3877
        %v3879 = vpop.f32.mrb[0].mxu0
        %3880 = vmatprep.mubr.bf16.mxu0 0
        %3881 = vmatmul.mubr.bf16.gmra.mrb[0].mxu0 %v2774
        %v3882 = vpop.f32.mrb[0].mxu0
        %v3883 = vadd.f32 %v2798, %v3882
        %v3884 = vpop.f32.mrb[0].mxu0
        %v3885 = vpop.f32.mrb[0].mxu0
        %v3886 = vadd.f32 %v2798, %v3885
        %v3887 = vpop.f32.mrb[0].mxu0
        %3888 = vmatprep.mubr.bf16.mxu0 0
        %3889 = vmatmul.mubr.bf16.gmra.mrb[0].mxu0 %v2775
        %v3890 = vpop.f32.mrb[0].mxu0
        %v3891 = vadd.f32 %v2798, %v3890
        %v3892 = vpop.f32.mrb[0].mxu0
        %v3893 = vpop.f32.mrb[0].mxu0
        %v3894 = vadd.f32 %v2798, %v3893
        %v3895 = vpop.f32.mrb[0].mxu0
        %3896 = vmatprep.mubr.bf16.mxu0 0
        %3897 = vmatmul.mubr.bf16.gmra.mrb[0].mxu0 %v2776
        %v3898 = vpop.f32.mrb[0].mxu0
        %v3899 = vadd.f32 %v2798, %v3898
        %v3900 = vpop.f32.mrb[0].mxu0
        %v3901 = vpop.f32.mrb[0].mxu0
        %v3902 = vadd.f32 %v2798, %v3901
        %v3903 = vpop.f32.mrb[0].mxu0
        %3904 = vdwg.mxu0
        %v3905 = vadd.f32 %v2883, %v1117
        %v3906 = vadd.f32 %v2886, %v1121
        %v3907 = vadd.f32 %v2891, %v1127
        %v3908 = vadd.f32 %v2894, %v1131
        %v3909 = vadd.f32 %v2899, %v1137
        %v3910 = vadd.f32 %v2902, %v1141
        %v3911 = vadd.f32 %v2907, %v1147
        %v3912 = vadd.f32 %v2910, %v1151
        %v3913 = vadd.f32 %v2915, %v1157
        %v3914 = vadd.f32 %v2918, %v1161
        %v3915 = vadd.f32 %v2923, %v1167
        %v3916 = vadd.f32 %v2926, %v1171
        %v3917 = vadd.f32 %v2931, %v1177
        %v3918 = vadd.f32 %v2934, %v1181
        %v3919 = vadd.f32 %v2939, %v1187
        %v3920 = vadd.f32 %v2942, %v1191
        %v3921 = vadd.f32 %v2947, %v1197
        %v3922 = vadd.f32 %v2950, %v1201
        %v3923 = vadd.f32 %v2955, %v1207
        %v3924 = vadd.f32 %v2958, %v1211
        %v3925 = vadd.f32 %v2963, %v1217
        %v3926 = vadd.f32 %v2966, %v1221
        %v3927 = vadd.f32 %v2971, %v1227
        %v3928 = vadd.f32 %v2974, %v1231
        %v3929 = vadd.f32 %v2979, %v1237
        %v3930 = vadd.f32 %v2982, %v1241
        %v3931 = vadd.f32 %v2987, %v1247
        %v3932 = vadd.f32 %v2990, %v1251
        %v3933 = vadd.f32 %v2995, %v1257
        %v3934 = vadd.f32 %v2998, %v1261
        %v3935 = vadd.f32 %v3003, %v1267
        %v3936 = vadd.f32 %v3006, %v1271
        %v3937 = vadd.f32 %v3011, %v1277
        %v3938 = vadd.f32 %v3014, %v1281
        %v3939 = vadd.f32 %v3019, %v1287
        %v3940 = vadd.f32 %v3022, %v1291
        %v3941 = vadd.f32 %v3027, %v1297
        %v3942 = vadd.f32 %v3030, %v1301
        %v3943 = vadd.f32 %v3035, %v1307
        %v3944 = vadd.f32 %v3038, %v1311
        %v3945 = vadd.f32 %v3043, %v1317
        %v3946 = vadd.f32 %v3046, %v1321
        %v3947 = vadd.f32 %v3051, %v1327
        %v3948 = vadd.f32 %v3054, %v1331
        %v3949 = vadd.f32 %v3059, %v1337
        %v3950 = vadd.f32 %v3062, %v1341
        %v3951 = vadd.f32 %v3067, %v1347
        %v3952 = vadd.f32 %v3070, %v1351
        %v3953 = vadd.f32 %v3075, %v1357
        %v3954 = vadd.f32 %v3078, %v1361
        %v3955 = vadd.f32 %v3083, %v1367
        %v3956 = vadd.f32 %v3086, %v1371
        %v3957 = vadd.f32 %v3091, %v1377
        %v3958 = vadd.f32 %v3094, %v1381
        %v3959 = vadd.f32 %v3099, %v1387
        %v3960 = vadd.f32 %v3102, %v1391
        %v3961 = vadd.f32 %v3107, %v1397
        %v3962 = vadd.f32 %v3110, %v1401
        %v3963 = vadd.f32 %v3115, %v1407
        %v3964 = vadd.f32 %v3118, %v1411
        %v3965 = vadd.f32 %v3123, %v1417
        %v3966 = vadd.f32 %v3126, %v1421
        %v3967 = vadd.f32 %v3131, %v1427
        %v3968 = vadd.f32 %v3134, %v1431
        %v3969 = vadd.f32 %v3139, %v1437
        %v3970 = vadd.f32 %v3142, %v1441
        %v3971 = vadd.f32 %v3147, %v1447
        %v3972 = vadd.f32 %v3150, %v1451
        %v3973 = vadd.f32 %v3155, %v1457
        %v3974 = vadd.f32 %v3158, %v1461
        %v3975 = vadd.f32 %v3163, %v1467
        %v3976 = vadd.f32 %v3166, %v1471
        %v3977 = vadd.f32 %v3171, %v1477
        %v3978 = vadd.f32 %v3174, %v1481
        %v3979 = vadd.f32 %v3179, %v1487
        %v3980 = vadd.f32 %v3182, %v1491
        %v3981 = vadd.f32 %v3187, %v1497
        %v3982 = vadd.f32 %v3190, %v1501
        %v3983 = vadd.f32 %v3195, %v1507
        %v3984 = vadd.f32 %v3198, %v1511
        %v3985 = vadd.f32 %v3203, %v1517
        %v3986 = vadd.f32 %v3206, %v1521
        %v3987 = vadd.f32 %v3211, %v1527
        %v3988 = vadd.f32 %v3214, %v1531
        %v3989 = vadd.f32 %v3219, %v1537
        %v3990 = vadd.f32 %v3222, %v1541
        %v3991 = vadd.f32 %v3227, %v1547
        %v3992 = vadd.f32 %v3230, %v1551
        %v3993 = vadd.f32 %v3235, %v1557
        %v3994 = vadd.f32 %v3238, %v1561
        %v3995 = vadd.f32 %v3243, %v1567
        %v3996 = vadd.f32 %v3246, %v1571
        %v3997 = vadd.f32 %v3251, %v1577
        %v3998 = vadd.f32 %v3254, %v1581
        %v3999 = vadd.f32 %v3259, %v1587
        %v4000 = vadd.f32 %v3262, %v1591
        %v4001 = vadd.f32 %v3267, %v1597
        %v4002 = vadd.f32 %v3270, %v1601
        %v4003 = vadd.f32 %v3275, %v1607
        %v4004 = vadd.f32 %v3278, %v1611
        %v4005 = vadd.f32 %v3283, %v1617
        %v4006 = vadd.f32 %v3286, %v1621
        %v4007 = vadd.f32 %v3291, %v1627
        %v4008 = vadd.f32 %v3294, %v1631
        %v4009 = vadd.f32 %v3299, %v1637
        %v4010 = vadd.f32 %v3302, %v1641
        %v4011 = vadd.f32 %v3307, %v1647
        %v4012 = vadd.f32 %v3310, %v1651
        %v4013 = vadd.f32 %v3315, %v1657
        %v4014 = vadd.f32 %v3318, %v1661
        %v4015 = vadd.f32 %v3323, %v1667
        %v4016 = vadd.f32 %v3326, %v1671
        %v4017 = vadd.f32 %v3331, %v1677
        %v4018 = vadd.f32 %v3334, %v1681
        %v4019 = vadd.f32 %v3339, %v1687
        %v4020 = vadd.f32 %v3342, %v1691
        %v4021 = vadd.f32 %v3347, %v1697
        %v4022 = vadd.f32 %v3350, %v1701
        %v4023 = vadd.f32 %v3355, %v1707
        %v4024 = vadd.f32 %v3358, %v1711
        %v4025 = vadd.f32 %v3363, %v1717
        %v4026 = vadd.f32 %v3366, %v1721
        %v4027 = vadd.f32 %v3371, %v1727
        %v4028 = vadd.f32 %v3374, %v1731
        %v4029 = vadd.f32 %v3379, %v1737
        %v4030 = vadd.f32 %v3382, %v1741
        %v4031 = vadd.f32 %v3387, %v1747
        %v4032 = vadd.f32 %v3390, %v1751
        %v4033 = vadd.f32 %v3395, %v1757
        %v4034 = vadd.f32 %v3398, %v1761
        %v4035 = vadd.f32 %v3403, %v1767
        %v4036 = vadd.f32 %v3406, %v1771
        %v4037 = vadd.f32 %v3411, %v1777
        %v4038 = vadd.f32 %v3414, %v1781
        %v4039 = vadd.f32 %v3419, %v1787
        %v4040 = vadd.f32 %v3422, %v1791
        %v4041 = vadd.f32 %v3427, %v1797
        %v4042 = vadd.f32 %v3430, %v1801
        %v4043 = vadd.f32 %v3435, %v1807
        %v4044 = vadd.f32 %v3438, %v1811
        %v4045 = vadd.f32 %v3443, %v1817
        %v4046 = vadd.f32 %v3446, %v1821
        %v4047 = vadd.f32 %v3451, %v1827
        %v4048 = vadd.f32 %v3454, %v1831
        %v4049 = vadd.f32 %v3459, %v1837
        %v4050 = vadd.f32 %v3462, %v1841
        %v4051 = vadd.f32 %v3467, %v1847
        %v4052 = vadd.f32 %v3470, %v1851
        %v4053 = vadd.f32 %v3475, %v1857
        %v4054 = vadd.f32 %v3478, %v1861
        %v4055 = vadd.f32 %v3483, %v1867
        %v4056 = vadd.f32 %v3486, %v1871
        %v4057 = vadd.f32 %v3491, %v1877
        %v4058 = vadd.f32 %v3494, %v1881
        %v4059 = vadd.f32 %v3499, %v1887
        %v4060 = vadd.f32 %v3502, %v1891
        %v4061 = vadd.f32 %v3507, %v1897
        %v4062 = vadd.f32 %v3510, %v1901
        %v4063 = vadd.f32 %v3515, %v1907
        %v4064 = vadd.f32 %v3518, %v1911
        %v4065 = vadd.f32 %v3523, %v1917
        %v4066 = vadd.f32 %v3526, %v1921
        %v4067 = vadd.f32 %v3531, %v1927
        %v4068 = vadd.f32 %v3534, %v1931
        %v4069 = vadd.f32 %v3539, %v1937
        %v4070 = vadd.f32 %v3542, %v1941
        %v4071 = vadd.f32 %v3547, %v1947
        %v4072 = vadd.f32 %v3550, %v1951
        %v4073 = vadd.f32 %v3555, %v1957
        %v4074 = vadd.f32 %v3558, %v1961
        %v4075 = vadd.f32 %v3563, %v1967
        %v4076 = vadd.f32 %v3566, %v1971
        %v4077 = vadd.f32 %v3571, %v1977
        %v4078 = vadd.f32 %v3574, %v1981
        %v4079 = vadd.f32 %v3579, %v1987
        %v4080 = vadd.f32 %v3582, %v1991
        %v4081 = vadd.f32 %v3587, %v1997
        %v4082 = vadd.f32 %v3590, %v2001
        %v4083 = vadd.f32 %v3595, %v2007
        %v4084 = vadd.f32 %v3598, %v2011
        %v4085 = vadd.f32 %v3603, %v2017
        %v4086 = vadd.f32 %v3606, %v2021
        %v4087 = vadd.f32 %v3611, %v2027
        %v4088 = vadd.f32 %v3614, %v2031
        %v4089 = vadd.f32 %v3619, %v2037
        %v4090 = vadd.f32 %v3622, %v2041
        %v4091 = vadd.f32 %v3627, %v2047
        %v4092 = vadd.f32 %v3630, %v2051
        %v4093 = vadd.f32 %v3635, %v2057
        %v4094 = vadd.f32 %v3638, %v2061
        %v4095 = vadd.f32 %v3643, %v2067
        %v4096 = vadd.f32 %v3646, %v2071
        %v4097 = vadd.f32 %v3651, %v2077
        %v4098 = vadd.f32 %v3654, %v2081
        %v4099 = vadd.f32 %v3659, %v2087
        %v4100 = vadd.f32 %v3662, %v2091
        %v4101 = vadd.f32 %v3667, %v2097
        %v4102 = vadd.f32 %v3670, %v2101
        %v4103 = vadd.f32 %v3675, %v2107
        %v4104 = vadd.f32 %v3678, %v2111
        %v4105 = vadd.f32 %v3683, %v2117
        %v4106 = vadd.f32 %v3686, %v2121
        %v4107 = vadd.f32 %v3691, %v2127
        %v4108 = vadd.f32 %v3694, %v2131
        %v4109 = vadd.f32 %v3699, %v2137
        %v4110 = vadd.f32 %v3702, %v2141
        %v4111 = vadd.f32 %v3707, %v2147
        %v4112 = vadd.f32 %v3710, %v2151
        %v4113 = vadd.f32 %v3715, %v2157
        %v4114 = vadd.f32 %v3718, %v2161
        %v4115 = vadd.f32 %v3723, %v2167
        %v4116 = vadd.f32 %v3726, %v2171
        %v4117 = vadd.f32 %v3731, %v2177
        %v4118 = vadd.f32 %v3734, %v2181
        %v4119 = vadd.f32 %v3739, %v2187
        %v4120 = vadd.f32 %v3742, %v2191
        %v4121 = vadd.f32 %v3747, %v2197
        %v4122 = vadd.f32 %v3750, %v2201
        %v4123 = vadd.f32 %v3755, %v2207
        %v4124 = vadd.f32 %v3758, %v2211
        %v4125 = vadd.f32 %v3763, %v2217
        %v4126 = vadd.f32 %v3766, %v2221
        %v4127 = vadd.f32 %v3771, %v2227
        %v4128 = vadd.f32 %v3774, %v2231
        %v4129 = vadd.f32 %v3779, %v2237
        %v4130 = vadd.f32 %v3782, %v2241
        %v4131 = vadd.f32 %v3787, %v2247
        %v4132 = vadd.f32 %v3790, %v2251
        %v4133 = vadd.f32 %v3795, %v2257
        %v4134 = vadd.f32 %v3798, %v2261
        %v4135 = vadd.f32 %v3803, %v2267
        %v4136 = vadd.f32 %v3806, %v2271
        %v4137 = vadd.f32 %v3811, %v2277
        %v4138 = vadd.f32 %v3814, %v2281
        %v4139 = vadd.f32 %v3819, %v2287
        %v4140 = vadd.f32 %v3822, %v2291
        %v4141 = vadd.f32 %v3827, %v2297
        %v4142 = vadd.f32 %v3830, %v2301
        %v4143 = vadd.f32 %v3835, %v2307
        %v4144 = vadd.f32 %v3838, %v2311
        %v4145 = vadd.f32 %v3843, %v2317
        %v4146 = vadd.f32 %v3846, %v2321
        %v4147 = vadd.f32 %v3851, %v2327
        %v4148 = vadd.f32 %v3854, %v2331
        %v4149 = vadd.f32 %v3859, %v2337
        %v4150 = vadd.f32 %v3862, %v2341
        %v4151 = vadd.f32 %v3867, %v2347
        %v4152 = vadd.f32 %v3870, %v2351
        %v4153 = vadd.f32 %v3875, %v2357
        %v4154 = vadd.f32 %v3878, %v2361
        %v4155 = vadd.f32 %v3883, %v2367
        %v4156 = vadd.f32 %v3886, %v2371
        %v4157 = vadd.f32 %v3891, %v2377
        %v4158 = vadd.f32 %v3894, %v2381
        %v4159 = vadd.f32 %v3899, %v2387
        %v4160 = vadd.f32 %v3902, %v2391
        %v4161 = vmax.f32 %v3905, 0.0
        %v4162 = vmax.f32 %v3906, 0.0
        %v4163 = vmax.f32 %v3907, 0.0
        %v4164 = vmax.f32 %v3908, 0.0
        %v4165 = vmax.f32 %v3909, 0.0
        %v4166 = vmax.f32 %v3910, 0.0
        %v4167 = vmax.f32 %v3911, 0.0
        %v4168 = vmax.f32 %v3912, 0.0
        %v4169 = vmax.f32 %v3913, 0.0
        %v4170 = vmax.f32 %v3914, 0.0
        %v4171 = vmax.f32 %v3915, 0.0
        %v4172 = vmax.f32 %v3916, 0.0
        %v4173 = vmax.f32 %v3917, 0.0
        %v4174 = vmax.f32 %v3918, 0.0
        %v4175 = vmax.f32 %v3919, 0.0
        %v4176 = vmax.f32 %v3920, 0.0
        %v4177 = vmax.f32 %v3921, 0.0
        %v4178 = vmax.f32 %v3922, 0.0
        %v4179 = vmax.f32 %v3923, 0.0
        %v4180 = vmax.f32 %v3924, 0.0
        %v4181 = vmax.f32 %v3925, 0.0
        %v4182 = vmax.f32 %v3926, 0.0
        %v4183 = vmax.f32 %v3927, 0.0
        %v4184 = vmax.f32 %v3928, 0.0
        %v4185 = vmax.f32 %v3929, 0.0
        %v4186 = vmax.f32 %v3930, 0.0
        %v4187 = vmax.f32 %v3931, 0.0
        %v4188 = vmax.f32 %v3932, 0.0
        %v4189 = vmax.f32 %v3933, 0.0
        %v4190 = vmax.f32 %v3934, 0.0
        %v4191 = vmax.f32 %v3935, 0.0
        %v4192 = vmax.f32 %v3936, 0.0
        %v4193 = vmax.f32 %v3937, 0.0
        %v4194 = vmax.f32 %v3938, 0.0
        %v4195 = vmax.f32 %v3939, 0.0
        %v4196 = vmax.f32 %v3940, 0.0
        %v4197 = vmax.f32 %v3941, 0.0
        %v4198 = vmax.f32 %v3942, 0.0
        %v4199 = vmax.f32 %v3943, 0.0
        %v4200 = vmax.f32 %v3944, 0.0
        %v4201 = vmax.f32 %v3945, 0.0
        %v4202 = vmax.f32 %v3946, 0.0
        %v4203 = vmax.f32 %v3947, 0.0
        %v4204 = vmax.f32 %v3948, 0.0
        %v4205 = vmax.f32 %v3949, 0.0
        %v4206 = vmax.f32 %v3950, 0.0
        %v4207 = vmax.f32 %v3951, 0.0
        %v4208 = vmax.f32 %v3952, 0.0
        %v4209 = vmax.f32 %v3953, 0.0
        %v4210 = vmax.f32 %v3954, 0.0
        %v4211 = vmax.f32 %v3955, 0.0
        %v4212 = vmax.f32 %v3956, 0.0
        %v4213 = vmax.f32 %v3957, 0.0
        %v4214 = vmax.f32 %v3958, 0.0
        %v4215 = vmax.f32 %v3959, 0.0
        %v4216 = vmax.f32 %v3960, 0.0
        %v4217 = vmax.f32 %v3961, 0.0
        %v4218 = vmax.f32 %v3962, 0.0
        %v4219 = vmax.f32 %v3963, 0.0
        %v4220 = vmax.f32 %v3964, 0.0
        %v4221 = vmax.f32 %v3965, 0.0
        %v4222 = vmax.f32 %v3966, 0.0
        %v4223 = vmax.f32 %v3967, 0.0
        %v4224 = vmax.f32 %v3968, 0.0
        %v4225 = vmax.f32 %v3969, 0.0
        %v4226 = vmax.f32 %v3970, 0.0
        %v4227 = vmax.f32 %v3971, 0.0
        %v4228 = vmax.f32 %v3972, 0.0
        %v4229 = vmax.f32 %v3973, 0.0
        %v4230 = vmax.f32 %v3974, 0.0
        %v4231 = vmax.f32 %v3975, 0.0
        %v4232 = vmax.f32 %v3976, 0.0
        %v4233 = vmax.f32 %v3977, 0.0
        %v4234 = vmax.f32 %v3978, 0.0
        %v4235 = vmax.f32 %v3979, 0.0
        %v4236 = vmax.f32 %v3980, 0.0
        %v4237 = vmax.f32 %v3981, 0.0
        %v4238 = vmax.f32 %v3982, 0.0
        %v4239 = vmax.f32 %v3983, 0.0
        %v4240 = vmax.f32 %v3984, 0.0
        %v4241 = vmax.f32 %v3985, 0.0
        %v4242 = vmax.f32 %v3986, 0.0
        %v4243 = vmax.f32 %v3987, 0.0
        %v4244 = vmax.f32 %v3988, 0.0
        %v4245 = vmax.f32 %v3989, 0.0
        %v4246 = vmax.f32 %v3990, 0.0
        %v4247 = vmax.f32 %v3991, 0.0
        %v4248 = vmax.f32 %v3992, 0.0
        %v4249 = vmax.f32 %v3993, 0.0
        %v4250 = vmax.f32 %v3994, 0.0
        %v4251 = vmax.f32 %v3995, 0.0
        %v4252 = vmax.f32 %v3996, 0.0
        %v4253 = vmax.f32 %v3997, 0.0
        %v4254 = vmax.f32 %v3998, 0.0
        %v4255 = vmax.f32 %v3999, 0.0
        %v4256 = vmax.f32 %v4000, 0.0
        %v4257 = vmax.f32 %v4001, 0.0
        %v4258 = vmax.f32 %v4002, 0.0
        %v4259 = vmax.f32 %v4003, 0.0
        %v4260 = vmax.f32 %v4004, 0.0
        %v4261 = vmax.f32 %v4005, 0.0
        %v4262 = vmax.f32 %v4006, 0.0
        %v4263 = vmax.f32 %v4007, 0.0
        %v4264 = vmax.f32 %v4008, 0.0
        %v4265 = vmax.f32 %v4009, 0.0
        %v4266 = vmax.f32 %v4010, 0.0
        %v4267 = vmax.f32 %v4011, 0.0
        %v4268 = vmax.f32 %v4012, 0.0
        %v4269 = vmax.f32 %v4013, 0.0
        %v4270 = vmax.f32 %v4014, 0.0
        %v4271 = vmax.f32 %v4015, 0.0
        %v4272 = vmax.f32 %v4016, 0.0
        %v4273 = vmax.f32 %v4017, 0.0
        %v4274 = vmax.f32 %v4018, 0.0
        %v4275 = vmax.f32 %v4019, 0.0
        %v4276 = vmax.f32 %v4020, 0.0
        %v4277 = vmax.f32 %v4021, 0.0
        %v4278 = vmax.f32 %v4022, 0.0
        %v4279 = vmax.f32 %v4023, 0.0
        %v4280 = vmax.f32 %v4024, 0.0
        %v4281 = vmax.f32 %v4025, 0.0
        %v4282 = vmax.f32 %v4026, 0.0
        %v4283 = vmax.f32 %v4027, 0.0
        %v4284 = vmax.f32 %v4028, 0.0
        %v4285 = vmax.f32 %v4029, 0.0
        %v4286 = vmax.f32 %v4030, 0.0
        %v4287 = vmax.f32 %v4031, 0.0
        %v4288 = vmax.f32 %v4032, 0.0
        %v4289 = vmax.f32 %v4033, 0.0
        %v4290 = vmax.f32 %v4034, 0.0
        %v4291 = vmax.f32 %v4035, 0.0
        %v4292 = vmax.f32 %v4036, 0.0
        %v4293 = vmax.f32 %v4037, 0.0
        %v4294 = vmax.f32 %v4038, 0.0
        %v4295 = vmax.f32 %v4039, 0.0
        %v4296 = vmax.f32 %v4040, 0.0
        %v4297 = vmax.f32 %v4041, 0.0
        %v4298 = vmax.f32 %v4042, 0.0
        %v4299 = vmax.f32 %v4043, 0.0
        %v4300 = vmax.f32 %v4044, 0.0
        %v4301 = vmax.f32 %v4045, 0.0
        %v4302 = vmax.f32 %v4046, 0.0
        %v4303 = vmax.f32 %v4047, 0.0
        %v4304 = vmax.f32 %v4048, 0.0
        %v4305 = vmax.f32 %v4049, 0.0
        %v4306 = vmax.f32 %v4050, 0.0
        %v4307 = vmax.f32 %v4051, 0.0
        %v4308 = vmax.f32 %v4052, 0.0
        %v4309 = vmax.f32 %v4053, 0.0
        %v4310 = vmax.f32 %v4054, 0.0
        %v4311 = vmax.f32 %v4055, 0.0
        %v4312 = vmax.f32 %v4056, 0.0
        %v4313 = vmax.f32 %v4057, 0.0
        %v4314 = vmax.f32 %v4058, 0.0
        %v4315 = vmax.f32 %v4059, 0.0
        %v4316 = vmax.f32 %v4060, 0.0
        %v4317 = vmax.f32 %v4061, 0.0
        %v4318 = vmax.f32 %v4062, 0.0
        %v4319 = vmax.f32 %v4063, 0.0
        %v4320 = vmax.f32 %v4064, 0.0
        %v4321 = vmax.f32 %v4065, 0.0
        %v4322 = vmax.f32 %v4066, 0.0
        %v4323 = vmax.f32 %v4067, 0.0
        %v4324 = vmax.f32 %v4068, 0.0
        %v4325 = vmax.f32 %v4069, 0.0
        %v4326 = vmax.f32 %v4070, 0.0
        %v4327 = vmax.f32 %v4071, 0.0
        %v4328 = vmax.f32 %v4072, 0.0
        %v4329 = vmax.f32 %v4073, 0.0
        %v4330 = vmax.f32 %v4074, 0.0
        %v4331 = vmax.f32 %v4075, 0.0
        %v4332 = vmax.f32 %v4076, 0.0
        %v4333 = vmax.f32 %v4077, 0.0
        %v4334 = vmax.f32 %v4078, 0.0
        %v4335 = vmax.f32 %v4079, 0.0
        %v4336 = vmax.f32 %v4080, 0.0
        %v4337 = vmax.f32 %v4081, 0.0
        %v4338 = vmax.f32 %v4082, 0.0
        %v4339 = vmax.f32 %v4083, 0.0
        %v4340 = vmax.f32 %v4084, 0.0
        %v4341 = vmax.f32 %v4085, 0.0
        %v4342 = vmax.f32 %v4086, 0.0
        %v4343 = vmax.f32 %v4087, 0.0
        %v4344 = vmax.f32 %v4088, 0.0
        %v4345 = vmax.f32 %v4089, 0.0
        %v4346 = vmax.f32 %v4090, 0.0
        %v4347 = vmax.f32 %v4091, 0.0
        %v4348 = vmax.f32 %v4092, 0.0
        %v4349 = vmax.f32 %v4093, 0.0
        %v4350 = vmax.f32 %v4094, 0.0
        %v4351 = vmax.f32 %v4095, 0.0
        %v4352 = vmax.f32 %v4096, 0.0
        %v4353 = vmax.f32 %v4097, 0.0
        %v4354 = vmax.f32 %v4098, 0.0
        %v4355 = vmax.f32 %v4099, 0.0
        %v4356 = vmax.f32 %v4100, 0.0
        %v4357 = vmax.f32 %v4101, 0.0
        %v4358 = vmax.f32 %v4102, 0.0
        %v4359 = vmax.f32 %v4103, 0.0
        %v4360 = vmax.f32 %v4104, 0.0
        %v4361 = vmax.f32 %v4105, 0.0
        %v4362 = vmax.f32 %v4106, 0.0
        %v4363 = vmax.f32 %v4107, 0.0
        %v4364 = vmax.f32 %v4108, 0.0
        %v4365 = vmax.f32 %v4109, 0.0
        %v4366 = vmax.f32 %v4110, 0.0
        %v4367 = vmax.f32 %v4111, 0.0
        %v4368 = vmax.f32 %v4112, 0.0
        %v4369 = vmax.f32 %v4113, 0.0
        %v4370 = vmax.f32 %v4114, 0.0
        %v4371 = vmax.f32 %v4115, 0.0
        %v4372 = vmax.f32 %v4116, 0.0
        %v4373 = vmax.f32 %v4117, 0.0
        %v4374 = vmax.f32 %v4118, 0.0
        %v4375 = vmax.f32 %v4119, 0.0
        %v4376 = vmax.f32 %v4120, 0.0
        %v4377 = vmax.f32 %v4121, 0.0
        %v4378 = vmax.f32 %v4122, 0.0
        %v4379 = vmax.f32 %v4123, 0.0
        %v4380 = vmax.f32 %v4124, 0.0
        %v4381 = vmax.f32 %v4125, 0.0
        %v4382 = vmax.f32 %v4126, 0.0
        %v4383 = vmax.f32 %v4127, 0.0
        %v4384 = vmax.f32 %v4128, 0.0
        %v4385 = vmax.f32 %v4129, 0.0
        %v4386 = vmax.f32 %v4130, 0.0
        %v4387 = vmax.f32 %v4131, 0.0
        %v4388 = vmax.f32 %v4132, 0.0
        %v4389 = vmax.f32 %v4133, 0.0
        %v4390 = vmax.f32 %v4134, 0.0
        %v4391 = vmax.f32 %v4135, 0.0
        %v4392 = vmax.f32 %v4136, 0.0
        %v4393 = vmax.f32 %v4137, 0.0
        %v4394 = vmax.f32 %v4138, 0.0
        %v4395 = vmax.f32 %v4139, 0.0
        %v4396 = vmax.f32 %v4140, 0.0
        %v4397 = vmax.f32 %v4141, 0.0
        %v4398 = vmax.f32 %v4142, 0.0
        %v4399 = vmax.f32 %v4143, 0.0
        %v4400 = vmax.f32 %v4144, 0.0
        %v4401 = vmax.f32 %v4145, 0.0
        %v4402 = vmax.f32 %v4146, 0.0
        %v4403 = vmax.f32 %v4147, 0.0
        %v4404 = vmax.f32 %v4148, 0.0
        %v4405 = vmax.f32 %v4149, 0.0
        %v4406 = vmax.f32 %v4150, 0.0
        %v4407 = vmax.f32 %v4151, 0.0
        %v4408 = vmax.f32 %v4152, 0.0
        %v4409 = vmax.f32 %v4153, 0.0
        %v4410 = vmax.f32 %v4154, 0.0
        %v4411 = vmax.f32 %v4155, 0.0
        %v4412 = vmax.f32 %v4156, 0.0
        %v4413 = vmax.f32 %v4157, 0.0
        %v4414 = vmax.f32 %v4158, 0.0
        %v4415 = vmax.f32 %v4159, 0.0
        %v4416 = vmax.f32 %v4160, 0.0
        %v4417 = vpack.c.bf16 %v4162, %v4161
        %v4418 = vpack.c.bf16 %v4164, %v4163
        %v4419 = vpack.c.bf16 %v4166, %v4165
        %v4420 = vpack.c.bf16 %v4168, %v4167
        %v4421 = vpack.c.bf16 %v4170, %v4169
        %v4422 = vpack.c.bf16 %v4172, %v4171
        %v4423 = vpack.c.bf16 %v4174, %v4173
        %v4424 = vpack.c.bf16 %v4176, %v4175
        %v4425 = vpack.c.bf16 %v4178, %v4177
        %v4426 = vpack.c.bf16 %v4180, %v4179
        %v4427 = vpack.c.bf16 %v4182, %v4181
        %v4428 = vpack.c.bf16 %v4184, %v4183
        %v4429 = vpack.c.bf16 %v4186, %v4185
        %v4430 = vpack.c.bf16 %v4188, %v4187
        %v4431 = vpack.c.bf16 %v4190, %v4189
        %v4432 = vpack.c.bf16 %v4192, %v4191
        %v4433 = vpack.c.bf16 %v4194, %v4193
        %v4434 = vpack.c.bf16 %v4196, %v4195
        %v4435 = vpack.c.bf16 %v4198, %v4197
        %v4436 = vpack.c.bf16 %v4200, %v4199
        %v4437 = vpack.c.bf16 %v4202, %v4201
        %v4438 = vpack.c.bf16 %v4204, %v4203
        %v4439 = vpack.c.bf16 %v4206, %v4205
        %v4440 = vpack.c.bf16 %v4208, %v4207
        %v4441 = vpack.c.bf16 %v4210, %v4209
        %v4442 = vpack.c.bf16 %v4212, %v4211
        %v4443 = vpack.c.bf16 %v4214, %v4213
        %v4444 = vpack.c.bf16 %v4216, %v4215
        %v4445 = vpack.c.bf16 %v4218, %v4217
        %v4446 = vpack.c.bf16 %v4220, %v4219
        %v4447 = vpack.c.bf16 %v4222, %v4221
        %v4448 = vpack.c.bf16 %v4224, %v4223
        %v4449 = vpack.c.bf16 %v4226, %v4225
        %v4450 = vpack.c.bf16 %v4228, %v4227
        %v4451 = vpack.c.bf16 %v4230, %v4229
        %v4452 = vpack.c.bf16 %v4232, %v4231
        %v4453 = vpack.c.bf16 %v4234, %v4233
        %v4454 = vpack.c.bf16 %v4236, %v4235
        %v4455 = vpack.c.bf16 %v4238, %v4237
        %v4456 = vpack.c.bf16 %v4240, %v4239
        %v4457 = vpack.c.bf16 %v4242, %v4241
        %v4458 = vpack.c.bf16 %v4244, %v4243
        %v4459 = vpack.c.bf16 %v4246, %v4245
        %v4460 = vpack.c.bf16 %v4248, %v4247
        %v4461 = vpack.c.bf16 %v4250, %v4249
        %v4462 = vpack.c.bf16 %v4252, %v4251
        %v4463 = vpack.c.bf16 %v4254, %v4253
        %v4464 = vpack.c.bf16 %v4256, %v4255
        %v4465 = vpack.c.bf16 %v4258, %v4257
        %v4466 = vpack.c.bf16 %v4260, %v4259
        %v4467 = vpack.c.bf16 %v4262, %v4261
        %v4468 = vpack.c.bf16 %v4264, %v4263
        %v4469 = vpack.c.bf16 %v4266, %v4265
        %v4470 = vpack.c.bf16 %v4268, %v4267
        %v4471 = vpack.c.bf16 %v4270, %v4269
        %v4472 = vpack.c.bf16 %v4272, %v4271
        %v4473 = vpack.c.bf16 %v4274, %v4273
        %v4474 = vpack.c.bf16 %v4276, %v4275
        %v4475 = vpack.c.bf16 %v4278, %v4277
        %v4476 = vpack.c.bf16 %v4280, %v4279
        %v4477 = vpack.c.bf16 %v4282, %v4281
        %v4478 = vpack.c.bf16 %v4284, %v4283
        %v4479 = vpack.c.bf16 %v4286, %v4285
        %v4480 = vpack.c.bf16 %v4288, %v4287
        %v4481 = vpack.c.bf16 %v4290, %v4289
        %v4482 = vpack.c.bf16 %v4292, %v4291
        %v4483 = vpack.c.bf16 %v4294, %v4293
        %v4484 = vpack.c.bf16 %v4296, %v4295
        %v4485 = vpack.c.bf16 %v4298, %v4297
        %v4486 = vpack.c.bf16 %v4300, %v4299
        %v4487 = vpack.c.bf16 %v4302, %v4301
        %v4488 = vpack.c.bf16 %v4304, %v4303
        %v4489 = vpack.c.bf16 %v4306, %v4305
        %v4490 = vpack.c.bf16 %v4308, %v4307
        %v4491 = vpack.c.bf16 %v4310, %v4309
        %v4492 = vpack.c.bf16 %v4312, %v4311
        %v4493 = vpack.c.bf16 %v4314, %v4313
        %v4494 = vpack.c.bf16 %v4316, %v4315
        %v4495 = vpack.c.bf16 %v4318, %v4317
        %v4496 = vpack.c.bf16 %v4320, %v4319
        %v4497 = vpack.c.bf16 %v4322, %v4321
        %v4498 = vpack.c.bf16 %v4324, %v4323
        %v4499 = vpack.c.bf16 %v4326, %v4325
        %v4500 = vpack.c.bf16 %v4328, %v4327
        %v4501 = vpack.c.bf16 %v4330, %v4329
        %v4502 = vpack.c.bf16 %v4332, %v4331
        %v4503 = vpack.c.bf16 %v4334, %v4333
        %v4504 = vpack.c.bf16 %v4336, %v4335
        %v4505 = vpack.c.bf16 %v4338, %v4337
        %v4506 = vpack.c.bf16 %v4340, %v4339
        %v4507 = vpack.c.bf16 %v4342, %v4341
        %v4508 = vpack.c.bf16 %v4344, %v4343
        %v4509 = vpack.c.bf16 %v4346, %v4345
        %v4510 = vpack.c.bf16 %v4348, %v4347
        %v4511 = vpack.c.bf16 %v4350, %v4349
        %v4512 = vpack.c.bf16 %v4352, %v4351
        %v4513 = vpack.c.bf16 %v4354, %v4353
        %v4514 = vpack.c.bf16 %v4356, %v4355
        %v4515 = vpack.c.bf16 %v4358, %v4357
        %v4516 = vpack.c.bf16 %v4360, %v4359
        %v4517 = vpack.c.bf16 %v4362, %v4361
        %v4518 = vpack.c.bf16 %v4364, %v4363
        %v4519 = vpack.c.bf16 %v4366, %v4365
        %v4520 = vpack.c.bf16 %v4368, %v4367
        %v4521 = vpack.c.bf16 %v4370, %v4369
        %v4522 = vpack.c.bf16 %v4372, %v4371
        %v4523 = vpack.c.bf16 %v4374, %v4373
        %v4524 = vpack.c.bf16 %v4376, %v4375
        %v4525 = vpack.c.bf16 %v4378, %v4377
        %v4526 = vpack.c.bf16 %v4380, %v4379
        %v4527 = vpack.c.bf16 %v4382, %v4381
        %v4528 = vpack.c.bf16 %v4384, %v4383
        %v4529 = vpack.c.bf16 %v4386, %v4385
        %v4530 = vpack.c.bf16 %v4388, %v4387
        %v4531 = vpack.c.bf16 %v4390, %v4389
        %v4532 = vpack.c.bf16 %v4392, %v4391
        %v4533 = vpack.c.bf16 %v4394, %v4393
        %v4534 = vpack.c.bf16 %v4396, %v4395
        %v4535 = vpack.c.bf16 %v4398, %v4397
        %v4536 = vpack.c.bf16 %v4400, %v4399
        %v4537 = vpack.c.bf16 %v4402, %v4401
        %v4538 = vpack.c.bf16 %v4404, %v4403
        %v4539 = vpack.c.bf16 %v4406, %v4405
        %v4540 = vpack.c.bf16 %v4408, %v4407
        %v4541 = vpack.c.bf16 %v4410, %v4409
        %v4542 = vpack.c.bf16 %v4412, %v4411
        %v4543 = vpack.c.bf16 %v4414, %v4413
        %v4544 = vpack.c.bf16 %v4416, %v4415
        %v4673 = vunpack.c.l.b16 %v4417
        %v4674 = vunpack.c.h.b16 %v4417
        %v4675 = vunpack.c.l.b16 %v4418
        %v4676 = vunpack.c.h.b16 %v4418
        %v4677 = vunpack.c.l.b16 %v4419
        %v4678 = vunpack.c.h.b16 %v4419
        %v4679 = vunpack.c.l.b16 %v4420
        %v4680 = vunpack.c.h.b16 %v4420
        %v4681 = vunpack.c.l.b16 %v4421
        %v4682 = vunpack.c.h.b16 %v4421
        %v4683 = vunpack.c.l.b16 %v4422
        %v4684 = vunpack.c.h.b16 %v4422
        %v4685 = vunpack.c.l.b16 %v4423
        %v4686 = vunpack.c.h.b16 %v4423
        %v4687 = vunpack.c.l.b16 %v4424
        %v4688 = vunpack.c.h.b16 %v4424
        %v4689 = vunpack.c.l.b16 %v4425
        %v4690 = vunpack.c.h.b16 %v4425
        %v4691 = vunpack.c.l.b16 %v4426
        %v4692 = vunpack.c.h.b16 %v4426
        %v4693 = vunpack.c.l.b16 %v4427
        %v4694 = vunpack.c.h.b16 %v4427
        %v4695 = vunpack.c.l.b16 %v4428
        %v4696 = vunpack.c.h.b16 %v4428
        %v4697 = vunpack.c.l.b16 %v4429
        %v4698 = vunpack.c.h.b16 %v4429
        %v4699 = vunpack.c.l.b16 %v4430
        %v4700 = vunpack.c.h.b16 %v4430
        %v4701 = vunpack.c.l.b16 %v4431
        %v4702 = vunpack.c.h.b16 %v4431
        %v4703 = vunpack.c.l.b16 %v4432
        %v4704 = vunpack.c.h.b16 %v4432
        %v4705 = vunpack.c.l.b16 %v4433
        %v4706 = vunpack.c.h.b16 %v4433
        %v4707 = vunpack.c.l.b16 %v4434
        %v4708 = vunpack.c.h.b16 %v4434
        %v4709 = vunpack.c.l.b16 %v4435
        %v4710 = vunpack.c.h.b16 %v4435
        %v4711 = vunpack.c.l.b16 %v4436
        %v4712 = vunpack.c.h.b16 %v4436
        %v4713 = vunpack.c.l.b16 %v4437
        %v4714 = vunpack.c.h.b16 %v4437
        %v4715 = vunpack.c.l.b16 %v4438
        %v4716 = vunpack.c.h.b16 %v4438
        %v4717 = vunpack.c.l.b16 %v4439
        %v4718 = vunpack.c.h.b16 %v4439
        %v4719 = vunpack.c.l.b16 %v4440
        %v4720 = vunpack.c.h.b16 %v4440
        %v4721 = vunpack.c.l.b16 %v4441
        %v4722 = vunpack.c.h.b16 %v4441
        %v4723 = vunpack.c.l.b16 %v4442
        %v4724 = vunpack.c.h.b16 %v4442
        %v4725 = vunpack.c.l.b16 %v4443
        %v4726 = vunpack.c.h.b16 %v4443
        %v4727 = vunpack.c.l.b16 %v4444
        %v4728 = vunpack.c.h.b16 %v4444
        %v4729 = vunpack.c.l.b16 %v4445
        %v4730 = vunpack.c.h.b16 %v4445
        %v4731 = vunpack.c.l.b16 %v4446
        %v4732 = vunpack.c.h.b16 %v4446
        %v4733 = vunpack.c.l.b16 %v4447
        %v4734 = vunpack.c.h.b16 %v4447
        %v4735 = vunpack.c.l.b16 %v4448
        %v4736 = vunpack.c.h.b16 %v4448
        %v4737 = vunpack.c.l.b16 %v4449
        %v4738 = vunpack.c.h.b16 %v4449
        %v4739 = vunpack.c.l.b16 %v4450
        %v4740 = vunpack.c.h.b16 %v4450
        %v4741 = vunpack.c.l.b16 %v4451
        %v4742 = vunpack.c.h.b16 %v4451
        %v4743 = vunpack.c.l.b16 %v4452
        %v4744 = vunpack.c.h.b16 %v4452
        %v4745 = vunpack.c.l.b16 %v4453
        %v4746 = vunpack.c.h.b16 %v4453
        %v4747 = vunpack.c.l.b16 %v4454
        %v4748 = vunpack.c.h.b16 %v4454
        %v4749 = vunpack.c.l.b16 %v4455
        %v4750 = vunpack.c.h.b16 %v4455
        %v4751 = vunpack.c.l.b16 %v4456
        %v4752 = vunpack.c.h.b16 %v4456
        %v4753 = vunpack.c.l.b16 %v4457
        %v4754 = vunpack.c.h.b16 %v4457
        %v4755 = vunpack.c.l.b16 %v4458
        %v4756 = vunpack.c.h.b16 %v4458
        %v4757 = vunpack.c.l.b16 %v4459
        %v4758 = vunpack.c.h.b16 %v4459
        %v4759 = vunpack.c.l.b16 %v4460
        %v4760 = vunpack.c.h.b16 %v4460
        %v4761 = vunpack.c.l.b16 %v4461
        %v4762 = vunpack.c.h.b16 %v4461
        %v4763 = vunpack.c.l.b16 %v4462
        %v4764 = vunpack.c.h.b16 %v4462
        %v4765 = vunpack.c.l.b16 %v4463
        %v4766 = vunpack.c.h.b16 %v4463
        %v4767 = vunpack.c.l.b16 %v4464
        %v4768 = vunpack.c.h.b16 %v4464
        %v4769 = vunpack.c.l.b16 %v4465
        %v4770 = vunpack.c.h.b16 %v4465
        %v4771 = vunpack.c.l.b16 %v4466
        %v4772 = vunpack.c.h.b16 %v4466
        %v4773 = vunpack.c.l.b16 %v4467
        %v4774 = vunpack.c.h.b16 %v4467
        %v4775 = vunpack.c.l.b16 %v4468
        %v4776 = vunpack.c.h.b16 %v4468
        %v4777 = vunpack.c.l.b16 %v4469
        %v4778 = vunpack.c.h.b16 %v4469
        %v4779 = vunpack.c.l.b16 %v4470
        %v4780 = vunpack.c.h.b16 %v4470
        %v4781 = vunpack.c.l.b16 %v4471
        %v4782 = vunpack.c.h.b16 %v4471
        %v4783 = vunpack.c.l.b16 %v4472
        %v4784 = vunpack.c.h.b16 %v4472
        %v4785 = vunpack.c.l.b16 %v4473
        %v4786 = vunpack.c.h.b16 %v4473
        %v4787 = vunpack.c.l.b16 %v4474
        %v4788 = vunpack.c.h.b16 %v4474
        %v4789 = vunpack.c.l.b16 %v4475
        %v4790 = vunpack.c.h.b16 %v4475
        %v4791 = vunpack.c.l.b16 %v4476
        %v4792 = vunpack.c.h.b16 %v4476
        %v4793 = vunpack.c.l.b16 %v4477
        %v4794 = vunpack.c.h.b16 %v4477
        %v4795 = vunpack.c.l.b16 %v4478
        %v4796 = vunpack.c.h.b16 %v4478
        %v4797 = vunpack.c.l.b16 %v4479
        %v4798 = vunpack.c.h.b16 %v4479
        %v4799 = vunpack.c.l.b16 %v4480
        %v4800 = vunpack.c.h.b16 %v4480
        %v4801 = vunpack.c.l.b16 %v4481
        %v4802 = vunpack.c.h.b16 %v4481
        %v4803 = vunpack.c.l.b16 %v4482
        %v4804 = vunpack.c.h.b16 %v4482
        %v4805 = vunpack.c.l.b16 %v4483
        %v4806 = vunpack.c.h.b16 %v4483
        %v4807 = vunpack.c.l.b16 %v4484
        %v4808 = vunpack.c.h.b16 %v4484
        %v4809 = vunpack.c.l.b16 %v4485
        %v4810 = vunpack.c.h.b16 %v4485
        %v4811 = vunpack.c.l.b16 %v4486
        %v4812 = vunpack.c.h.b16 %v4486
        %v4813 = vunpack.c.l.b16 %v4487
        %v4814 = vunpack.c.h.b16 %v4487
        %v4815 = vunpack.c.l.b16 %v4488
        %v4816 = vunpack.c.h.b16 %v4488
        %v4817 = vunpack.c.l.b16 %v4489
        %v4818 = vunpack.c.h.b16 %v4489
        %v4819 = vunpack.c.l.b16 %v4490
        %v4820 = vunpack.c.h.b16 %v4490
        %v4821 = vunpack.c.l.b16 %v4491
        %v4822 = vunpack.c.h.b16 %v4491
        %v4823 = vunpack.c.l.b16 %v4492
        %v4824 = vunpack.c.h.b16 %v4492
        %v4825 = vunpack.c.l.b16 %v4493
        %v4826 = vunpack.c.h.b16 %v4493
        %v4827 = vunpack.c.l.b16 %v4494
        %v4828 = vunpack.c.h.b16 %v4494
        %v4829 = vunpack.c.l.b16 %v4495
        %v4830 = vunpack.c.h.b16 %v4495
        %v4831 = vunpack.c.l.b16 %v4496
        %v4832 = vunpack.c.h.b16 %v4496
        %v4833 = vunpack.c.l.b16 %v4497
        %v4834 = vunpack.c.h.b16 %v4497
        %v4835 = vunpack.c.l.b16 %v4498
        %v4836 = vunpack.c.h.b16 %v4498
        %v4837 = vunpack.c.l.b16 %v4499
        %v4838 = vunpack.c.h.b16 %v4499
        %v4839 = vunpack.c.l.b16 %v4500
        %v4840 = vunpack.c.h.b16 %v4500
        %v4841 = vunpack.c.l.b16 %v4501
        %v4842 = vunpack.c.h.b16 %v4501
        %v4843 = vunpack.c.l.b16 %v4502
        %v4844 = vunpack.c.h.b16 %v4502
        %v4845 = vunpack.c.l.b16 %v4503
        %v4846 = vunpack.c.h.b16 %v4503
        %v4847 = vunpack.c.l.b16 %v4504
        %v4848 = vunpack.c.h.b16 %v4504
        %v4849 = vunpack.c.l.b16 %v4505
        %v4850 = vunpack.c.h.b16 %v4505
        %v4851 = vunpack.c.l.b16 %v4506
        %v4852 = vunpack.c.h.b16 %v4506
        %v4853 = vunpack.c.l.b16 %v4507
        %v4854 = vunpack.c.h.b16 %v4507
        %v4855 = vunpack.c.l.b16 %v4508
        %v4856 = vunpack.c.h.b16 %v4508
        %v4857 = vunpack.c.l.b16 %v4509
        %v4858 = vunpack.c.h.b16 %v4509
        %v4859 = vunpack.c.l.b16 %v4510
        %v4860 = vunpack.c.h.b16 %v4510
        %v4861 = vunpack.c.l.b16 %v4511
        %v4862 = vunpack.c.h.b16 %v4511
        %v4863 = vunpack.c.l.b16 %v4512
        %v4864 = vunpack.c.h.b16 %v4512
        %v4865 = vunpack.c.l.b16 %v4513
        %v4866 = vunpack.c.h.b16 %v4513
        %v4867 = vunpack.c.l.b16 %v4514
        %v4868 = vunpack.c.h.b16 %v4514
        %v4869 = vunpack.c.l.b16 %v4515
        %v4870 = vunpack.c.h.b16 %v4515
        %v4871 = vunpack.c.l.b16 %v4516
        %v4872 = vunpack.c.h.b16 %v4516
        %v4873 = vunpack.c.l.b16 %v4517
        %v4874 = vunpack.c.h.b16 %v4517
        %v4875 = vunpack.c.l.b16 %v4518
        %v4876 = vunpack.c.h.b16 %v4518
        %v4877 = vunpack.c.l.b16 %v4519
        %v4878 = vunpack.c.h.b16 %v4519
        %v4879 = vunpack.c.l.b16 %v4520
        %v4880 = vunpack.c.h.b16 %v4520
        %v4881 = vunpack.c.l.b16 %v4521
        %v4882 = vunpack.c.h.b16 %v4521
        %v4883 = vunpack.c.l.b16 %v4522
        %v4884 = vunpack.c.h.b16 %v4522
        %v4885 = vunpack.c.l.b16 %v4523
        %v4886 = vunpack.c.h.b16 %v4523
        %v4887 = vunpack.c.l.b16 %v4524
        %v4888 = vunpack.c.h.b16 %v4524
        %v4889 = vunpack.c.l.b16 %v4525
        %v4890 = vunpack.c.h.b16 %v4525
        %v4891 = vunpack.c.l.b16 %v4526
        %v4892 = vunpack.c.h.b16 %v4526
        %v4893 = vunpack.c.l.b16 %v4527
        %v4894 = vunpack.c.h.b16 %v4527
        %v4895 = vunpack.c.l.b16 %v4528
        %v4896 = vunpack.c.h.b16 %v4528
        %v4897 = vunpack.c.l.b16 %v4529
        %v4898 = vunpack.c.h.b16 %v4529
        %v4899 = vunpack.c.l.b16 %v4530
        %v4900 = vunpack.c.h.b16 %v4530
        %v4901 = vunpack.c.l.b16 %v4531
        %v4902 = vunpack.c.h.b16 %v4531
        %v4903 = vunpack.c.l.b16 %v4532
        %v4904 = vunpack.c.h.b16 %v4532
        %v4905 = vunpack.c.l.b16 %v4533
        %v4906 = vunpack.c.h.b16 %v4533
        %v4907 = vunpack.c.l.b16 %v4534
        %v4908 = vunpack.c.h.b16 %v4534
        %v4909 = vunpack.c.l.b16 %v4535
        %v4910 = vunpack.c.h.b16 %v4535
        %v4911 = vunpack.c.l.b16 %v4536
        %v4912 = vunpack.c.h.b16 %v4536
        %v4913 = vunpack.c.l.b16 %v4537
        %v4914 = vunpack.c.h.b16 %v4537
        %v4915 = vunpack.c.l.b16 %v4538
        %v4916 = vunpack.c.h.b16 %v4538
        %v4917 = vunpack.c.l.b16 %v4539
        %v4918 = vunpack.c.h.b16 %v4539
        %v4919 = vunpack.c.l.b16 %v4540
        %v4920 = vunpack.c.h.b16 %v4540
        %v4921 = vunpack.c.l.b16 %v4541
        %v4922 = vunpack.c.h.b16 %v4541
        %v4923 = vunpack.c.l.b16 %v4542
        %v4924 = vunpack.c.h.b16 %v4542
        %v4925 = vunpack.c.l.b16 %v4543
        %v4926 = vunpack.c.h.b16 %v4543
        %v4927 = vunpack.c.l.b16 %v4544
        %v4928 = vunpack.c.h.b16 %v4544
        %v4929 = vpack.c.b16 %v4673, %v4673
        %v4930 = vpack.c.b16 %v4674, %v4674
        %v4931 = vpack.c.b16 %v4675, %v4675
        %v4932 = vpack.c.b16 %v4676, %v4676
        %v4933 = vpack.c.b16 %v4677, %v4677
        %v4934 = vpack.c.b16 %v4678, %v4678
        %v4935 = vpack.c.b16 %v4679, %v4679
        %v4936 = vpack.c.b16 %v4680, %v4680
        %v4937 = vpack.c.b16 %v4681, %v4681
        %v4938 = vpack.c.b16 %v4682, %v4682
        %v4939 = vpack.c.b16 %v4683, %v4683
        %v4940 = vpack.c.b16 %v4684, %v4684
        %v4941 = vpack.c.b16 %v4685, %v4685
        %v4942 = vpack.c.b16 %v4686, %v4686
        %v4943 = vpack.c.b16 %v4687, %v4687
        %v4944 = vpack.c.b16 %v4688, %v4688
        %v4945 = vpack.c.b16 %v4689, %v4689
        %v4946 = vpack.c.b16 %v4690, %v4690
        %v4947 = vpack.c.b16 %v4691, %v4691
        %v4948 = vpack.c.b16 %v4692, %v4692
        %v4949 = vpack.c.b16 %v4693, %v4693
        %v4950 = vpack.c.b16 %v4694, %v4694
        %v4951 = vpack.c.b16 %v4695, %v4695
        %v4952 = vpack.c.b16 %v4696, %v4696
        %v4953 = vpack.c.b16 %v4697, %v4697
        %v4954 = vpack.c.b16 %v4698, %v4698
        %v4955 = vpack.c.b16 %v4699, %v4699
        %v4956 = vpack.c.b16 %v4700, %v4700
        %v4957 = vpack.c.b16 %v4701, %v4701
        %v4958 = vpack.c.b16 %v4702, %v4702
        %v4959 = vpack.c.b16 %v4703, %v4703
        %v4960 = vpack.c.b16 %v4704, %v4704
        %v4961 = vpack.c.b16 %v4705, %v4705
        %v4962 = vpack.c.b16 %v4706, %v4706
        %v4963 = vpack.c.b16 %v4707, %v4707
        %v4964 = vpack.c.b16 %v4708, %v4708
        %v4965 = vpack.c.b16 %v4709, %v4709
        %v4966 = vpack.c.b16 %v4710, %v4710
        %v4967 = vpack.c.b16 %v4711, %v4711
        %v4968 = vpack.c.b16 %v4712, %v4712
        %v4969 = vpack.c.b16 %v4713, %v4713
        %v4970 = vpack.c.b16 %v4714, %v4714
        %v4971 = vpack.c.b16 %v4715, %v4715
        %v4972 = vpack.c.b16 %v4716, %v4716
        %v4973 = vpack.c.b16 %v4717, %v4717
        %v4974 = vpack.c.b16 %v4718, %v4718
        %v4975 = vpack.c.b16 %v4719, %v4719
        %v4976 = vpack.c.b16 %v4720, %v4720
        %v4977 = vpack.c.b16 %v4721, %v4721
        %v4978 = vpack.c.b16 %v4722, %v4722
        %v4979 = vpack.c.b16 %v4723, %v4723
        %v4980 = vpack.c.b16 %v4724, %v4724
        %v4981 = vpack.c.b16 %v4725, %v4725
        %v4982 = vpack.c.b16 %v4726, %v4726
        %v4983 = vpack.c.b16 %v4727, %v4727
        %v4984 = vpack.c.b16 %v4728, %v4728
        %v4985 = vpack.c.b16 %v4729, %v4729
        %v4986 = vpack.c.b16 %v4730, %v4730
        %v4987 = vpack.c.b16 %v4731, %v4731
        %v4988 = vpack.c.b16 %v4732, %v4732
        %v4989 = vpack.c.b16 %v4733, %v4733
        %v4990 = vpack.c.b16 %v4734, %v4734
        %v4991 = vpack.c.b16 %v4735, %v4735
        %v4992 = vpack.c.b16 %v4736, %v4736
        %v4993 = vpack.c.b16 %v4737, %v4737
        %v4994 = vpack.c.b16 %v4738, %v4738
        %v4995 = vpack.c.b16 %v4739, %v4739
        %v4996 = vpack.c.b16 %v4740, %v4740
        %v4997 = vpack.c.b16 %v4741, %v4741
        %v4998 = vpack.c.b16 %v4742, %v4742
        %v4999 = vpack.c.b16 %v4743, %v4743
        %v5000 = vpack.c.b16 %v4744, %v4744
        %v5001 = vpack.c.b16 %v4745, %v4745
        %v5002 = vpack.c.b16 %v4746, %v4746
        %v5003 = vpack.c.b16 %v4747, %v4747
        %v5004 = vpack.c.b16 %v4748, %v4748
        %v5005 = vpack.c.b16 %v4749, %v4749
        %v5006 = vpack.c.b16 %v4750, %v4750
        %v5007 = vpack.c.b16 %v4751, %v4751
        %v5008 = vpack.c.b16 %v4752, %v4752
        %v5009 = vpack.c.b16 %v4753, %v4753
        %v5010 = vpack.c.b16 %v4754, %v4754
        %v5011 = vpack.c.b16 %v4755, %v4755
        %v5012 = vpack.c.b16 %v4756, %v4756
        %v5013 = vpack.c.b16 %v4757, %v4757
        %v5014 = vpack.c.b16 %v4758, %v4758
        %v5015 = vpack.c.b16 %v4759, %v4759
        %v5016 = vpack.c.b16 %v4760, %v4760
        %v5017 = vpack.c.b16 %v4761, %v4761
        %v5018 = vpack.c.b16 %v4762, %v4762
        %v5019 = vpack.c.b16 %v4763, %v4763
        %v5020 = vpack.c.b16 %v4764, %v4764
        %v5021 = vpack.c.b16 %v4765, %v4765
        %v5022 = vpack.c.b16 %v4766, %v4766
        %v5023 = vpack.c.b16 %v4767, %v4767
        %v5024 = vpack.c.b16 %v4768, %v4768
        %v5025 = vpack.c.b16 %v4769, %v4769
        %v5026 = vpack.c.b16 %v4770, %v4770
        %v5027 = vpack.c.b16 %v4771, %v4771
        %v5028 = vpack.c.b16 %v4772, %v4772
        %v5029 = vpack.c.b16 %v4773, %v4773
        %v5030 = vpack.c.b16 %v4774, %v4774
        %v5031 = vpack.c.b16 %v4775, %v4775
        %v5032 = vpack.c.b16 %v4776, %v4776
        %v5033 = vpack.c.b16 %v4777, %v4777
        %v5034 = vpack.c.b16 %v4778, %v4778
        %v5035 = vpack.c.b16 %v4779, %v4779
        %v5036 = vpack.c.b16 %v4780, %v4780
        %v5037 = vpack.c.b16 %v4781, %v4781
        %v5038 = vpack.c.b16 %v4782, %v4782
        %v5039 = vpack.c.b16 %v4783, %v4783
        %v5040 = vpack.c.b16 %v4784, %v4784
        %v5041 = vpack.c.b16 %v4785, %v4785
        %v5042 = vpack.c.b16 %v4786, %v4786
        %v5043 = vpack.c.b16 %v4787, %v4787
        %v5044 = vpack.c.b16 %v4788, %v4788
        %v5045 = vpack.c.b16 %v4789, %v4789
        %v5046 = vpack.c.b16 %v4790, %v4790
        %v5047 = vpack.c.b16 %v4791, %v4791
        %v5048 = vpack.c.b16 %v4792, %v4792
        %v5049 = vpack.c.b16 %v4793, %v4793
        %v5050 = vpack.c.b16 %v4794, %v4794
        %v5051 = vpack.c.b16 %v4795, %v4795
        %v5052 = vpack.c.b16 %v4796, %v4796
        %v5053 = vpack.c.b16 %v4797, %v4797
        %v5054 = vpack.c.b16 %v4798, %v4798
        %v5055 = vpack.c.b16 %v4799, %v4799
        %v5056 = vpack.c.b16 %v4800, %v4800
        %v5057 = vpack.c.b16 %v4801, %v4801
        %v5058 = vpack.c.b16 %v4802, %v4802
        %v5059 = vpack.c.b16 %v4803, %v4803
        %v5060 = vpack.c.b16 %v4804, %v4804
        %v5061 = vpack.c.b16 %v4805, %v4805
        %v5062 = vpack.c.b16 %v4806, %v4806
        %v5063 = vpack.c.b16 %v4807, %v4807
        %v5064 = vpack.c.b16 %v4808, %v4808
        %v5065 = vpack.c.b16 %v4809, %v4809
        %v5066 = vpack.c.b16 %v4810, %v4810
        %v5067 = vpack.c.b16 %v4811, %v4811
        %v5068 = vpack.c.b16 %v4812, %v4812
        %v5069 = vpack.c.b16 %v4813, %v4813
        %v5070 = vpack.c.b16 %v4814, %v4814
        %v5071 = vpack.c.b16 %v4815, %v4815
        %v5072 = vpack.c.b16 %v4816, %v4816
        %v5073 = vpack.c.b16 %v4817, %v4817
        %v5074 = vpack.c.b16 %v4818, %v4818
        %v5075 = vpack.c.b16 %v4819, %v4819
        %v5076 = vpack.c.b16 %v4820, %v4820
        %v5077 = vpack.c.b16 %v4821, %v4821
        %v5078 = vpack.c.b16 %v4822, %v4822
        %v5079 = vpack.c.b16 %v4823, %v4823
        %v5080 = vpack.c.b16 %v4824, %v4824
        %v5081 = vpack.c.b16 %v4825, %v4825
        %v5082 = vpack.c.b16 %v4826, %v4826
        %v5083 = vpack.c.b16 %v4827, %v4827
        %v5084 = vpack.c.b16 %v4828, %v4828
        %v5085 = vpack.c.b16 %v4829, %v4829
        %v5086 = vpack.c.b16 %v4830, %v4830
        %v5087 = vpack.c.b16 %v4831, %v4831
        %v5088 = vpack.c.b16 %v4832, %v4832
        %v5089 = vpack.c.b16 %v4833, %v4833
        %v5090 = vpack.c.b16 %v4834, %v4834
        %v5091 = vpack.c.b16 %v4835, %v4835
        %v5092 = vpack.c.b16 %v4836, %v4836
        %v5093 = vpack.c.b16 %v4837, %v4837
        %v5094 = vpack.c.b16 %v4838, %v4838
        %v5095 = vpack.c.b16 %v4839, %v4839
        %v5096 = vpack.c.b16 %v4840, %v4840
        %v5097 = vpack.c.b16 %v4841, %v4841
        %v5098 = vpack.c.b16 %v4842, %v4842
        %v5099 = vpack.c.b16 %v4843, %v4843
        %v5100 = vpack.c.b16 %v4844, %v4844
        %v5101 = vpack.c.b16 %v4845, %v4845
        %v5102 = vpack.c.b16 %v4846, %v4846
        %v5103 = vpack.c.b16 %v4847, %v4847
        %v5104 = vpack.c.b16 %v4848, %v4848
        %v5105 = vpack.c.b16 %v4849, %v4849
        %v5106 = vpack.c.b16 %v4850, %v4850
        %v5107 = vpack.c.b16 %v4851, %v4851
        %v5108 = vpack.c.b16 %v4852, %v4852
        %v5109 = vpack.c.b16 %v4853, %v4853
        %v5110 = vpack.c.b16 %v4854, %v4854
        %v5111 = vpack.c.b16 %v4855, %v4855
        %v5112 = vpack.c.b16 %v4856, %v4856
        %v5113 = vpack.c.b16 %v4857, %v4857
        %v5114 = vpack.c.b16 %v4858, %v4858
        %v5115 = vpack.c.b16 %v4859, %v4859
        %v5116 = vpack.c.b16 %v4860, %v4860
        %v5117 = vpack.c.b16 %v4861, %v4861
        %v5118 = vpack.c.b16 %v4862, %v4862
        %v5119 = vpack.c.b16 %v4863, %v4863
        %v5120 = vpack.c.b16 %v4864, %v4864
        %v5121 = vpack.c.b16 %v4865, %v4865
        %v5122 = vpack.c.b16 %v4866, %v4866
        %v5123 = vpack.c.b16 %v4867, %v4867
        %v5124 = vpack.c.b16 %v4868, %v4868
        %v5125 = vpack.c.b16 %v4869, %v4869
        %v5126 = vpack.c.b16 %v4870, %v4870
        %v5127 = vpack.c.b16 %v4871, %v4871
        %v5128 = vpack.c.b16 %v4872, %v4872
        %v5129 = vpack.c.b16 %v4873, %v4873
        %v5130 = vpack.c.b16 %v4874, %v4874
        %v5131 = vpack.c.b16 %v4875, %v4875
        %v5132 = vpack.c.b16 %v4876, %v4876
        %v5133 = vpack.c.b16 %v4877, %v4877
        %v5134 = vpack.c.b16 %v4878, %v4878
        %v5135 = vpack.c.b16 %v4879, %v4879
        %v5136 = vpack.c.b16 %v4880, %v4880
        %v5137 = vpack.c.b16 %v4881, %v4881
        %v5138 = vpack.c.b16 %v4882, %v4882
        %v5139 = vpack.c.b16 %v4883, %v4883
        %v5140 = vpack.c.b16 %v4884, %v4884
        %v5141 = vpack.c.b16 %v4885, %v4885
        %v5142 = vpack.c.b16 %v4886, %v4886
        %v5143 = vpack.c.b16 %v4887, %v4887
        %v5144 = vpack.c.b16 %v4888, %v4888
        %v5145 = vpack.c.b16 %v4889, %v4889
        %v5146 = vpack.c.b16 %v4890, %v4890
        %v5147 = vpack.c.b16 %v4891, %v4891
        %v5148 = vpack.c.b16 %v4892, %v4892
        %v5149 = vpack.c.b16 %v4893, %v4893
        %v5150 = vpack.c.b16 %v4894, %v4894
        %v5151 = vpack.c.b16 %v4895, %v4895
        %v5152 = vpack.c.b16 %v4896, %v4896
        %v5153 = vpack.c.b16 %v4897, %v4897
        %v5154 = vpack.c.b16 %v4898, %v4898
        %v5155 = vpack.c.b16 %v4899, %v4899
        %v5156 = vpack.c.b16 %v4900, %v4900
        %v5157 = vpack.c.b16 %v4901, %v4901
        %v5158 = vpack.c.b16 %v4902, %v4902
        %v5159 = vpack.c.b16 %v4903, %v4903
        %v5160 = vpack.c.b16 %v4904, %v4904
        %v5161 = vpack.c.b16 %v4905, %v4905
        %v5162 = vpack.c.b16 %v4906, %v4906
        %v5163 = vpack.c.b16 %v4907, %v4907
        %v5164 = vpack.c.b16 %v4908, %v4908
        %v5165 = vpack.c.b16 %v4909, %v4909
        %v5166 = vpack.c.b16 %v4910, %v4910
        %v5167 = vpack.c.b16 %v4911, %v4911
        %v5168 = vpack.c.b16 %v4912, %v4912
        %v5169 = vpack.c.b16 %v4913, %v4913
        %v5170 = vpack.c.b16 %v4914, %v4914
        %v5171 = vpack.c.b16 %v4915, %v4915
        %v5172 = vpack.c.b16 %v4916, %v4916
        %v5173 = vpack.c.b16 %v4917, %v4917
        %v5174 = vpack.c.b16 %v4918, %v4918
        %v5175 = vpack.c.b16 %v4919, %v4919
        %v5176 = vpack.c.b16 %v4920, %v4920
        %v5177 = vpack.c.b16 %v4921, %v4921
        %v5178 = vpack.c.b16 %v4922, %v4922
        %v5179 = vpack.c.b16 %v4923, %v4923
        %v5180 = vpack.c.b16 %v4924, %v4924
        %v5181 = vpack.c.b16 %v4925, %v4925
        %v5182 = vpack.c.b16 %v4926, %v4926
        %v5183 = vpack.c.b16 %v4927, %v4927
        %v5184 = vpack.c.b16 %v4928, %v4928
        %5441 = vst [vmem:[%s230] sm:$0xf] %v4929
        %5442 = vst [vmem:[%s230 + $0x4] sm:$0xf] %v4930
        %5443 = vst [vmem:[%s230 + $0x8] sm:$0xf] %v4931
        %5444 = vst [vmem:[%s230 + $0xc] sm:$0xf] %v4932
        %5445 = vst [vmem:[%s230 + $0x10] sm:$0xf] %v4933
        %5446 = vst [vmem:[%s230 + $0x14] sm:$0xf] %v4934
        %5447 = vst [vmem:[%s230 + $0x18] sm:$0xf] %v4935
        %5448 = vst [vmem:[%s230 + $0x1c] sm:$0xf] %v4936
        %5449 = vst [vmem:[%s230 + $0x20] sm:$0xf] %v4937
        %5450 = vst [vmem:[%s230 + $0x24] sm:$0xf] %v4938
        %5451 = vst [vmem:[%s230 + $0x28] sm:$0xf] %v4939
        %5452 = vst [vmem:[%s230 + $0x2c] sm:$0xf] %v4940
        %5453 = vst [vmem:[%s230 + $0x30] sm:$0xf] %v4941
        %5454 = vst [vmem:[%s230 + $0x34] sm:$0xf] %v4942
        %5455 = vst [vmem:[%s230 + $0x38] sm:$0xf] %v4943
        %5456 = vst [vmem:[%s230 + $0x3c] sm:$0xf] %v4944
        %5457 = vst [vmem:[%s230 + $0x40] sm:$0xf] %v4945
        %5458 = vst [vmem:[%s230 + $0x44] sm:$0xf] %v4946
        %5459 = vst [vmem:[%s230 + $0x48] sm:$0xf] %v4947
        %5460 = vst [vmem:[%s230 + $0x4c] sm:$0xf] %v4948
        %5461 = vst [vmem:[%s230 + $0x50] sm:$0xf] %v4949
        %5462 = vst [vmem:[%s230 + $0x54] sm:$0xf] %v4950
        %5463 = vst [vmem:[%s230 + $0x58] sm:$0xf] %v4951
        %5464 = vst [vmem:[%s230 + $0x5c] sm:$0xf] %v4952
        %5465 = vst [vmem:[%s230 + $0x60] sm:$0xf] %v4953
        %5466 = vst [vmem:[%s230 + $0x64] sm:$0xf] %v4954
        %5467 = vst [vmem:[%s230 + $0x68] sm:$0xf] %v4955
        %5468 = vst [vmem:[%s230 + $0x6c] sm:$0xf] %v4956
        %5469 = vst [vmem:[%s230 + $0x70] sm:$0xf] %v4957
        %5470 = vst [vmem:[%s230 + $0x74] sm:$0xf] %v4958
        %5471 = vst [vmem:[%s230 + $0x78] sm:$0xf] %v4959
        %5472 = vst [vmem:[%s230 + $0x7c] sm:$0xf] %v4960
        %5473 = vst [vmem:[%s230 + $0x80] sm:$0xf] %v4961
        %5474 = vst [vmem:[%s230 + $0x84] sm:$0xf] %v4962
        %5475 = vst [vmem:[%s230 + $0x88] sm:$0xf] %v4963
        %5476 = vst [vmem:[%s230 + $0x8c] sm:$0xf] %v4964
        %5477 = vst [vmem:[%s230 + $0x90] sm:$0xf] %v4965
        %5478 = vst [vmem:[%s230 + $0x94] sm:$0xf] %v4966
        %5479 = vst [vmem:[%s230 + $0x98] sm:$0xf] %v4967
        %5480 = vst [vmem:[%s230 + $0x9c] sm:$0xf] %v4968
        %5481 = vst [vmem:[%s230 + $0xa0] sm:$0xf] %v4969
        %5482 = vst [vmem:[%s230 + $0xa4] sm:$0xf] %v4970
        %5483 = vst [vmem:[%s230 + $0xa8] sm:$0xf] %v4971
        %5484 = vst [vmem:[%s230 + $0xac] sm:$0xf] %v4972
        %5485 = vst [vmem:[%s230 + $0xb0] sm:$0xf] %v4973
        %5486 = vst [vmem:[%s230 + $0xb4] sm:$0xf] %v4974
        %5487 = vst [vmem:[%s230 + $0xb8] sm:$0xf] %v4975
        %5488 = vst [vmem:[%s230 + $0xbc] sm:$0xf] %v4976
        %5489 = vst [vmem:[%s230 + $0xc0] sm:$0xf] %v4977
        %5490 = vst [vmem:[%s230 + $0xc4] sm:$0xf] %v4978
        %5491 = vst [vmem:[%s230 + $0xc8] sm:$0xf] %v4979
        %5492 = vst [vmem:[%s230 + $0xcc] sm:$0xf] %v4980
        %5493 = vst [vmem:[%s230 + $0xd0] sm:$0xf] %v4981
        %5494 = vst [vmem:[%s230 + $0xd4] sm:$0xf] %v4982
        %5495 = vst [vmem:[%s230 + $0xd8] sm:$0xf] %v4983
        %5496 = vst [vmem:[%s230 + $0xdc] sm:$0xf] %v4984
        %5497 = vst [vmem:[%s230 + $0xe0] sm:$0xf] %v4985
        %5498 = vst [vmem:[%s230 + $0xe4] sm:$0xf] %v4986
        %5499 = vst [vmem:[%s230 + $0xe8] sm:$0xf] %v4987
        %5500 = vst [vmem:[%s230 + $0xec] sm:$0xf] %v4988
        %5501 = vst [vmem:[%s230 + $0xf0] sm:$0xf] %v4989
        %5502 = vst [vmem:[%s230 + $0xf4] sm:$0xf] %v4990
        %5503 = vst [vmem:[%s230 + $0xf8] sm:$0xf] %v4991
        %5504 = vst [vmem:[%s230 + $0xfc] sm:$0xf] %v4992
        %5505 = vst [vmem:[%s230 + $0x100] sm:$0xf] %v4993
        %5506 = vst [vmem:[%s230 + $0x104] sm:$0xf] %v4994
        %5507 = vst [vmem:[%s230 + $0x108] sm:$0xf] %v4995
        %5508 = vst [vmem:[%s230 + $0x10c] sm:$0xf] %v4996
        %5509 = vst [vmem:[%s230 + $0x110] sm:$0xf] %v4997
        %5510 = vst [vmem:[%s230 + $0x114] sm:$0xf] %v4998
        %5511 = vst [vmem:[%s230 + $0x118] sm:$0xf] %v4999
        %5512 = vst [vmem:[%s230 + $0x11c] sm:$0xf] %v5000
        %5513 = vst [vmem:[%s230 + $0x120] sm:$0xf] %v5001
        %5514 = vst [vmem:[%s230 + $0x124] sm:$0xf] %v5002
        %5515 = vst [vmem:[%s230 + $0x128] sm:$0xf] %v5003
        %5516 = vst [vmem:[%s230 + $0x12c] sm:$0xf] %v5004
        %5517 = vst [vmem:[%s230 + $0x130] sm:$0xf] %v5005
        %5518 = vst [vmem:[%s230 + $0x134] sm:$0xf] %v5006
        %5519 = vst [vmem:[%s230 + $0x138] sm:$0xf] %v5007
        %5520 = vst [vmem:[%s230 + $0x13c] sm:$0xf] %v5008
        %5521 = vst [vmem:[%s230 + $0x140] sm:$0xf] %v5009
        %5522 = vst [vmem:[%s230 + $0x144] sm:$0xf] %v5010
        %5523 = vst [vmem:[%s230 + $0x148] sm:$0xf] %v5011
        %5524 = vst [vmem:[%s230 + $0x14c] sm:$0xf] %v5012
        %5525 = vst [vmem:[%s230 + $0x150] sm:$0xf] %v5013
        %5526 = vst [vmem:[%s230 + $0x154] sm:$0xf] %v5014
        %5527 = vst [vmem:[%s230 + $0x158] sm:$0xf] %v5015
        %5528 = vst [vmem:[%s230 + $0x15c] sm:$0xf] %v5016
        %5529 = vst [vmem:[%s230 + $0x160] sm:$0xf] %v5017
        %5530 = vst [vmem:[%s230 + $0x164] sm:$0xf] %v5018
        %5531 = vst [vmem:[%s230 + $0x168] sm:$0xf] %v5019
        %5532 = vst [vmem:[%s230 + $0x16c] sm:$0xf] %v5020
        %5533 = vst [vmem:[%s230 + $0x170] sm:$0xf] %v5021
        %5534 = vst [vmem:[%s230 + $0x174] sm:$0xf] %v5022
        %5535 = vst [vmem:[%s230 + $0x178] sm:$0xf] %v5023
        %5536 = vst [vmem:[%s230 + $0x17c] sm:$0xf] %v5024
        %5537 = vst [vmem:[%s230 + $0x180] sm:$0xf] %v5025
        %5538 = vst [vmem:[%s230 + $0x184] sm:$0xf] %v5026
        %5539 = vst [vmem:[%s230 + $0x188] sm:$0xf] %v5027
        %5540 = vst [vmem:[%s230 + $0x18c] sm:$0xf] %v5028
        %5541 = vst [vmem:[%s230 + $0x190] sm:$0xf] %v5029
        %5542 = vst [vmem:[%s230 + $0x194] sm:$0xf] %v5030
        %5543 = vst [vmem:[%s230 + $0x198] sm:$0xf] %v5031
        %5544 = vst [vmem:[%s230 + $0x19c] sm:$0xf] %v5032
        %5545 = vst [vmem:[%s230 + $0x1a0] sm:$0xf] %v5033
        %5546 = vst [vmem:[%s230 + $0x1a4] sm:$0xf] %v5034
        %5547 = vst [vmem:[%s230 + $0x1a8] sm:$0xf] %v5035
        %5548 = vst [vmem:[%s230 + $0x1ac] sm:$0xf] %v5036
        %5549 = vst [vmem:[%s230 + $0x1b0] sm:$0xf] %v5037
        %5550 = vst [vmem:[%s230 + $0x1b4] sm:$0xf] %v5038
        %5551 = vst [vmem:[%s230 + $0x1b8] sm:$0xf] %v5039
        %5552 = vst [vmem:[%s230 + $0x1bc] sm:$0xf] %v5040
        %5553 = vst [vmem:[%s230 + $0x1c0] sm:$0xf] %v5041
        %5554 = vst [vmem:[%s230 + $0x1c4] sm:$0xf] %v5042
        %5555 = vst [vmem:[%s230 + $0x1c8] sm:$0xf] %v5043
        %5556 = vst [vmem:[%s230 + $0x1cc] sm:$0xf] %v5044
        %5557 = vst [vmem:[%s230 + $0x1d0] sm:$0xf] %v5045
        %5558 = vst [vmem:[%s230 + $0x1d4] sm:$0xf] %v5046
        %5559 = vst [vmem:[%s230 + $0x1d8] sm:$0xf] %v5047
        %5560 = vst [vmem:[%s230 + $0x1dc] sm:$0xf] %v5048
        %5561 = vst [vmem:[%s230 + $0x1e0] sm:$0xf] %v5049
        %5562 = vst [vmem:[%s230 + $0x1e4] sm:$0xf] %v5050
        %5563 = vst [vmem:[%s230 + $0x1e8] sm:$0xf] %v5051
        %5564 = vst [vmem:[%s230 + $0x1ec] sm:$0xf] %v5052
        %5565 = vst [vmem:[%s230 + $0x1f0] sm:$0xf] %v5053
        %5566 = vst [vmem:[%s230 + $0x1f4] sm:$0xf] %v5054
        %5567 = vst [vmem:[%s230 + $0x1f8] sm:$0xf] %v5055
        %5568 = vst [vmem:[%s230 + $0x1fc] sm:$0xf] %v5056
        %5569 = vst [vmem:[%s230 + $0x200] sm:$0xf] %v5057
        %5570 = vst [vmem:[%s230 + $0x204] sm:$0xf] %v5058
        %5571 = vst [vmem:[%s230 + $0x208] sm:$0xf] %v5059
        %5572 = vst [vmem:[%s230 + $0x20c] sm:$0xf] %v5060
        %5573 = vst [vmem:[%s230 + $0x210] sm:$0xf] %v5061
        %5574 = vst [vmem:[%s230 + $0x214] sm:$0xf] %v5062
        %5575 = vst [vmem:[%s230 + $0x218] sm:$0xf] %v5063
        %5576 = vst [vmem:[%s230 + $0x21c] sm:$0xf] %v5064
        %5577 = vst [vmem:[%s230 + $0x220] sm:$0xf] %v5065
        %5578 = vst [vmem:[%s230 + $0x224] sm:$0xf] %v5066
        %5579 = vst [vmem:[%s230 + $0x228] sm:$0xf] %v5067
        %5580 = vst [vmem:[%s230 + $0x22c] sm:$0xf] %v5068
        %5581 = vst [vmem:[%s230 + $0x230] sm:$0xf] %v5069
        %5582 = vst [vmem:[%s230 + $0x234] sm:$0xf] %v5070
        %5583 = vst [vmem:[%s230 + $0x238] sm:$0xf] %v5071
        %5584 = vst [vmem:[%s230 + $0x23c] sm:$0xf] %v5072
        %5585 = vst [vmem:[%s230 + $0x240] sm:$0xf] %v5073
        %5586 = vst [vmem:[%s230 + $0x244] sm:$0xf] %v5074
        %5587 = vst [vmem:[%s230 + $0x248] sm:$0xf] %v5075
        %5588 = vst [vmem:[%s230 + $0x24c] sm:$0xf] %v5076
        %5589 = vst [vmem:[%s230 + $0x250] sm:$0xf] %v5077
        %5590 = vst [vmem:[%s230 + $0x254] sm:$0xf] %v5078
        %5591 = vst [vmem:[%s230 + $0x258] sm:$0xf] %v5079
        %5592 = vst [vmem:[%s230 + $0x25c] sm:$0xf] %v5080
        %5593 = vst [vmem:[%s230 + $0x260] sm:$0xf] %v5081
        %5594 = vst [vmem:[%s230 + $0x264] sm:$0xf] %v5082
        %5595 = vst [vmem:[%s230 + $0x268] sm:$0xf] %v5083
        %5596 = vst [vmem:[%s230 + $0x26c] sm:$0xf] %v5084
        %5597 = vst [vmem:[%s230 + $0x270] sm:$0xf] %v5085
        %5598 = vst [vmem:[%s230 + $0x274] sm:$0xf] %v5086
        %5599 = vst [vmem:[%s230 + $0x278] sm:$0xf] %v5087
        %5600 = vst [vmem:[%s230 + $0x27c] sm:$0xf] %v5088
        %5601 = vst [vmem:[%s230 + $0x280] sm:$0xf] %v5089
        %5602 = vst [vmem:[%s230 + $0x284] sm:$0xf] %v5090
        %5603 = vst [vmem:[%s230 + $0x288] sm:$0xf] %v5091
        %5604 = vst [vmem:[%s230 + $0x28c] sm:$0xf] %v5092
        %5605 = vst [vmem:[%s230 + $0x290] sm:$0xf] %v5093
        %5606 = vst [vmem:[%s230 + $0x294] sm:$0xf] %v5094
        %5607 = vst [vmem:[%s230 + $0x298] sm:$0xf] %v5095
        %5608 = vst [vmem:[%s230 + $0x29c] sm:$0xf] %v5096
        %5609 = vst [vmem:[%s230 + $0x2a0] sm:$0xf] %v5097
        %5610 = vst [vmem:[%s230 + $0x2a4] sm:$0xf] %v5098
        %5611 = vst [vmem:[%s230 + $0x2a8] sm:$0xf] %v5099
        %5612 = vst [vmem:[%s230 + $0x2ac] sm:$0xf] %v5100
        %5613 = vst [vmem:[%s230 + $0x2b0] sm:$0xf] %v5101
        %5614 = vst [vmem:[%s230 + $0x2b4] sm:$0xf] %v5102
        %5615 = vst [vmem:[%s230 + $0x2b8] sm:$0xf] %v5103
        %5616 = vst [vmem:[%s230 + $0x2bc] sm:$0xf] %v5104
        %5617 = vst [vmem:[%s230 + $0x2c0] sm:$0xf] %v5105
        %5618 = vst [vmem:[%s230 + $0x2c4] sm:$0xf] %v5106
        %5619 = vst [vmem:[%s230 + $0x2c8] sm:$0xf] %v5107
        %5620 = vst [vmem:[%s230 + $0x2cc] sm:$0xf] %v5108
        %5621 = vst [vmem:[%s230 + $0x2d0] sm:$0xf] %v5109
        %5622 = vst [vmem:[%s230 + $0x2d4] sm:$0xf] %v5110
        %5623 = vst [vmem:[%s230 + $0x2d8] sm:$0xf] %v5111
        %5624 = vst [vmem:[%s230 + $0x2dc] sm:$0xf] %v5112
        %5625 = vst [vmem:[%s230 + $0x2e0] sm:$0xf] %v5113
        %5626 = vst [vmem:[%s230 + $0x2e4] sm:$0xf] %v5114
        %5627 = vst [vmem:[%s230 + $0x2e8] sm:$0xf] %v5115
        %5628 = vst [vmem:[%s230 + $0x2ec] sm:$0xf] %v5116
        %5629 = vst [vmem:[%s230 + $0x2f0] sm:$0xf] %v5117
        %5630 = vst [vmem:[%s230 + $0x2f4] sm:$0xf] %v5118
        %5631 = vst [vmem:[%s230 + $0x2f8] sm:$0xf] %v5119
        %5632 = vst [vmem:[%s230 + $0x2fc] sm:$0xf] %v5120
        %5633 = vst [vmem:[%s230 + $0x300] sm:$0xf] %v5121
        %5634 = vst [vmem:[%s230 + $0x304] sm:$0xf] %v5122
        %5635 = vst [vmem:[%s230 + $0x308] sm:$0xf] %v5123
        %5636 = vst [vmem:[%s230 + $0x30c] sm:$0xf] %v5124
        %5637 = vst [vmem:[%s230 + $0x310] sm:$0xf] %v5125
        %5638 = vst [vmem:[%s230 + $0x314] sm:$0xf] %v5126
        %5639 = vst [vmem:[%s230 + $0x318] sm:$0xf] %v5127
        %5640 = vst [vmem:[%s230 + $0x31c] sm:$0xf] %v5128
        %5641 = vst [vmem:[%s230 + $0x320] sm:$0xf] %v5129
        %5642 = vst [vmem:[%s230 + $0x324] sm:$0xf] %v5130
        %5643 = vst [vmem:[%s230 + $0x328] sm:$0xf] %v5131
        %5644 = vst [vmem:[%s230 + $0x32c] sm:$0xf] %v5132
        %5645 = vst [vmem:[%s230 + $0x330] sm:$0xf] %v5133
        %5646 = vst [vmem:[%s230 + $0x334] sm:$0xf] %v5134
        %5647 = vst [vmem:[%s230 + $0x338] sm:$0xf] %v5135
        %5648 = vst [vmem:[%s230 + $0x33c] sm:$0xf] %v5136
        %5649 = vst [vmem:[%s230 + $0x340] sm:$0xf] %v5137
        %5650 = vst [vmem:[%s230 + $0x344] sm:$0xf] %v5138
        %5651 = vst [vmem:[%s230 + $0x348] sm:$0xf] %v5139
        %5652 = vst [vmem:[%s230 + $0x34c] sm:$0xf] %v5140
        %5653 = vst [vmem:[%s230 + $0x350] sm:$0xf] %v5141
        %5654 = vst [vmem:[%s230 + $0x354] sm:$0xf] %v5142
        %5655 = vst [vmem:[%s230 + $0x358] sm:$0xf] %v5143
        %5656 = vst [vmem:[%s230 + $0x35c] sm:$0xf] %v5144
        %5657 = vst [vmem:[%s230 + $0x360] sm:$0xf] %v5145
        %5658 = vst [vmem:[%s230 + $0x364] sm:$0xf] %v5146
        %5659 = vst [vmem:[%s230 + $0x368] sm:$0xf] %v5147
        %5660 = vst [vmem:[%s230 + $0x36c] sm:$0xf] %v5148
        %5661 = vst [vmem:[%s230 + $0x370] sm:$0xf] %v5149
        %5662 = vst [vmem:[%s230 + $0x374] sm:$0xf] %v5150
        %5663 = vst [vmem:[%s230 + $0x378] sm:$0xf] %v5151
        %5664 = vst [vmem:[%s230 + $0x37c] sm:$0xf] %v5152
        %5665 = vst [vmem:[%s230 + $0x380] sm:$0xf] %v5153
        %5666 = vst [vmem:[%s230 + $0x384] sm:$0xf] %v5154
        %5667 = vst [vmem:[%s230 + $0x388] sm:$0xf] %v5155
        %5668 = vst [vmem:[%s230 + $0x38c] sm:$0xf] %v5156
        %5669 = vst [vmem:[%s230 + $0x390] sm:$0xf] %v5157
        %5670 = vst [vmem:[%s230 + $0x394] sm:$0xf] %v5158
        %5671 = vst [vmem:[%s230 + $0x398] sm:$0xf] %v5159
        %5672 = vst [vmem:[%s230 + $0x39c] sm:$0xf] %v5160
        %5673 = vst [vmem:[%s230 + $0x3a0] sm:$0xf] %v5161
        %5674 = vst [vmem:[%s230 + $0x3a4] sm:$0xf] %v5162
        %5675 = vst [vmem:[%s230 + $0x3a8] sm:$0xf] %v5163
        %5676 = vst [vmem:[%s230 + $0x3ac] sm:$0xf] %v5164
        %5677 = vst [vmem:[%s230 + $0x3b0] sm:$0xf] %v5165
        %5678 = vst [vmem:[%s230 + $0x3b4] sm:$0xf] %v5166
        %5679 = vst [vmem:[%s230 + $0x3b8] sm:$0xf] %v5167
        %5680 = vst [vmem:[%s230 + $0x3bc] sm:$0xf] %v5168
        %5681 = vst [vmem:[%s230 + $0x3c0] sm:$0xf] %v5169
        %5682 = vst [vmem:[%s230 + $0x3c4] sm:$0xf] %v5170
        %5683 = vst [vmem:[%s230 + $0x3c8] sm:$0xf] %v5171
        %5684 = vst [vmem:[%s230 + $0x3cc] sm:$0xf] %v5172
        %5685 = vst [vmem:[%s230 + $0x3d0] sm:$0xf] %v5173
        %5686 = vst [vmem:[%s230 + $0x3d4] sm:$0xf] %v5174
        %5687 = vst [vmem:[%s230 + $0x3d8] sm:$0xf] %v5175
        %5688 = vst [vmem:[%s230 + $0x3dc] sm:$0xf] %v5176
        %5689 = vst [vmem:[%s230 + $0x3e0] sm:$0xf] %v5177
        %5690 = vst [vmem:[%s230 + $0x3e4] sm:$0xf] %v5178
        %5691 = vst [vmem:[%s230 + $0x3e8] sm:$0xf] %v5179
        %5692 = vst [vmem:[%s230 + $0x3ec] sm:$0xf] %v5180
        %5693 = vst [vmem:[%s230 + $0x3f0] sm:$0xf] %v5181
        %5694 = vst [vmem:[%s230 + $0x3f4] sm:$0xf] %v5182
        %5695 = vst [vmem:[%s230 + $0x3f8] sm:$0xf] %v5183
        %5696 = vst [vmem:[%s230 + $0x3fc] sm:$0xf] %v5184
        %s5697 = sand.u32 %s137, 1
        %s5698 = scalar_lea.sflag [#allocation3], %s5697
        %s5699 = sand.u32 %s137, 1
        %s5700 = smul.addr %s5699, 1024
        %s5701 = scalar_lea.vmem [#allocation2], %s5700
        // Predicated region
        $region41: #{tpu_custom_call.1} parent=39 // pred_check
          %p5702 = pneg %p147
        $region42: #{tpu_custom_call.1} parent=39 // pred_check_branch
          %5704 = sbr.rel (%p5702) target = $region44
        $region43: #{tpu_custom_call.1} parent=39 // pred_region
          %s5705 = smul.u32 256, %s19
          %s5706 = ssub.s32 500, %s5705
          %p5707 = scmp.lt.s32.totalorder %s5706, 256
          %s5708 = scalar_select %p5707, %s5706, 256
          %s5709 = smul.u32 64, %s5708
          %s5711 = ssub.s32 16384, %s5709
          %5712 = vsyncadd %s5698, %s5711
          %p5713 = scmp.ne.s32.totalorder 0, %s5709
          %s5714 = smul.addr %s5705, 64
          %s5715 = scalar_lea.hbm %s5, %s5714
          %s5716 = smul.u32 4, %s5708
          %s5717 = sshll.u32 %s5701, 4
          %s5718 = int_to_ptr.vmem [resolvable:$true] %s5717
          %s5719 = sshll.u32 %s5716, 4
          %5723 = dma.vmem_to_hbm [thread:$0]  (%p5713), %s5718, %s5719, %s5715, %s5698, 64, 64, 4
        $region44: #{tpu_custom_call.1} parent=39 // pred_fallthru
          _
      $region40: #{tpu_custom_call.1} parent=5 // pred_fallthru
        _
      %p5724 = scmp.le.s32.totalorder 2, %s14
      // Predicated region
      $region45: #{tpu_custom_call.1} parent=5 // pred_check
        %p5725 = pneg %p5724
      $region46: #{tpu_custom_call.1} parent=5 // pred_check_branch
        %5727 = sbr.rel (%p5725) target = $region48
      $region47: #{tpu_custom_call.1} parent=5 // pred_region
        %s5728 = ssub.s32 %s14, 2
        // Predicated region
        $region49: #{tpu_custom_call.1} parent=47 // pred_check
          %p5729 = pneg %p153
        $region50: #{tpu_custom_call.1} parent=47 // pred_check_branch
          %5731 = sbr.rel (%p5729) target = $region52
        $region51: #{tpu_custom_call.1} parent=47 // pred_region
          %s5732 = sand.u32 %s138, 1
          %s5733 = scalar_lea.sflag [#allocation3], %s5732
          %s5734 = sand.u32 %s138, 1
          %s5735 = smul.addr %s5734, 1024
          %s5736 = scalar_lea.vmem [#allocation2], %s5735
          %5737 = dma.done %s5733, 16384
        $region52: #{tpu_custom_call.1} parent=47 // pred_fallthru
          _
      $region48: #{tpu_custom_call.1} parent=5 // pred_fallthru
        _
    $region6: #{tpu_custom_call.1} parent=1 // loop_footer
      %s18 = sadd.s32 1, %s14
    $region7: #{tpu_custom_call.1} parent=1 // loop_footer_branch
      %13 = sbr.rel target = $region3
    $region8: #{tpu_custom_call.1} parent=1 // loop_exit
      _
    %5738 = vsyncpa [#allocation3], 1
    %s5739 = scalar_lea.sflag [#allocation3], 1
    %5740 = vsyncpa %s5739, 1

</llo_original>
